<compile_context>
chip_gen: v5e
topology: v5e:2x2
jax: 0.10.0
libtpu: 0.0.40
codegen_flags: <defaults>
</compile_context>

<pallas_src>
import jax
import jax.numpy as jnp
from jax import lax
from jax.experimental import pallas as pl
from jax.experimental.pallas import tpu as pltpu

BN_EPS = 1e-5


# ----------------------------------------------------------------------------- in-kernel helpers
def _bn_train(v, gamma, beta, *, relu):
    """Training-mode BatchNorm2d on a channel-major (rows, C) f32 tile.

    Two-pass: per-channel mean first, then the centered sum of squares (biased variance,
    matching PyTorch's training-mode normalization).  gamma/beta are (1, C) f32 rows."""
    inv_cnt = 1.0 / float(v.shape[0])
    mean = jnp.sum(v, axis=0, keepdims=True) * inv_cnt          # (1, C)
    centered = v - mean
    var = jnp.sum(centered * centered, axis=0, keepdims=True) * inv_cnt
    out = centered * (gamma * lax.rsqrt(var + BN_EPS)) + beta
    if relu:
        out = jnp.maximum(out, 0.0)
    return out


# ----------------------------------------------------------------------------- kernel factory
def _make_block_kernel(n, h, w, cin, planes, cout, stride, has_sc_conv, num_classes):
    hw = h * w
    ho = (h - 1) // stride + 1
    wo = (w - 1) // stride + 1
    howo = ho * wo

    def kernel(*refs):
        it = iter(refs)
        x_ref = next(it)                                  # (n*h*w, cin)       bf16
        w1_ref = next(it)                                 # (cin, planes)      bf16
        g1_ref, b1_ref = next(it), next(it)               # (1, planes)        f32
        w2m_ref = next(it)                                # (9, h*w, planes)   f32 (pad zeros baked)
        g2_ref, b2_ref = next(it), next(it)               # (1, planes)        f32
        distri_ref, maskc_ref = next(it), next(it)        # (n, nc), (nc, planes)  f32
        w3_ref = next(it)                                 # (planes, cout)     bf16
        g3_ref, b3_ref = next(it), next(it)               # (1, cout)          f32
        sel_ref = next(it) if stride > 1 else None        # (ho*wo, h*w)       f32
        if has_sc_conv:
            wsc_ref = next(it)                            # (cin, cout)        bf16
            gsc_ref, bsc_ref = next(it), next(it)         # (1, cout)          f32
        o_ref = next(it)                                  # (n*ho*wo, cout)    f32

        x = x_ref[...]                                    # bf16, channel-major rows

        # ---- conv1 (1x1): channel-major MXU dot, bf16 in / f32 accumulate; two-pass BN + ReLU
        h1 = jnp.dot(x, w1_ref[...], preferred_element_type=jnp.float32)   # (n*hw, planes) f32
        h1 = _bn_train(h1, g1_ref[...], b1_ref[...], relu=True)

        # ---- depthwise 3x3, pad=1: 9 cyclic-roll taps on (n, h*w, planes); the per-position
        # tap weights already contain the zero-padding boundary zeros, so no masks in-kernel.
        h1_3d = h1.reshape(n, hw, planes)                 # split of the leading dim only
        acc = jnp.zeros((n, hw, planes), jnp.float32)
        for k in range(9):
            dy, dx = k // 3 - 1, k % 3 - 1
            shift = dy * w + dx                           # flat neighbor offset within an image
            v = h1_3d if shift == 0 else pltpu.roll(h1_3d, (-shift) % hw, axis=1)
            acc = acc + v * w2m_ref[k]                    # (hw, planes) broadcast over batch

        if stride == 1:
            acc2 = acc.reshape(n * howo, planes)
        else:
            # TODO(synk): for a production stride>1 kernel, subsample rows before the tap loop
            # (needs the (n, h, w*planes) view); here we select the strided output rows with a
            # precomputed 0/1 selection matrix.
            accs = lax.dot_general(sel_ref[...], acc,
                                   dimension_numbers=(((1,), (1,)), ((), ())),
                                   preferred_element_type=jnp.float32)     # (howo, n, planes)
            acc2 = jnp.transpose(accs, (1, 0, 2)).reshape(n * howo, planes)

        h2 = _bn_train(acc2, g2_ref[...], b2_ref[...], relu=True)          # (n*howo, planes)

        # ---- ClassScale_Gaussian: out[n, c] *= (distri @ mask)[n, c]  (tiny -> keep on VPU)
        distri = distri_ref[...]
        maskc = maskc_ref[...]
        guide = jnp.zeros((n, planes), jnp.float32)
        for j in range(num_classes):
            guide = guide + distri[:, j:j + 1] * maskc[j:j + 1, :]
        h2 = (h2.reshape(n, howo, planes) * guide[:, None, :]).reshape(n * howo, planes)

        # ---- conv3 (1x1): channel-major dot (bf16 in / f32 acc) + BN3 (no ReLU)
        h3 = jnp.dot(h2.astype(jnp.bfloat16), w3_ref[...],
                     preferred_element_type=jnp.float32)                   # (n*howo, cout)
        h3 = _bn_train(h3, g3_ref[...], b3_ref[...], relu=False)

        # ---- residual (only when stride == 1)
        if stride == 1:
            if has_sc_conv:
                # second dot on the same VMEM-resident x operand
                sc = jnp.dot(x, wsc_ref[...], preferred_element_type=jnp.float32)
                sc = _bn_train(sc, gsc_ref[...], bsc_ref[...], relu=False)
            else:
                # identity shortcut: x is the bf16 matmul operand; cast back for the f32 add
                sc = x.astype(jnp.float32)
            h3 = h3 + sc

        o_ref[...] = h3                                   # (n*ho*wo, cout) channel-major store

    return kernel


# ----------------------------------------------------------------------------- one-time param prep
def prepare_block_params(params, mask, *, h, w, stride):
    """One-time preprocessing (per parameter update), hoisted out of the per-forward path:
    raw channel-major weights cast to bf16 for the MXU, depthwise tap weights with the 3x3
    zero-padding boundary baked in, (1, C) f32 BN affine rows, and the stride selection matrix."""
    f32, bf16 = jnp.float32, jnp.bfloat16
    cin, planes = params["w1"].shape
    cout = params["w3"].shape[1]
    ho = (h - 1) // stride + 1
    wo = (w - 1) // stride + 1
    has_sc_conv = (stride == 1) and (cin != cout)

    # Depthwise taps: (9, h*w, planes).  Positions whose 3x3 neighbor falls in the zero padding
    # get weight 0, so the kernel's cyclic rolls need no iotas / compares / selects.
    pos = jnp.arange(h * w)
    hh, ww = pos // w, pos % w
    taps = []
    for ky in range(3):
        for kx in range(3):
            dy, dx = ky - 1, kx - 1
            valid = ((hh + dy >= 0) & (hh + dy < h) & (ww + dx >= 0) & (ww + dx < w))
            taps.append(valid.astype(f32)[:, None] * params["w2"][ky, kx, :].astype(f32)[None, :])
    w2m = jnp.stack(taps, axis=0)

    row = lambda p: p.astype(f32).reshape(1, -1)
    prepared = dict(
        w1=params["w1"].astype(bf16), g1=row(params["g1"]), b1=row(params["b1"]),
        w2m=w2m, g2=row(params["g2"]), b2=row(params["b2"]),
        maskc=mask.astype(f32),
        w3=params["w3"].astype(bf16), g3=row(params["g3"]), b3=row(params["b3"]),
        meta=dict(h=h, w=w, cin=cin, planes=planes, cout=cout, stride=stride,
                  has_sc_conv=has_sc_conv, num_classes=int(mask.shape[0])),
    )
    if stride > 1:
        src = ((stride * jnp.arange(ho))[:, None] * w + (stride * jnp.arange(wo))[None, :])
        src = src.reshape(-1)                                             # (ho*wo,)
        prepared["sel"] = (jnp.arange(h * w)[None, :] == src[:, None]).astype(f32)
    if has_sc_conv:
        prepared.update(wsc=params["wsc"].astype(bf16),
                        gsc=row(params["gsc"]), bsc=row(params["bsc"]))
    return prepared


# ----------------------------------------------------------------------------- forward wrapper
def block_class_forward(x_nchw, prepared, distri):
    """Runs Block_class.forward.  x_nchw: (N, Cin, H, W) float32, returns (N, Cout, Ho, Wo)."""
    m = prepared["meta"]
    n, cin, h, w = x_nchw.shape
    assert (cin, h, w) == (m["cin"], m["h"], m["w"])
    planes, cout, stride = m["planes"], m["cout"], m["stride"]
    has_sc_conv = m["has_sc_conv"]
    ho = (h - 1) // stride + 1
    wo = (w - 1) // stride + 1

    # Layout plumbing (outside the kernel): NCHW -> channel-major (N*H*W, Cin); bf16 for the
    # MXU operand (accumulation and all elementwise math stay f32 inside the kernel).
    x_cm = jnp.transpose(x_nchw, (0, 2, 3, 1)).reshape(n * h * w, cin).astype(jnp.bfloat16)

    args = [x_cm, prepared["w1"], prepared["g1"], prepared["b1"],
            prepared["w2m"], prepared["g2"], prepared["b2"],
            distri.astype(jnp.float32), prepared["maskc"],
            prepared["w3"], prepared["g3"], prepared["b3"]]
    if stride > 1:
        args.append(prepared["sel"])
    if has_sc_conv:
        args += [prepared["wsc"], prepared["gsc"], prepared["bsc"]]

    kernel = _make_block_kernel(n, h, w, cin, planes, cout, stride, has_sc_conv,
                                m["num_classes"])

    out_cm = pl.pallas_call(
        kernel,
        out_shape=jax.ShapeDtypeStruct((n * ho * wo, cout), jnp.float32),
        in_specs=[pl.BlockSpec(memory_space=pltpu.MemorySpace.VMEM)] * len(args),
        out_specs=pl.BlockSpec(memory_space=pltpu.MemorySpace.VMEM),
        # Demo uses well under 1 MiB; sized so real-shape variants have room on any generation
        # (v7x physical VMEM is 64 MiB, v5e/v6e 128 MiB).
        compiler_params=pltpu.CompilerParams(vmem_limit_bytes=32 * 1024 * 1024),
    )(*args)

    return jnp.transpose(out_cm.reshape(n, ho, wo, cout), (0, 3, 1, 2))


# ----------------------------------------------------------------------------- pure-JAX reference
def _reference_forward(x_nchw, params, mask, distri, *, stride):
    n, cin, h, w = x_nchw.shape
    planes = params["w1"].shape[1]
    cout = params["w3"].shape[1]
    ho = (h - 1) // stride + 1
    wo = (w - 1) // stride + 1
    x = jnp.transpose(x_nchw, (0, 2, 3, 1)).astype(jnp.float32)             # NHWC

    def bn(v, g, b):
        mean = jnp.mean(v, axis=(0, 1, 2))
        var = jnp.mean((v - mean) ** 2, axis=(0, 1, 2))
        return (v - mean) * (g.reshape(-1) * lax.rsqrt(var + BN_EPS)) + b.reshape(-1)

    h1 = jnp.einsum("nhwc,cp->nhwp", x, params["w1"], precision="highest")
    h1 = jnp.maximum(bn(h1, params["g1"], params["b1"]), 0.0)
    h1p = jnp.pad(h1, ((0, 0), (1, 1), (1, 1), (0, 0)))
    acc = jnp.zeros((n, ho, wo, planes), jnp.float32)
    for ky in range(3):
        for kx in range(3):
            win = lax.slice(h1p, (0, ky, kx, 0),
                            (n, ky + stride * (ho - 1) + 1, kx + stride * (wo - 1) + 1, planes),
                            (1, stride, stride, 1))
            acc = acc + win * params["w2"][ky, kx, :]
    h2 = jnp.maximum(bn(acc, params["g2"], params["b2"]), 0.0)
    guide = jnp.dot(distri, mask, precision="highest")                      # (n, planes)
    h2 = h2 * guide[:, None, None, :]
    h3 = jnp.einsum("nhwp,po->nhwo", h2, params["w3"], precision="highest")
    h3 = bn(h3, params["g3"], params["b3"])
    if stride == 1:
        if cin != cout:
            sc = jnp.einsum("nhwc,co->nhwo", x, params["wsc"], precision="highest")
            sc = bn(sc, params["gsc"], params["bsc"])
        else:
            sc = x
        h3 = h3 + sc
    return jnp.transpose(h3, (0, 3, 1, 2))


# ----------------------------------------------------------------------------- demo
if __name__ == "__main__":
    key = jax.random.PRNGKey(0)
    N, Cin, H, W = 2, 4, 16, 16
    expansion, Cout, stride = 2, 8, 1            # stride=1 -> residual path (with conv shortcut)
    planes = expansion * Cin
    num_classes = 10

    keys = jax.random.split(key, 8)
    params = {
        # conv1.weight (planes, Cin, 1, 1) stored transposed as (Cin, planes)
        "w1": jax.random.normal(keys[0], (Cin, planes), jnp.float32) * (2.0 / Cin) ** 0.5,
        "g1": jnp.ones((1, planes), jnp.float32),
        "b1": jnp.zeros((1, planes), jnp.float32),
        # conv2.weight (planes, 1, 3, 3) stored as (3, 3, planes)
        "w2": jax.random.normal(keys[1], (3, 3, planes), jnp.float32) * (2.0 / 9.0) ** 0.5,
        "g2": jnp.ones((1, planes), jnp.float32),
        "b2": jnp.zeros((1, planes), jnp.float32),
        # conv3.weight (Cout, planes, 1, 1) stored as (planes, Cout)
        "w3": jax.random.normal(keys[2], (planes, Cout), jnp.float32) * (2.0 / planes) ** 0.5,
        "g3": jnp.ones((1, Cout), jnp.float32),
        "b3": jnp.zeros((1, Cout), jnp.float32),
        # shortcut conv (Cout, Cin, 1, 1) stored as (Cin, Cout)
        "wsc": jax.random.normal(keys[3], (Cin, Cout), jnp.float32) * (2.0 / Cin) ** 0.5,
        "gsc": jnp.ones((1, Cout), jnp.float32),
        "bsc": jnp.zeros((1, Cout), jnp.float32),
    }

    x = jax.random.normal(keys[4], (N, Cin, H, W), jnp.float32)
    mask = jax.random.uniform(keys[5], (num_classes, planes), jnp.float32)
    targets = jnp.array([3, 7], dtype=jnp.int32)

    # Gaussian_select's distri: uniform random with distri[i, targets[i]] = 1.
    # (torch.rand cannot be bit-matched; semantics reproduced with JAX RNG.)
    distri = jax.random.uniform(keys[6], (N, num_classes), jnp.float32)
    distri = distri.at[jnp.arange(N), targets].set(1.0)

    # Param preprocessing done ONCE (per parameter update), not per forward call.
    prepared = prepare_block_params(params, mask, h=H, w=W, stride=stride)

    out = block_class_forward(x, prepared, distri)
    jax.block_until_ready(out)
    assert out.shape == (N, Cout, H, W) and out.dtype == jnp.float32

    ref = _reference_forward(x, params, mask, distri, stride=stride)
    err = float(jnp.max(jnp.abs(out - ref)))
    scale = float(jnp.max(jnp.abs(ref)))
    # Tolerance sized for bf16 matmul operands (~1% relative), amplified by the class-guide
    # scaling before conv3; all BN / depthwise math is f32 with a two-pass variance.
    assert err <= 3e-2 * scale + 1e-3, \
        f"kernel mismatch vs reference: max abs err {err} (output scale {scale})"

    print("KERNEL_OK")
</pallas_src>

<mosaic_0001>
module attributes {stable_mosaic.version = 11 : i64} {
  func.func @kernel(%arg0: memref<512x4xbf16, #tpu.memory_space<vmem>>, %arg1: memref<4x8xbf16, #tpu.memory_space<vmem>>, %arg2: memref<1x8xf32, #tpu.memory_space<vmem>>, %arg3: memref<1x8xf32, #tpu.memory_space<vmem>>, %arg4: memref<9x256x8xf32, #tpu.memory_space<vmem>>, %arg5: memref<1x8xf32, #tpu.memory_space<vmem>>, %arg6: memref<1x8xf32, #tpu.memory_space<vmem>>, %arg7: memref<2x10xf32, #tpu.memory_space<vmem>>, %arg8: memref<10x8xf32, #tpu.memory_space<vmem>>, %arg9: memref<8x8xbf16, #tpu.memory_space<vmem>>, %arg10: memref<1x8xf32, #tpu.memory_space<vmem>>, %arg11: memref<1x8xf32, #tpu.memory_space<vmem>>, %arg12: memref<4x8xbf16, #tpu.memory_space<vmem>>, %arg13: memref<1x8xf32, #tpu.memory_space<vmem>>, %arg14: memref<1x8xf32, #tpu.memory_space<vmem>>, %arg15: memref<512x8xf32, #tpu.memory_space<vmem>>) attributes {dimension_semantics = [], scalar_prefetch = 0 : i64, scratch_operands = 0 : i64, tpu.core_type = #tpu.core_type<tc>} {
    %c0 = arith.constant 0 : index
    %c0_0 = arith.constant 0 : index
    %0 = vector.load %arg0[%c0, %c0_0] : memref<512x4xbf16, #tpu.memory_space<vmem>>, vector<512x4xbf16>
    %c0_1 = arith.constant 0 : index
    %c0_2 = arith.constant 0 : index
    %1 = vector.load %arg1[%c0_1, %c0_2] : memref<4x8xbf16, #tpu.memory_space<vmem>>, vector<4x8xbf16>
    %cst = arith.constant dense<0.000000e+00> : vector<512x8xf32>
    %2 = tpu.matmul %0, %1, %cst {dimension_numbers = #tpu.dot_dimension_numbers<[1], [0], [0], [1], [0, 0, 1, 1], [], []>} : vector<512x4xbf16>, vector<4x8xbf16>, vector<512x8xf32> -> vector<512x8xf32>
    %c0_3 = arith.constant 0 : index
    %c0_4 = arith.constant 0 : index
    %3 = vector.load %arg2[%c0_3, %c0_4] : memref<1x8xf32, #tpu.memory_space<vmem>>, vector<1x8xf32>
    %c0_5 = arith.constant 0 : index
    %c0_6 = arith.constant 0 : index
    %4 = vector.load %arg3[%c0_5, %c0_6] : memref<1x8xf32, #tpu.memory_space<vmem>>, vector<1x8xf32>
    %cst_7 = arith.constant dense<0.000000e+00> : vector<8xf32>
    %5 = vector.multi_reduction <add>, %2, %cst_7 [0] : vector<512x8xf32> to vector<8xf32>
    %6 = vector.shape_cast %5 : vector<8xf32> to vector<1x8xf32>
    %cst_8 = arith.constant 0.001953125 : f32
    %7 = vector.broadcast %cst_8 : f32 to vector<1x8xf32>
    %8 = arith.mulf %6, %7 : vector<1x8xf32>
    %9 = vector.broadcast %8 : vector<1x8xf32> to vector<512x8xf32>
    %10 = arith.subf %2, %9 : vector<512x8xf32>
    %11 = arith.mulf %10, %10 : vector<512x8xf32>
    %cst_9 = arith.constant dense<0.000000e+00> : vector<8xf32>
    %12 = vector.multi_reduction <add>, %11, %cst_9 [0] : vector<512x8xf32> to vector<8xf32>
    %13 = vector.shape_cast %12 : vector<8xf32> to vector<1x8xf32>
    %cst_10 = arith.constant 0.001953125 : f32
    %14 = vector.broadcast %cst_10 : f32 to vector<1x8xf32>
    %15 = arith.mulf %13, %14 : vector<1x8xf32>
    %cst_11 = arith.constant 9.99999974E-6 : f32
    %16 = vector.broadcast %cst_11 : f32 to vector<1x8xf32>
    %17 = arith.addf %15, %16 : vector<1x8xf32>
    %18 = math.rsqrt %17 : vector<1x8xf32>
    %19 = arith.mulf %3, %18 : vector<1x8xf32>
    %20 = vector.broadcast %19 : vector<1x8xf32> to vector<512x8xf32>
    %21 = arith.mulf %10, %20 : vector<512x8xf32>
    %22 = vector.broadcast %4 : vector<1x8xf32> to vector<512x8xf32>
    %23 = arith.addf %21, %22 : vector<512x8xf32>
    %cst_12 = arith.constant 0.000000e+00 : f32
    %24 = vector.broadcast %cst_12 : f32 to vector<512x8xf32>
    %25 = arith.maximumf %23, %24 : vector<512x8xf32>
    %26 = vector.shape_cast %25 : vector<512x8xf32> to vector<2x256x8xf32>
    %cst_13 = arith.constant 0.000000e+00 : f32
    %27 = vector.broadcast %cst_13 : f32 to vector<2x256x8xf32>
    %c17_i32 = arith.constant 17 : i32
    %28 = tpu.dynamic_rotate %26 by %c17_i32 dim 1 : vector<2x256x8xf32>, i32 -> vector<2x256x8xf32>
    %c0_14 = arith.constant 0 : index
    %c0_15 = arith.constant 0 : index
    %c0_16 = arith.constant 0 : index
    %29 = vector.load %arg4[%c0_14, %c0_15, %c0_16] : memref<9x256x8xf32, #tpu.memory_space<vmem>>, vector<1x256x8xf32>
    %30 = vector.shape_cast %29 : vector<1x256x8xf32> to vector<256x8xf32>
    %31 = vector.shape_cast %30 : vector<256x8xf32> to vector<1x256x8xf32>
    %32 = vector.broadcast %31 : vector<1x256x8xf32> to vector<2x256x8xf32>
    %33 = arith.mulf %28, %32 : vector<2x256x8xf32>
    %34 = arith.addf %27, %33 : vector<2x256x8xf32>
    %c16_i32 = arith.constant 16 : i32
    %35 = tpu.dynamic_rotate %26 by %c16_i32 dim 1 : vector<2x256x8xf32>, i32 -> vector<2x256x8xf32>
    %c1 = arith.constant 1 : index
    %c0_17 = arith.constant 0 : index
    %c0_18 = arith.constant 0 : index
    %36 = vector.load %arg4[%c1, %c0_17, %c0_18] : memref<9x256x8xf32, #tpu.memory_space<vmem>>, vector<1x256x8xf32>
    %37 = vector.shape_cast %36 : vector<1x256x8xf32> to vector<256x8xf32>
    %38 = vector.shape_cast %37 : vector<256x8xf32> to vector<1x256x8xf32>
    %39 = vector.broadcast %38 : vector<1x256x8xf32> to vector<2x256x8xf32>
    %40 = arith.mulf %35, %39 : vector<2x256x8xf32>
    %41 = arith.addf %34, %40 : vector<2x256x8xf32>
    %c15_i32 = arith.constant 15 : i32
    %42 = tpu.dynamic_rotate %26 by %c15_i32 dim 1 : vector<2x256x8xf32>, i32 -> vector<2x256x8xf32>
    %c2 = arith.constant 2 : index
    %c0_19 = arith.constant 0 : index
    %c0_20 = arith.constant 0 : index
    %43 = vector.load %arg4[%c2, %c0_19, %c0_20] : memref<9x256x8xf32, #tpu.memory_space<vmem>>, vector<1x256x8xf32>
    %44 = vector.shape_cast %43 : vector<1x256x8xf32> to vector<256x8xf32>
    %45 = vector.shape_cast %44 : vector<256x8xf32> to vector<1x256x8xf32>
    %46 = vector.broadcast %45 : vector<1x256x8xf32> to vector<2x256x8xf32>
    %47 = arith.mulf %42, %46 : vector<2x256x8xf32>
    %48 = arith.addf %41, %47 : vector<2x256x8xf32>
    %c1_i32 = arith.constant 1 : i32
    %49 = tpu.dynamic_rotate %26 by %c1_i32 dim 1 : vector<2x256x8xf32>, i32 -> vector<2x256x8xf32>
    %c3 = arith.constant 3 : index
    %c0_21 = arith.constant 0 : index
    %c0_22 = arith.constant 0 : index
    %50 = vector.load %arg4[%c3, %c0_21, %c0_22] : memref<9x256x8xf32, #tpu.memory_space<vmem>>, vector<1x256x8xf32>
    %51 = vector.shape_cast %50 : vector<1x256x8xf32> to vector<256x8xf32>
    %52 = vector.shape_cast %51 : vector<256x8xf32> to vector<1x256x8xf32>
    %53 = vector.broadcast %52 : vector<1x256x8xf32> to vector<2x256x8xf32>
    %54 = arith.mulf %49, %53 : vector<2x256x8xf32>
    %55 = arith.addf %48, %54 : vector<2x256x8xf32>
    %c4 = arith.constant 4 : index
    %c0_23 = arith.constant 0 : index
    %c0_24 = arith.constant 0 : index
    %56 = vector.load %arg4[%c4, %c0_23, %c0_24] : memref<9x256x8xf32, #tpu.memory_space<vmem>>, vector<1x256x8xf32>
    %57 = vector.shape_cast %56 : vector<1x256x8xf32> to vector<256x8xf32>
    %58 = vector.shape_cast %57 : vector<256x8xf32> to vector<1x256x8xf32>
    %59 = vector.broadcast %58 : vector<1x256x8xf32> to vector<2x256x8xf32>
    %60 = arith.mulf %26, %59 : vector<2x256x8xf32>
    %61 = arith.addf %55, %60 : vector<2x256x8xf32>
    %c255_i32 = arith.constant 255 : i32
    %62 = tpu.dynamic_rotate %26 by %c255_i32 dim 1 : vector<2x256x8xf32>, i32 -> vector<2x256x8xf32>
    %c5 = arith.constant 5 : index
    %c0_25 = arith.constant 0 : index
    %c0_26 = arith.constant 0 : index
    %63 = vector.load %arg4[%c5, %c0_25, %c0_26] : memref<9x256x8xf32, #tpu.memory_space<vmem>>, vector<1x256x8xf32>
    %64 = vector.shape_cast %63 : vector<1x256x8xf32> to vector<256x8xf32>
    %65 = vector.shape_cast %64 : vector<256x8xf32> to vector<1x256x8xf32>
    %66 = vector.broadcast %65 : vector<1x256x8xf32> to vector<2x256x8xf32>
    %67 = arith.mulf %62, %66 : vector<2x256x8xf32>
    %68 = arith.addf %61, %67 : vector<2x256x8xf32>
    %c241_i32 = arith.constant 241 : i32
    %69 = tpu.dynamic_rotate %26 by %c241_i32 dim 1 : vector<2x256x8xf32>, i32 -> vector<2x256x8xf32>
    %c6 = arith.constant 6 : index
    %c0_27 = arith.constant 0 : index
    %c0_28 = arith.constant 0 : index
    %70 = vector.load %arg4[%c6, %c0_27, %c0_28] : memref<9x256x8xf32, #tpu.memory_space<vmem>>, vector<1x256x8xf32>
    %71 = vector.shape_cast %70 : vector<1x256x8xf32> to vector<256x8xf32>
    %72 = vector.shape_cast %71 : vector<256x8xf32> to vector<1x256x8xf32>
    %73 = vector.broadcast %72 : vector<1x256x8xf32> to vector<2x256x8xf32>
    %74 = arith.mulf %69, %73 : vector<2x256x8xf32>
    %75 = arith.addf %68, %74 : vector<2x256x8xf32>
    %c240_i32 = arith.constant 240 : i32
    %76 = tpu.dynamic_rotate %26 by %c240_i32 dim 1 : vector<2x256x8xf32>, i32 -> vector<2x256x8xf32>
    %c7 = arith.constant 7 : index
    %c0_29 = arith.constant 0 : index
    %c0_30 = arith.constant 0 : index
    %77 = vector.load %arg4[%c7, %c0_29, %c0_30] : memref<9x256x8xf32, #tpu.memory_space<vmem>>, vector<1x256x8xf32>
    %78 = vector.shape_cast %77 : vector<1x256x8xf32> to vector<256x8xf32>
    %79 = vector.shape_cast %78 : vector<256x8xf32> to vector<1x256x8xf32>
    %80 = vector.broadcast %79 : vector<1x256x8xf32> to vector<2x256x8xf32>
    %81 = arith.mulf %76, %80 : vector<2x256x8xf32>
    %82 = arith.addf %75, %81 : vector<2x256x8xf32>
    %c239_i32 = arith.constant 239 : i32
    %83 = tpu.dynamic_rotate %26 by %c239_i32 dim 1 : vector<2x256x8xf32>, i32 -> vector<2x256x8xf32>
    %c8 = arith.constant 8 : index
    %c0_31 = arith.constant 0 : index
    %c0_32 = arith.constant 0 : index
    %84 = vector.load %arg4[%c8, %c0_31, %c0_32] : memref<9x256x8xf32, #tpu.memory_space<vmem>>, vector<1x256x8xf32>
    %85 = vector.shape_cast %84 : vector<1x256x8xf32> to vector<256x8xf32>
    %86 = vector.shape_cast %85 : vector<256x8xf32> to vector<1x256x8xf32>
    %87 = vector.broadcast %86 : vector<1x256x8xf32> to vector<2x256x8xf32>
    %88 = arith.mulf %83, %87 : vector<2x256x8xf32>
    %89 = arith.addf %82, %88 : vector<2x256x8xf32>
    %90 = vector.shape_cast %89 : vector<2x256x8xf32> to vector<512x8xf32>
    %c0_33 = arith.constant 0 : index
    %c0_34 = arith.constant 0 : index
    %91 = vector.load %arg5[%c0_33, %c0_34] : memref<1x8xf32, #tpu.memory_space<vmem>>, vector<1x8xf32>
    %c0_35 = arith.constant 0 : index
    %c0_36 = arith.constant 0 : index
    %92 = vector.load %arg6[%c0_35, %c0_36] : memref<1x8xf32, #tpu.memory_space<vmem>>, vector<1x8xf32>
    %cst_37 = arith.constant dense<0.000000e+00> : vector<8xf32>
    %93 = vector.multi_reduction <add>, %90, %cst_37 [0] : vector<512x8xf32> to vector<8xf32>
    %94 = vector.shape_cast %93 : vector<8xf32> to vector<1x8xf32>
    %cst_38 = arith.constant 0.001953125 : f32
    %95 = vector.broadcast %cst_38 : f32 to vector<1x8xf32>
    %96 = arith.mulf %94, %95 : vector<1x8xf32>
    %97 = vector.broadcast %96 : vector<1x8xf32> to vector<512x8xf32>
    %98 = arith.subf %90, %97 : vector<512x8xf32>
    %99 = arith.mulf %98, %98 : vector<512x8xf32>
    %cst_39 = arith.constant dense<0.000000e+00> : vector<8xf32>
    %100 = vector.multi_reduction <add>, %99, %cst_39 [0] : vector<512x8xf32> to vector<8xf32>
    %101 = vector.shape_cast %100 : vector<8xf32> to vector<1x8xf32>
    %cst_40 = arith.constant 0.001953125 : f32
    %102 = vector.broadcast %cst_40 : f32 to vector<1x8xf32>
    %103 = arith.mulf %101, %102 : vector<1x8xf32>
    %cst_41 = arith.constant 9.99999974E-6 : f32
    %104 = vector.broadcast %cst_41 : f32 to vector<1x8xf32>
    %105 = arith.addf %103, %104 : vector<1x8xf32>
    %106 = math.rsqrt %105 : vector<1x8xf32>
    %107 = arith.mulf %91, %106 : vector<1x8xf32>
    %108 = vector.broadcast %107 : vector<1x8xf32> to vector<512x8xf32>
    %109 = arith.mulf %98, %108 : vector<512x8xf32>
    %110 = vector.broadcast %92 : vector<1x8xf32> to vector<512x8xf32>
    %111 = arith.addf %109, %110 : vector<512x8xf32>
    %cst_42 = arith.constant 0.000000e+00 : f32
    %112 = vector.broadcast %cst_42 : f32 to vector<512x8xf32>
    %113 = arith.maximumf %111, %112 : vector<512x8xf32>
    %c0_43 = arith.constant 0 : index
    %c0_44 = arith.constant 0 : index
    %114 = vector.load %arg7[%c0_43, %c0_44] : memref<2x10xf32, #tpu.memory_space<vmem>>, vector<2x10xf32>
    %c0_45 = arith.constant 0 : index
    %c0_46 = arith.constant 0 : index
    %115 = vector.load %arg8[%c0_45, %c0_46] : memref<10x8xf32, #tpu.memory_space<vmem>>, vector<10x8xf32>
    %cst_47 = arith.constant 0.000000e+00 : f32
    %116 = vector.broadcast %cst_47 : f32 to vector<2x8xf32>
    %117 = vector.extract_strided_slice %114 {offsets = [0, 0], sizes = [2, 1], strides = [1, 1]} : vector<2x10xf32> to vector<2x1xf32>
    %118 = vector.extract_strided_slice %115 {offsets = [0, 0], sizes = [1, 8], strides = [1, 1]} : vector<10x8xf32> to vector<1x8xf32>
    %119 = vector.broadcast %117 : vector<2x1xf32> to vector<2x8xf32>
    %120 = vector.broadcast %118 : vector<1x8xf32> to vector<2x8xf32>
    %121 = arith.mulf %119, %120 : vector<2x8xf32>
    %122 = arith.addf %116, %121 : vector<2x8xf32>
    %123 = vector.extract_strided_slice %114 {offsets = [0, 1], sizes = [2, 1], strides = [1, 1]} : vector<2x10xf32> to vector<2x1xf32>
    %124 = vector.extract_strided_slice %115 {offsets = [1, 0], sizes = [1, 8], strides = [1, 1]} : vector<10x8xf32> to vector<1x8xf32>
    %125 = vector.broadcast %123 : vector<2x1xf32> to vector<2x8xf32>
    %126 = vector.broadcast %124 : vector<1x8xf32> to vector<2x8xf32>
    %127 = arith.mulf %125, %126 : vector<2x8xf32>
    %128 = arith.addf %122, %127 : vector<2x8xf32>
    %129 = vector.extract_strided_slice %114 {offsets = [0, 2], sizes = [2, 1], strides = [1, 1]} : vector<2x10xf32> to vector<2x1xf32>
    %130 = vector.extract_strided_slice %115 {offsets = [2, 0], sizes = [1, 8], strides = [1, 1]} : vector<10x8xf32> to vector<1x8xf32>
    %131 = vector.broadcast %129 : vector<2x1xf32> to vector<2x8xf32>
    %132 = vector.broadcast %130 : vector<1x8xf32> to vector<2x8xf32>
    %133 = arith.mulf %131, %132 : vector<2x8xf32>
    %134 = arith.addf %128, %133 : vector<2x8xf32>
    %135 = vector.extract_strided_slice %114 {offsets = [0, 3], sizes = [2, 1], strides = [1, 1]} : vector<2x10xf32> to vector<2x1xf32>
    %136 = vector.extract_strided_slice %115 {offsets = [3, 0], sizes = [1, 8], strides = [1, 1]} : vector<10x8xf32> to vector<1x8xf32>
    %137 = vector.broadcast %135 : vector<2x1xf32> to vector<2x8xf32>
    %138 = vector.broadcast %136 : vector<1x8xf32> to vector<2x8xf32>
    %139 = arith.mulf %137, %138 : vector<2x8xf32>
    %140 = arith.addf %134, %139 : vector<2x8xf32>
    %141 = vector.extract_strided_slice %114 {offsets = [0, 4], sizes = [2, 1], strides = [1, 1]} : vector<2x10xf32> to vector<2x1xf32>
    %142 = vector.extract_strided_slice %115 {offsets = [4, 0], sizes = [1, 8], strides = [1, 1]} : vector<10x8xf32> to vector<1x8xf32>
    %143 = vector.broadcast %141 : vector<2x1xf32> to vector<2x8xf32>
    %144 = vector.broadcast %142 : vector<1x8xf32> to vector<2x8xf32>
    %145 = arith.mulf %143, %144 : vector<2x8xf32>
    %146 = arith.addf %140, %145 : vector<2x8xf32>
    %147 = vector.extract_strided_slice %114 {offsets = [0, 5], sizes = [2, 1], strides = [1, 1]} : vector<2x10xf32> to vector<2x1xf32>
    %148 = vector.extract_strided_slice %115 {offsets = [5, 0], sizes = [1, 8], strides = [1, 1]} : vector<10x8xf32> to vector<1x8xf32>
    %149 = vector.broadcast %147 : vector<2x1xf32> to vector<2x8xf32>
    %150 = vector.broadcast %148 : vector<1x8xf32> to vector<2x8xf32>
    %151 = arith.mulf %149, %150 : vector<2x8xf32>
    %152 = arith.addf %146, %151 : vector<2x8xf32>
    %153 = vector.extract_strided_slice %114 {offsets = [0, 6], sizes = [2, 1], strides = [1, 1]} : vector<2x10xf32> to vector<2x1xf32>
    %154 = vector.extract_strided_slice %115 {offsets = [6, 0], sizes = [1, 8], strides = [1, 1]} : vector<10x8xf32> to vector<1x8xf32>
    %155 = vector.broadcast %153 : vector<2x1xf32> to vector<2x8xf32>
    %156 = vector.broadcast %154 : vector<1x8xf32> to vector<2x8xf32>
    %157 = arith.mulf %155, %156 : vector<2x8xf32>
    %158 = arith.addf %152, %157 : vector<2x8xf32>
    %159 = vector.extract_strided_slice %114 {offsets = [0, 7], sizes = [2, 1], strides = [1, 1]} : vector<2x10xf32> to vector<2x1xf32>
    %160 = vector.extract_strided_slice %115 {offsets = [7, 0], sizes = [1, 8], strides = [1, 1]} : vector<10x8xf32> to vector<1x8xf32>
    %161 = vector.broadcast %159 : vector<2x1xf32> to vector<2x8xf32>
    %162 = vector.broadcast %160 : vector<1x8xf32> to vector<2x8xf32>
    %163 = arith.mulf %161, %162 : vector<2x8xf32>
    %164 = arith.addf %158, %163 : vector<2x8xf32>
    %165 = vector.extract_strided_slice %114 {offsets = [0, 8], sizes = [2, 1], strides = [1, 1]} : vector<2x10xf32> to vector<2x1xf32>
    %166 = vector.extract_strided_slice %115 {offsets = [8, 0], sizes = [1, 8], strides = [1, 1]} : vector<10x8xf32> to vector<1x8xf32>
    %167 = vector.broadcast %165 : vector<2x1xf32> to vector<2x8xf32>
    %168 = vector.broadcast %166 : vector<1x8xf32> to vector<2x8xf32>
    %169 = arith.mulf %167, %168 : vector<2x8xf32>
    %170 = arith.addf %164, %169 : vector<2x8xf32>
    %171 = vector.extract_strided_slice %114 {offsets = [0, 9], sizes = [2, 1], strides = [1, 1]} : vector<2x10xf32> to vector<2x1xf32>
    %172 = vector.extract_strided_slice %115 {offsets = [9, 0], sizes = [1, 8], strides = [1, 1]} : vector<10x8xf32> to vector<1x8xf32>
    %173 = vector.broadcast %171 : vector<2x1xf32> to vector<2x8xf32>
    %174 = vector.broadcast %172 : vector<1x8xf32> to vector<2x8xf32>
    %175 = arith.mulf %173, %174 : vector<2x8xf32>
    %176 = arith.addf %170, %175 : vector<2x8xf32>
    %177 = vector.shape_cast %113 : vector<512x8xf32> to vector<2x256x8xf32>
    %178 = vector.shape_cast %176 : vector<2x8xf32> to vector<2x1x8xf32>
    %179 = vector.broadcast %178 : vector<2x1x8xf32> to vector<2x256x8xf32>
    %180 = arith.mulf %177, %179 : vector<2x256x8xf32>
    %181 = vector.shape_cast %180 : vector<2x256x8xf32> to vector<512x8xf32>
    %182 = arith.truncf %181 : vector<512x8xf32> to vector<512x8xbf16>
    %c0_48 = arith.constant 0 : index
    %c0_49 = arith.constant 0 : index
    %183 = vector.load %arg9[%c0_48, %c0_49] : memref<8x8xbf16, #tpu.memory_space<vmem>>, vector<8x8xbf16>
    %cst_50 = arith.constant dense<0.000000e+00> : vector<512x8xf32>
    %184 = tpu.matmul %182, %183, %cst_50 {dimension_numbers = #tpu.dot_dimension_numbers<[1], [0], [0], [1], [0, 0, 1, 1], [], []>} : vector<512x8xbf16>, vector<8x8xbf16>, vector<512x8xf32> -> vector<512x8xf32>
    %c0_51 = arith.constant 0 : index
    %c0_52 = arith.constant 0 : index
    %185 = vector.load %arg10[%c0_51, %c0_52] : memref<1x8xf32, #tpu.memory_space<vmem>>, vector<1x8xf32>
    %c0_53 = arith.constant 0 : index
    %c0_54 = arith.constant 0 : index
    %186 = vector.load %arg11[%c0_53, %c0_54] : memref<1x8xf32, #tpu.memory_space<vmem>>, vector<1x8xf32>
    %cst_55 = arith.constant dense<0.000000e+00> : vector<8xf32>
    %187 = vector.multi_reduction <add>, %184, %cst_55 [0] : vector<512x8xf32> to vector<8xf32>
    %188 = vector.shape_cast %187 : vector<8xf32> to vector<1x8xf32>
    %cst_56 = arith.constant 0.001953125 : f32
    %189 = vector.broadcast %cst_56 : f32 to vector<1x8xf32>
    %190 = arith.mulf %188, %189 : vector<1x8xf32>
    %191 = vector.broadcast %190 : vector<1x8xf32> to vector<512x8xf32>
    %192 = arith.subf %184, %191 : vector<512x8xf32>
    %193 = arith.mulf %192, %192 : vector<512x8xf32>
    %cst_57 = arith.constant dense<0.000000e+00> : vector<8xf32>
    %194 = vector.multi_reduction <add>, %193, %cst_57 [0] : vector<512x8xf32> to vector<8xf32>
    %195 = vector.shape_cast %194 : vector<8xf32> to vector<1x8xf32>
    %cst_58 = arith.constant 0.001953125 : f32
    %196 = vector.broadcast %cst_58 : f32 to vector<1x8xf32>
    %197 = arith.mulf %195, %196 : vector<1x8xf32>
    %cst_59 = arith.constant 9.99999974E-6 : f32
    %198 = vector.broadcast %cst_59 : f32 to vector<1x8xf32>
    %199 = arith.addf %197, %198 : vector<1x8xf32>
    %200 = math.rsqrt %199 : vector<1x8xf32>
    %201 = arith.mulf %185, %200 : vector<1x8xf32>
    %202 = vector.broadcast %201 : vector<1x8xf32> to vector<512x8xf32>
    %203 = arith.mulf %192, %202 : vector<512x8xf32>
    %204 = vector.broadcast %186 : vector<1x8xf32> to vector<512x8xf32>
    %205 = arith.addf %203, %204 : vector<512x8xf32>
    %c0_60 = arith.constant 0 : index
    %c0_61 = arith.constant 0 : index
    %206 = vector.load %arg12[%c0_60, %c0_61] : memref<4x8xbf16, #tpu.memory_space<vmem>>, vector<4x8xbf16>
    %cst_62 = arith.constant dense<0.000000e+00> : vector<512x8xf32>
    %207 = tpu.matmul %0, %206, %cst_62 {dimension_numbers = #tpu.dot_dimension_numbers<[1], [0], [0], [1], [0, 0, 1, 1], [], []>} : vector<512x4xbf16>, vector<4x8xbf16>, vector<512x8xf32> -> vector<512x8xf32>
    %c0_63 = arith.constant 0 : index
    %c0_64 = arith.constant 0 : index
    %208 = vector.load %arg13[%c0_63, %c0_64] : memref<1x8xf32, #tpu.memory_space<vmem>>, vector<1x8xf32>
    %c0_65 = arith.constant 0 : index
    %c0_66 = arith.constant 0 : index
    %209 = vector.load %arg14[%c0_65, %c0_66] : memref<1x8xf32, #tpu.memory_space<vmem>>, vector<1x8xf32>
    %cst_67 = arith.constant dense<0.000000e+00> : vector<8xf32>
    %210 = vector.multi_reduction <add>, %207, %cst_67 [0] : vector<512x8xf32> to vector<8xf32>
    %211 = vector.shape_cast %210 : vector<8xf32> to vector<1x8xf32>
    %cst_68 = arith.constant 0.001953125 : f32
    %212 = vector.broadcast %cst_68 : f32 to vector<1x8xf32>
    %213 = arith.mulf %211, %212 : vector<1x8xf32>
    %214 = vector.broadcast %213 : vector<1x8xf32> to vector<512x8xf32>
    %215 = arith.subf %207, %214 : vector<512x8xf32>
    %216 = arith.mulf %215, %215 : vector<512x8xf32>
    %cst_69 = arith.constant dense<0.000000e+00> : vector<8xf32>
    %217 = vector.multi_reduction <add>, %216, %cst_69 [0] : vector<512x8xf32> to vector<8xf32>
    %218 = vector.shape_cast %217 : vector<8xf32> to vector<1x8xf32>
    %cst_70 = arith.constant 0.001953125 : f32
    %219 = vector.broadcast %cst_70 : f32 to vector<1x8xf32>
    %220 = arith.mulf %218, %219 : vector<1x8xf32>
    %cst_71 = arith.constant 9.99999974E-6 : f32
    %221 = vector.broadcast %cst_71 : f32 to vector<1x8xf32>
    %222 = arith.addf %220, %221 : vector<1x8xf32>
    %223 = math.rsqrt %222 : vector<1x8xf32>
    %224 = arith.mulf %208, %223 : vector<1x8xf32>
    %225 = vector.broadcast %224 : vector<1x8xf32> to vector<512x8xf32>
    %226 = arith.mulf %215, %225 : vector<512x8xf32>
    %227 = vector.broadcast %209 : vector<1x8xf32> to vector<512x8xf32>
    %228 = arith.addf %226, %227 : vector<512x8xf32>
    %229 = arith.addf %205, %228 : vector<512x8xf32>
    %c0_72 = arith.constant 0 : index
    %c0_73 = arith.constant 0 : index
    %230 = vector.load %arg15[%c0_72, %c0_73] : memref<512x8xf32, #tpu.memory_space<vmem>>, vector<512x8xf32>
    tpu.vector_store %arg15[%c0_72, %c0_73], %229 {strides = array<i32>} : memref<512x8xf32, #tpu.memory_space<vmem>>, vector<512x8xf32>,
    return
  }
}

</mosaic_0001>

<llo_original>
// kernel: tpu_custom_call.1
$region0: #{tpu_custom_call.1}
  #allocation0 [shape = 'u32[]', space=smem, size = 0x4, offset = 0x4, fixed_abs, tag = 'smem constant byte address 0x4 - core index']
  #allocation1 [shape = 'u32[72,128]{1,0:T(1,128)}', space=vmem, size = 0x9000, scoped, tag = 'internal scratch']
  %s0 = inlined_call_operand.vmem [shape: bf16[512,4], index: 0, kind: input, shape index: {}]
  %s1 = inlined_call_operand.vmem [shape: bf16[4,8], index: 1, kind: input, shape index: {}]
  %s2 = inlined_call_operand.vmem [shape: f32[1,8], index: 2, kind: input, shape index: {}]
  %s3 = inlined_call_operand.vmem [shape: f32[1,8], index: 3, kind: input, shape index: {}]
  %s4 = inlined_call_operand.vmem [shape: f32[9,256,8], index: 4, kind: input, shape index: {}]
  %s5 = inlined_call_operand.vmem [shape: f32[1,8], index: 5, kind: input, shape index: {}]
  %s6 = inlined_call_operand.vmem [shape: f32[1,8], index: 6, kind: input, shape index: {}]
  %s7 = inlined_call_operand.vmem [shape: f32[2,10], index: 7, kind: input, shape index: {}]
  %s8 = inlined_call_operand.vmem [shape: f32[10,8], index: 8, kind: input, shape index: {}]
  %s9 = inlined_call_operand.vmem [shape: bf16[8,8], index: 9, kind: input, shape index: {}]
  %s10 = inlined_call_operand.vmem [shape: f32[1,8], index: 10, kind: input, shape index: {}]
  %s11 = inlined_call_operand.vmem [shape: f32[1,8], index: 11, kind: input, shape index: {}]
  %s12 = inlined_call_operand.vmem [shape: bf16[4,8], index: 12, kind: input, shape index: {}]
  %s13 = inlined_call_operand.vmem [shape: f32[1,8], index: 13, kind: input, shape index: {}]
  %s14 = inlined_call_operand.vmem [shape: f32[1,8], index: 14, kind: input, shape index: {}]
  %s15 = inlined_call_operand.vmem [shape: f32[512,8], index: 15, kind: output, shape index: {}]
  %s16 = sld [smem:[#allocation0]]
  $region70: #{tpu_custom_call.1} parent=0
    _
  %s18 = ssub.s32 1, %s16
  %s19 = scalar_select 0, %s18, %s16
  // Predicated region
  $region2: #{tpu_custom_call.1} parent=0 // pred_check
    _
  $region3: #{tpu_custom_call.1} parent=0 // pred_check_branch
    %21 = sbr.rel (0) target = $region5
  $region4: #{tpu_custom_call.1} parent=0 // pred_region
    _
  $region5: #{tpu_custom_call.1} parent=0 // pred_fallthru
    _
  // Predicated region
  $region6: #{tpu_custom_call.1} parent=0 // pred_check
    _
  $region7: #{tpu_custom_call.1} parent=0 // pred_check_branch
    %23 = sbr.rel (0) target = $region9
  $region8: #{tpu_custom_call.1} parent=0 // pred_region
    _
  $region9: #{tpu_custom_call.1} parent=0 // pred_fallthru
    _
  // Predicated region
  $region10: #{tpu_custom_call.1} parent=0 // pred_check
    _
  $region11: #{tpu_custom_call.1} parent=0 // pred_check_branch
    %25 = sbr.rel (0) target = $region13
  $region12: #{tpu_custom_call.1} parent=0 // pred_region
    _
  $region13: #{tpu_custom_call.1} parent=0 // pred_fallthru
    _
  // Predicated region
  $region14: #{tpu_custom_call.1} parent=0 // pred_check
    _
  $region15: #{tpu_custom_call.1} parent=0 // pred_check_branch
    %27 = sbr.rel (0) target = $region17
  $region16: #{tpu_custom_call.1} parent=0 // pred_region
    _
  $region17: #{tpu_custom_call.1} parent=0 // pred_fallthru
    _
  // Predicated region
  $region18: #{tpu_custom_call.1} parent=0 // pred_check
    _
  $region19: #{tpu_custom_call.1} parent=0 // pred_check_branch
    %29 = sbr.rel (0) target = $region21
  $region20: #{tpu_custom_call.1} parent=0 // pred_region
    _
  $region21: #{tpu_custom_call.1} parent=0 // pred_fallthru
    _
  // Predicated region
  $region22: #{tpu_custom_call.1} parent=0 // pred_check
    _
  $region23: #{tpu_custom_call.1} parent=0 // pred_check_branch
    %31 = sbr.rel (0) target = $region25
  $region24: #{tpu_custom_call.1} parent=0 // pred_region
    _
  $region25: #{tpu_custom_call.1} parent=0 // pred_fallthru
    _
  // Predicated region
  $region26: #{tpu_custom_call.1} parent=0 // pred_check
    _
  $region27: #{tpu_custom_call.1} parent=0 // pred_check_branch
    %33 = sbr.rel (0) target = $region29
  $region28: #{tpu_custom_call.1} parent=0 // pred_region
    _
  $region29: #{tpu_custom_call.1} parent=0 // pred_fallthru
    _
  // Predicated region
  $region30: #{tpu_custom_call.1} parent=0 // pred_check
    _
  $region31: #{tpu_custom_call.1} parent=0 // pred_check_branch
    %35 = sbr.rel (0) target = $region33
  $region32: #{tpu_custom_call.1} parent=0 // pred_region
    _
  $region33: #{tpu_custom_call.1} parent=0 // pred_fallthru
    _
  // Predicated region
  $region34: #{tpu_custom_call.1} parent=0 // pred_check
    _
  $region35: #{tpu_custom_call.1} parent=0 // pred_check_branch
    %37 = sbr.rel (0) target = $region37
  $region36: #{tpu_custom_call.1} parent=0 // pred_region
    _
  $region37: #{tpu_custom_call.1} parent=0 // pred_fallthru
    _
  // Predicated region
  $region38: #{tpu_custom_call.1} parent=0 // pred_check
    _
  $region39: #{tpu_custom_call.1} parent=0 // pred_check_branch
    %39 = sbr.rel (0) target = $region41
  $region40: #{tpu_custom_call.1} parent=0 // pred_region
    _
  $region41: #{tpu_custom_call.1} parent=0 // pred_fallthru
    _
  // Predicated region
  $region42: #{tpu_custom_call.1} parent=0 // pred_check
    _
  $region43: #{tpu_custom_call.1} parent=0 // pred_check_branch
    %41 = sbr.rel (0) target = $region45
  $region44: #{tpu_custom_call.1} parent=0 // pred_region
    _
  $region45: #{tpu_custom_call.1} parent=0 // pred_fallthru
    _
  // Predicated region
  $region46: #{tpu_custom_call.1} parent=0 // pred_check
    _
  $region47: #{tpu_custom_call.1} parent=0 // pred_check_branch
    %43 = sbr.rel (0) target = $region49
  $region48: #{tpu_custom_call.1} parent=0 // pred_region
    _
  $region49: #{tpu_custom_call.1} parent=0 // pred_fallthru
    _
  // Predicated region
  $region50: #{tpu_custom_call.1} parent=0 // pred_check
    _
  $region51: #{tpu_custom_call.1} parent=0 // pred_check_branch
    %45 = sbr.rel (0) target = $region53
  $region52: #{tpu_custom_call.1} parent=0 // pred_region
    _
  $region53: #{tpu_custom_call.1} parent=0 // pred_fallthru
    _
  // Predicated region
  $region54: #{tpu_custom_call.1} parent=0 // pred_check
    _
  $region55: #{tpu_custom_call.1} parent=0 // pred_check_branch
    %47 = sbr.rel (0) target = $region57
  $region56: #{tpu_custom_call.1} parent=0 // pred_region
    _
  $region57: #{tpu_custom_call.1} parent=0 // pred_fallthru
    _
  // Predicated region
  $region58: #{tpu_custom_call.1} parent=0 // pred_check
    _
  $region59: #{tpu_custom_call.1} parent=0 // pred_check_branch
    %49 = sbr.rel (0) target = $region61
  $region60: #{tpu_custom_call.1} parent=0 // pred_region
    _
  $region61: #{tpu_custom_call.1} parent=0 // pred_fallthru
    _
  %v51 = vld [vmem:[%s0] sm:$0xf]
  %v52 = vld [vmem:[%s0 + $0x4] sm:$0xf]
  %v53 = vld [vmem:[%s0 + $0x8] sm:$0xf]
  %v54 = vld [vmem:[%s0 + $0xc] sm:$0xf]
  %v55 = vld [vmem:[%s0 + $0x10] sm:$0xf]
  %v56 = vld [vmem:[%s0 + $0x14] sm:$0xf]
  %v57 = vld [vmem:[%s0 + $0x18] sm:$0xf]
  %v58 = vld [vmem:[%s0 + $0x1c] sm:$0xf]
  %v59 = vld [vmem:[%s0 + $0x20] sm:$0xf]
  %v60 = vld [vmem:[%s0 + $0x24] sm:$0xf]
  %v61 = vld [vmem:[%s0 + $0x28] sm:$0xf]
  %v62 = vld [vmem:[%s0 + $0x2c] sm:$0xf]
  %v63 = vld [vmem:[%s0 + $0x30] sm:$0xf]
  %v64 = vld [vmem:[%s0 + $0x34] sm:$0xf]
  %v65 = vld [vmem:[%s0 + $0x38] sm:$0xf]
  %v66 = vld [vmem:[%s0 + $0x3c] sm:$0xf]
  %v67 = vld [vmem:[%s0 + $0x40] sm:$0xf]
  %v68 = vld [vmem:[%s0 + $0x44] sm:$0xf]
  %v69 = vld [vmem:[%s0 + $0x48] sm:$0xf]
  %v70 = vld [vmem:[%s0 + $0x4c] sm:$0xf]
  %v71 = vld [vmem:[%s0 + $0x50] sm:$0xf]
  %v72 = vld [vmem:[%s0 + $0x54] sm:$0xf]
  %v73 = vld [vmem:[%s0 + $0x58] sm:$0xf]
  %v74 = vld [vmem:[%s0 + $0x5c] sm:$0xf]
  %v75 = vld [vmem:[%s0 + $0x60] sm:$0xf]
  %v76 = vld [vmem:[%s0 + $0x64] sm:$0xf]
  %v77 = vld [vmem:[%s0 + $0x68] sm:$0xf]
  %v78 = vld [vmem:[%s0 + $0x6c] sm:$0xf]
  %v79 = vld [vmem:[%s0 + $0x70] sm:$0xf]
  %v80 = vld [vmem:[%s0 + $0x74] sm:$0xf]
  %v81 = vld [vmem:[%s0 + $0x78] sm:$0xf]
  %v82 = vld [vmem:[%s0 + $0x7c] sm:$0xf]
  %v83 = vld [vmem:[%s0 + $0x80] sm:$0xf]
  %v84 = vld [vmem:[%s0 + $0x84] sm:$0xf]
  %v85 = vld [vmem:[%s0 + $0x88] sm:$0xf]
  %v86 = vld [vmem:[%s0 + $0x8c] sm:$0xf]
  %v87 = vld [vmem:[%s0 + $0x90] sm:$0xf]
  %v88 = vld [vmem:[%s0 + $0x94] sm:$0xf]
  %v89 = vld [vmem:[%s0 + $0x98] sm:$0xf]
  %v90 = vld [vmem:[%s0 + $0x9c] sm:$0xf]
  %v91 = vld [vmem:[%s0 + $0xa0] sm:$0xf]
  %v92 = vld [vmem:[%s0 + $0xa4] sm:$0xf]
  %v93 = vld [vmem:[%s0 + $0xa8] sm:$0xf]
  %v94 = vld [vmem:[%s0 + $0xac] sm:$0xf]
  %v95 = vld [vmem:[%s0 + $0xb0] sm:$0xf]
  %v96 = vld [vmem:[%s0 + $0xb4] sm:$0xf]
  %v97 = vld [vmem:[%s0 + $0xb8] sm:$0xf]
  %v98 = vld [vmem:[%s0 + $0xbc] sm:$0xf]
  %v99 = vld [vmem:[%s0 + $0xc0] sm:$0xf]
  %v100 = vld [vmem:[%s0 + $0xc4] sm:$0xf]
  %v101 = vld [vmem:[%s0 + $0xc8] sm:$0xf]
  %v102 = vld [vmem:[%s0 + $0xcc] sm:$0xf]
  %v103 = vld [vmem:[%s0 + $0xd0] sm:$0xf]
  %v104 = vld [vmem:[%s0 + $0xd4] sm:$0xf]
  %v105 = vld [vmem:[%s0 + $0xd8] sm:$0xf]
  %v106 = vld [vmem:[%s0 + $0xdc] sm:$0xf]
  %v107 = vld [vmem:[%s0 + $0xe0] sm:$0xf]
  %v108 = vld [vmem:[%s0 + $0xe4] sm:$0xf]
  %v109 = vld [vmem:[%s0 + $0xe8] sm:$0xf]
  %v110 = vld [vmem:[%s0 + $0xec] sm:$0xf]
  %v111 = vld [vmem:[%s0 + $0xf0] sm:$0xf]
  %v112 = vld [vmem:[%s0 + $0xf4] sm:$0xf]
  %v113 = vld [vmem:[%s0 + $0xf8] sm:$0xf]
  %v114 = vld [vmem:[%s0 + $0xfc] sm:$0xf]
  %v115 = vld [vmem:[%s1] sm:$0x3]
  %v180 = vunpack.c.l.b16 %v51
  %v181 = vunpack.c.l.b16 %v52
  %v182 = vunpack.c.l.b16 %v53
  %v183 = vunpack.c.l.b16 %v54
  %v184 = vunpack.c.l.b16 %v55
  %v185 = vunpack.c.l.b16 %v56
  %v186 = vunpack.c.l.b16 %v57
  %v187 = vunpack.c.l.b16 %v58
  %v188 = vunpack.c.l.b16 %v59
  %v189 = vunpack.c.l.b16 %v60
  %v190 = vunpack.c.l.b16 %v61
  %v191 = vunpack.c.l.b16 %v62
  %v192 = vunpack.c.l.b16 %v63
  %v193 = vunpack.c.l.b16 %v64
  %v194 = vunpack.c.l.b16 %v65
  %v195 = vunpack.c.l.b16 %v66
  %v196 = vunpack.c.l.b16 %v67
  %v197 = vunpack.c.l.b16 %v68
  %v198 = vunpack.c.l.b16 %v69
  %v199 = vunpack.c.l.b16 %v70
  %v200 = vunpack.c.l.b16 %v71
  %v201 = vunpack.c.l.b16 %v72
  %v202 = vunpack.c.l.b16 %v73
  %v203 = vunpack.c.l.b16 %v74
  %v204 = vunpack.c.l.b16 %v75
  %v205 = vunpack.c.l.b16 %v76
  %v206 = vunpack.c.l.b16 %v77
  %v207 = vunpack.c.l.b16 %v78
  %v208 = vunpack.c.l.b16 %v79
  %v209 = vunpack.c.l.b16 %v80
  %v210 = vunpack.c.l.b16 %v81
  %v211 = vunpack.c.l.b16 %v82
  %v212 = vunpack.c.l.b16 %v83
  %v213 = vunpack.c.l.b16 %v84
  %v214 = vunpack.c.l.b16 %v85
  %v215 = vunpack.c.l.b16 %v86
  %v216 = vunpack.c.l.b16 %v87
  %v217 = vunpack.c.l.b16 %v88
  %v218 = vunpack.c.l.b16 %v89
  %v219 = vunpack.c.l.b16 %v90
  %v220 = vunpack.c.l.b16 %v91
  %v221 = vunpack.c.l.b16 %v92
  %v222 = vunpack.c.l.b16 %v93
  %v223 = vunpack.c.l.b16 %v94
  %v224 = vunpack.c.l.b16 %v95
  %v225 = vunpack.c.l.b16 %v96
  %v226 = vunpack.c.l.b16 %v97
  %v227 = vunpack.c.l.b16 %v98
  %v228 = vunpack.c.l.b16 %v99
  %v229 = vunpack.c.l.b16 %v100
  %v230 = vunpack.c.l.b16 %v101
  %v231 = vunpack.c.l.b16 %v102
  %v232 = vunpack.c.l.b16 %v103
  %v233 = vunpack.c.l.b16 %v104
  %v234 = vunpack.c.l.b16 %v105
  %v235 = vunpack.c.l.b16 %v106
  %v236 = vunpack.c.l.b16 %v107
  %v237 = vunpack.c.l.b16 %v108
  %v238 = vunpack.c.l.b16 %v109
  %v239 = vunpack.c.l.b16 %v110
  %v240 = vunpack.c.l.b16 %v111
  %v241 = vunpack.c.l.b16 %v112
  %v242 = vunpack.c.l.b16 %v113
  %v243 = vunpack.c.l.b16 %v114
  %v244 = vpack.c.b16 %v181, %v180
  %v245 = vpack.c.b16 %v183, %v182
  %v246 = vpack.c.b16 %v185, %v184
  %v247 = vpack.c.b16 %v187, %v186
  %v248 = vpack.c.b16 %v189, %v188
  %v249 = vpack.c.b16 %v191, %v190
  %v250 = vpack.c.b16 %v193, %v192
  %v251 = vpack.c.b16 %v195, %v194
  %v252 = vpack.c.b16 %v197, %v196
  %v253 = vpack.c.b16 %v199, %v198
  %v254 = vpack.c.b16 %v201, %v200
  %v255 = vpack.c.b16 %v203, %v202
  %v256 = vpack.c.b16 %v205, %v204
  %v257 = vpack.c.b16 %v207, %v206
  %v258 = vpack.c.b16 %v209, %v208
  %v259 = vpack.c.b16 %v211, %v210
  %v260 = vpack.c.b16 %v213, %v212
  %v261 = vpack.c.b16 %v215, %v214
  %v262 = vpack.c.b16 %v217, %v216
  %v263 = vpack.c.b16 %v219, %v218
  %v264 = vpack.c.b16 %v221, %v220
  %v265 = vpack.c.b16 %v223, %v222
  %v266 = vpack.c.b16 %v225, %v224
  %v267 = vpack.c.b16 %v227, %v226
  %v268 = vpack.c.b16 %v229, %v228
  %v269 = vpack.c.b16 %v231, %v230
  %v270 = vpack.c.b16 %v233, %v232
  %v271 = vpack.c.b16 %v235, %v234
  %v272 = vpack.c.b16 %v237, %v236
  %v273 = vpack.c.b16 %v239, %v238
  %v274 = vpack.c.b16 %v241, %v240
  %v275 = vpack.c.b16 %v243, %v242
  %vm276 = vcmask 31744
  %v278 = vsel %vm276, %v244, 0
  %v281 = vsel %vm276, %v245, 0
  %v284 = vsel %vm276, %v246, 0
  %v287 = vsel %vm276, %v247, 0
  %v290 = vsel %vm276, %v248, 0
  %v293 = vsel %vm276, %v249, 0
  %v296 = vsel %vm276, %v250, 0
  %v299 = vsel %vm276, %v251, 0
  %v302 = vsel %vm276, %v252, 0
  %v305 = vsel %vm276, %v253, 0
  %v308 = vsel %vm276, %v254, 0
  %v311 = vsel %vm276, %v255, 0
  %v314 = vsel %vm276, %v256, 0
  %v317 = vsel %vm276, %v257, 0
  %v320 = vsel %vm276, %v258, 0
  %v323 = vsel %vm276, %v259, 0
  %v326 = vsel %vm276, %v260, 0
  %v329 = vsel %vm276, %v261, 0
  %v332 = vsel %vm276, %v262, 0
  %v335 = vsel %vm276, %v263, 0
  %v338 = vsel %vm276, %v264, 0
  %v341 = vsel %vm276, %v265, 0
  %v344 = vsel %vm276, %v266, 0
  %v347 = vsel %vm276, %v267, 0
  %v350 = vsel %vm276, %v268, 0
  %v353 = vsel %vm276, %v269, 0
  %v356 = vsel %vm276, %v270, 0
  %v359 = vsel %vm276, %v271, 0
  %v362 = vsel %vm276, %v272, 0
  %v365 = vsel %vm276, %v273, 0
  %v368 = vsel %vm276, %v274, 0
  %v371 = vsel %vm276, %v275, 0
  %vm373 = vcmask 1041408
  %v375 = vsel %vm373, %v115, 0
  %377 = vmatpush.bf16.msra.mxu0 0
  %378 = vmatpush.bf16.msra.mxu0 0
  %379 = vmatpush.bf16.msra.mxu0 0
  %380 = vmatpush.bf16.msra.mxu0 0
  %381 = vmatpush.bf16.msra.mxu0 0
  %382 = vmatpush.bf16.msra.mxu0 0
  %383 = vmatpush.bf16.msra.mxu0 0
  %384 = vmatpush.bf16.msra.mxu0 %v375
  %385 = vmatmul.bf16.gmra.mxu0 %v278
  %v386 = vpop.f32.mrf.mxu0
  %v387 = vadd.f32 0.0, %v386
  %v388 = vpop.f32.mrf.mxu0
  %v389 = vadd.f32 0.0, %v388
  %390 = vmatmul.bf16.gmra.mxu0 %v281
  %v391 = vpop.f32.mrf.mxu0
  %v392 = vadd.f32 0.0, %v391
  %v393 = vpop.f32.mrf.mxu0
  %v394 = vadd.f32 0.0, %v393
  %395 = vmatmul.bf16.gmra.mxu0 %v284
  %v396 = vpop.f32.mrf.mxu0
  %v397 = vadd.f32 0.0, %v396
  %v398 = vpop.f32.mrf.mxu0
  %v399 = vadd.f32 0.0, %v398
  %400 = vmatmul.bf16.gmra.mxu0 %v287
  %v401 = vpop.f32.mrf.mxu0
  %v402 = vadd.f32 0.0, %v401
  %v403 = vpop.f32.mrf.mxu0
  %v404 = vadd.f32 0.0, %v403
  %405 = vmatmul.bf16.gmra.mxu0 %v290
  %v406 = vpop.f32.mrf.mxu0
  %v407 = vadd.f32 0.0, %v406
  %v408 = vpop.f32.mrf.mxu0
  %v409 = vadd.f32 0.0, %v408
  %410 = vmatmul.bf16.gmra.mxu0 %v293
  %v411 = vpop.f32.mrf.mxu0
  %v412 = vadd.f32 0.0, %v411
  %v413 = vpop.f32.mrf.mxu0
  %v414 = vadd.f32 0.0, %v413
  %415 = vmatmul.bf16.gmra.mxu0 %v296
  %v416 = vpop.f32.mrf.mxu0
  %v417 = vadd.f32 0.0, %v416
  %v418 = vpop.f32.mrf.mxu0
  %v419 = vadd.f32 0.0, %v418
  %420 = vmatmul.bf16.gmra.mxu0 %v299
  %v421 = vpop.f32.mrf.mxu0
  %v422 = vadd.f32 0.0, %v421
  %v423 = vpop.f32.mrf.mxu0
  %v424 = vadd.f32 0.0, %v423
  %425 = vmatmul.bf16.gmra.mxu0 %v302
  %v426 = vpop.f32.mrf.mxu0
  %v427 = vadd.f32 0.0, %v426
  %v428 = vpop.f32.mrf.mxu0
  %v429 = vadd.f32 0.0, %v428
  %430 = vmatmul.bf16.gmra.mxu0 %v305
  %v431 = vpop.f32.mrf.mxu0
  %v432 = vadd.f32 0.0, %v431
  %v433 = vpop.f32.mrf.mxu0
  %v434 = vadd.f32 0.0, %v433
  %435 = vmatmul.bf16.gmra.mxu0 %v308
  %v436 = vpop.f32.mrf.mxu0
  %v437 = vadd.f32 0.0, %v436
  %v438 = vpop.f32.mrf.mxu0
  %v439 = vadd.f32 0.0, %v438
  %440 = vmatmul.bf16.gmra.mxu0 %v311
  %v441 = vpop.f32.mrf.mxu0
  %v442 = vadd.f32 0.0, %v441
  %v443 = vpop.f32.mrf.mxu0
  %v444 = vadd.f32 0.0, %v443
  %445 = vmatmul.bf16.gmra.mxu0 %v314
  %v446 = vpop.f32.mrf.mxu0
  %v447 = vadd.f32 0.0, %v446
  %v448 = vpop.f32.mrf.mxu0
  %v449 = vadd.f32 0.0, %v448
  %450 = vmatmul.bf16.gmra.mxu0 %v317
  %v451 = vpop.f32.mrf.mxu0
  %v452 = vadd.f32 0.0, %v451
  %v453 = vpop.f32.mrf.mxu0
  %v454 = vadd.f32 0.0, %v453
  %455 = vmatmul.bf16.gmra.mxu0 %v320
  %v456 = vpop.f32.mrf.mxu0
  %v457 = vadd.f32 0.0, %v456
  %v458 = vpop.f32.mrf.mxu0
  %v459 = vadd.f32 0.0, %v458
  %460 = vmatmul.bf16.gmra.mxu0 %v323
  %v461 = vpop.f32.mrf.mxu0
  %v462 = vadd.f32 0.0, %v461
  %v463 = vpop.f32.mrf.mxu0
  %v464 = vadd.f32 0.0, %v463
  %465 = vmatmul.bf16.gmra.mxu0 %v326
  %v466 = vpop.f32.mrf.mxu0
  %v467 = vadd.f32 0.0, %v466
  %v468 = vpop.f32.mrf.mxu0
  %v469 = vadd.f32 0.0, %v468
  %470 = vmatmul.bf16.gmra.mxu0 %v329
  %v471 = vpop.f32.mrf.mxu0
  %v472 = vadd.f32 0.0, %v471
  %v473 = vpop.f32.mrf.mxu0
  %v474 = vadd.f32 0.0, %v473
  %475 = vmatmul.bf16.gmra.mxu0 %v332
  %v476 = vpop.f32.mrf.mxu0
  %v477 = vadd.f32 0.0, %v476
  %v478 = vpop.f32.mrf.mxu0
  %v479 = vadd.f32 0.0, %v478
  %480 = vmatmul.bf16.gmra.mxu0 %v335
  %v481 = vpop.f32.mrf.mxu0
  %v482 = vadd.f32 0.0, %v481
  %v483 = vpop.f32.mrf.mxu0
  %v484 = vadd.f32 0.0, %v483
  %485 = vmatmul.bf16.gmra.mxu0 %v338
  %v486 = vpop.f32.mrf.mxu0
  %v487 = vadd.f32 0.0, %v486
  %v488 = vpop.f32.mrf.mxu0
  %v489 = vadd.f32 0.0, %v488
  %490 = vmatmul.bf16.gmra.mxu0 %v341
  %v491 = vpop.f32.mrf.mxu0
  %v492 = vadd.f32 0.0, %v491
  %v493 = vpop.f32.mrf.mxu0
  %v494 = vadd.f32 0.0, %v493
  %495 = vmatmul.bf16.gmra.mxu0 %v344
  %v496 = vpop.f32.mrf.mxu0
  %v497 = vadd.f32 0.0, %v496
  %v498 = vpop.f32.mrf.mxu0
  %v499 = vadd.f32 0.0, %v498
  %500 = vmatmul.bf16.gmra.mxu0 %v347
  %v501 = vpop.f32.mrf.mxu0
  %v502 = vadd.f32 0.0, %v501
  %v503 = vpop.f32.mrf.mxu0
  %v504 = vadd.f32 0.0, %v503
  %505 = vmatmul.bf16.gmra.mxu0 %v350
  %v506 = vpop.f32.mrf.mxu0
  %v507 = vadd.f32 0.0, %v506
  %v508 = vpop.f32.mrf.mxu0
  %v509 = vadd.f32 0.0, %v508
  %510 = vmatmul.bf16.gmra.mxu0 %v353
  %v511 = vpop.f32.mrf.mxu0
  %v512 = vadd.f32 0.0, %v511
  %v513 = vpop.f32.mrf.mxu0
  %v514 = vadd.f32 0.0, %v513
  %515 = vmatmul.bf16.gmra.mxu0 %v356
  %v516 = vpop.f32.mrf.mxu0
  %v517 = vadd.f32 0.0, %v516
  %v518 = vpop.f32.mrf.mxu0
  %v519 = vadd.f32 0.0, %v518
  %520 = vmatmul.bf16.gmra.mxu0 %v359
  %v521 = vpop.f32.mrf.mxu0
  %v522 = vadd.f32 0.0, %v521
  %v523 = vpop.f32.mrf.mxu0
  %v524 = vadd.f32 0.0, %v523
  %525 = vmatmul.bf16.gmra.mxu0 %v362
  %v526 = vpop.f32.mrf.mxu0
  %v527 = vadd.f32 0.0, %v526
  %v528 = vpop.f32.mrf.mxu0
  %v529 = vadd.f32 0.0, %v528
  %530 = vmatmul.bf16.gmra.mxu0 %v365
  %v531 = vpop.f32.mrf.mxu0
  %v532 = vadd.f32 0.0, %v531
  %v533 = vpop.f32.mrf.mxu0
  %v534 = vadd.f32 0.0, %v533
  %535 = vmatmul.bf16.gmra.mxu0 %v368
  %v536 = vpop.f32.mrf.mxu0
  %v537 = vadd.f32 0.0, %v536
  %v538 = vpop.f32.mrf.mxu0
  %v539 = vadd.f32 0.0, %v538
  %540 = vmatmul.bf16.gmra.mxu0 %v371
  %v541 = vpop.f32.mrf.mxu0
  %v542 = vadd.f32 0.0, %v541
  %v543 = vpop.f32.mrf.mxu0
  %v544 = vadd.f32 0.0, %v543
  %545 = vdwg.mxu0
  %v546 = vld [vmem:[%s2] sm:$0x1]
  %v547 = vld [vmem:[%s3] sm:$0x1]
  %vm548 = vcmask 64512
  %v549 = vsel %vm548, %v387, 0.0
  %v550 = vsel %vm548, %v389, 0.0
  %v551 = vadd.f32 %v549, %v550
  %v552 = vsel %vm548, %v392, 0.0
  %v553 = vadd.f32 %v551, %v552
  %v554 = vsel %vm548, %v394, 0.0
  %v555 = vadd.f32 %v553, %v554
  %v556 = vsel %vm548, %v397, 0.0
  %v557 = vadd.f32 %v555, %v556
  %v558 = vsel %vm548, %v399, 0.0
  %v559 = vadd.f32 %v557, %v558
  %v560 = vsel %vm548, %v402, 0.0
  %v561 = vadd.f32 %v559, %v560
  %v562 = vsel %vm548, %v404, 0.0
  %v563 = vadd.f32 %v561, %v562
  %v564 = vsel %vm548, %v407, 0.0
  %v565 = vadd.f32 %v563, %v564
  %v566 = vsel %vm548, %v409, 0.0
  %v567 = vadd.f32 %v565, %v566
  %v568 = vsel %vm548, %v412, 0.0
  %v569 = vadd.f32 %v567, %v568
  %v570 = vsel %vm548, %v414, 0.0
  %v571 = vadd.f32 %v569, %v570
  %v572 = vsel %vm548, %v417, 0.0
  %v573 = vadd.f32 %v571, %v572
  %v574 = vsel %vm548, %v419, 0.0
  %v575 = vadd.f32 %v573, %v574
  %v576 = vsel %vm548, %v422, 0.0
  %v577 = vadd.f32 %v575, %v576
  %v578 = vsel %vm548, %v424, 0.0
  %v579 = vadd.f32 %v577, %v578
  %v580 = vsel %vm548, %v427, 0.0
  %v581 = vadd.f32 %v579, %v580
  %v582 = vsel %vm548, %v429, 0.0
  %v583 = vadd.f32 %v581, %v582
  %v584 = vsel %vm548, %v432, 0.0
  %v585 = vadd.f32 %v583, %v584
  %v586 = vsel %vm548, %v434, 0.0
  %v587 = vadd.f32 %v585, %v586
  %v588 = vsel %vm548, %v437, 0.0
  %v589 = vadd.f32 %v587, %v588
  %v590 = vsel %vm548, %v439, 0.0
  %v591 = vadd.f32 %v589, %v590
  %v592 = vsel %vm548, %v442, 0.0
  %v593 = vadd.f32 %v591, %v592
  %v594 = vsel %vm548, %v444, 0.0
  %v595 = vadd.f32 %v593, %v594
  %v596 = vsel %vm548, %v447, 0.0
  %v597 = vadd.f32 %v595, %v596
  %v598 = vsel %vm548, %v449, 0.0
  %v599 = vadd.f32 %v597, %v598
  %v600 = vsel %vm548, %v452, 0.0
  %v601 = vadd.f32 %v599, %v600
  %v602 = vsel %vm548, %v454, 0.0
  %v603 = vadd.f32 %v601, %v602
  %v604 = vsel %vm548, %v457, 0.0
  %v605 = vadd.f32 %v603, %v604
  %v606 = vsel %vm548, %v459, 0.0
  %v607 = vadd.f32 %v605, %v606
  %v608 = vsel %vm548, %v462, 0.0
  %v609 = vadd.f32 %v607, %v608
  %v610 = vsel %vm548, %v464, 0.0
  %v611 = vadd.f32 %v609, %v610
  %v612 = vsel %vm548, %v467, 0.0
  %v613 = vadd.f32 %v611, %v612
  %v614 = vsel %vm548, %v469, 0.0
  %v615 = vadd.f32 %v613, %v614
  %v616 = vsel %vm548, %v472, 0.0
  %v617 = vadd.f32 %v615, %v616
  %v618 = vsel %vm548, %v474, 0.0
  %v619 = vadd.f32 %v617, %v618
  %v620 = vsel %vm548, %v477, 0.0
  %v621 = vadd.f32 %v619, %v620
  %v622 = vsel %vm548, %v479, 0.0
  %v623 = vadd.f32 %v621, %v622
  %v624 = vsel %vm548, %v482, 0.0
  %v625 = vadd.f32 %v623, %v624
  %v626 = vsel %vm548, %v484, 0.0
  %v627 = vadd.f32 %v625, %v626
  %v628 = vsel %vm548, %v487, 0.0
  %v629 = vadd.f32 %v627, %v628
  %v630 = vsel %vm548, %v489, 0.0
  %v631 = vadd.f32 %v629, %v630
  %v632 = vsel %vm548, %v492, 0.0
  %v633 = vadd.f32 %v631, %v632
  %v634 = vsel %vm548, %v494, 0.0
  %v635 = vadd.f32 %v633, %v634
  %v636 = vsel %vm548, %v497, 0.0
  %v637 = vadd.f32 %v635, %v636
  %v638 = vsel %vm548, %v499, 0.0
  %v639 = vadd.f32 %v637, %v638
  %v640 = vsel %vm548, %v502, 0.0
  %v641 = vadd.f32 %v639, %v640
  %v642 = vsel %vm548, %v504, 0.0
  %v643 = vadd.f32 %v641, %v642
  %v644 = vsel %vm548, %v507, 0.0
  %v645 = vadd.f32 %v643, %v644
  %v646 = vsel %vm548, %v509, 0.0
  %v647 = vadd.f32 %v645, %v646
  %v648 = vsel %vm548, %v512, 0.0
  %v649 = vadd.f32 %v647, %v648
  %v650 = vsel %vm548, %v514, 0.0
  %v651 = vadd.f32 %v649, %v650
  %v652 = vsel %vm548, %v517, 0.0
  %v653 = vadd.f32 %v651, %v652
  %v654 = vsel %vm548, %v519, 0.0
  %v655 = vadd.f32 %v653, %v654
  %v656 = vsel %vm548, %v522, 0.0
  %v657 = vadd.f32 %v655, %v656
  %v658 = vsel %vm548, %v524, 0.0
  %v659 = vadd.f32 %v657, %v658
  %v660 = vsel %vm548, %v527, 0.0
  %v661 = vadd.f32 %v659, %v660
  %v662 = vsel %vm548, %v529, 0.0
  %v663 = vadd.f32 %v661, %v662
  %v664 = vsel %vm548, %v532, 0.0
  %v665 = vadd.f32 %v663, %v664
  %v666 = vsel %vm548, %v534, 0.0
  %v667 = vadd.f32 %v665, %v666
  %v668 = vsel %vm548, %v537, 0.0
  %v669 = vadd.f32 %v667, %v668
  %v670 = vsel %vm548, %v539, 0.0
  %v671 = vadd.f32 %v669, %v670
  %v672 = vsel %vm548, %v542, 0.0
  %v673 = vadd.f32 %v671, %v672
  %v674 = vsel %vm548, %v544, 0.0
  %v675 = vadd.f32 %v673, %v674
  %v676 = vrot.slane %v675, 4
  %v677 = vadd.f32 %v675, %v676
  %v678 = vrot.slane %v677, 2
  %v679 = vadd.f32 %v677, %v678
  %v680 = vrot.slane %v679, 1
  %v681 = vadd.f32 %v679, %v680
  %v682 = vmul.f32 %v681, 0.001953125
  %v683 = vsub.f32 %v387, %v682
  %v684 = vsub.f32 %v389, %v682
  %v685 = vsub.f32 %v392, %v682
  %v686 = vsub.f32 %v394, %v682
  %v687 = vsub.f32 %v397, %v682
  %v688 = vsub.f32 %v399, %v682
  %v689 = vsub.f32 %v402, %v682
  %v690 = vsub.f32 %v404, %v682
  %v691 = vsub.f32 %v407, %v682
  %v692 = vsub.f32 %v409, %v682
  %v693 = vsub.f32 %v412, %v682
  %v694 = vsub.f32 %v414, %v682
  %v695 = vsub.f32 %v417, %v682
  %v696 = vsub.f32 %v419, %v682
  %v697 = vsub.f32 %v422, %v682
  %v698 = vsub.f32 %v424, %v682
  %v699 = vsub.f32 %v427, %v682
  %v700 = vsub.f32 %v429, %v682
  %v701 = vsub.f32 %v432, %v682
  %v702 = vsub.f32 %v434, %v682
  %v703 = vsub.f32 %v437, %v682
  %v704 = vsub.f32 %v439, %v682
  %v705 = vsub.f32 %v442, %v682
  %v706 = vsub.f32 %v444, %v682
  %v707 = vsub.f32 %v447, %v682
  %v708 = vsub.f32 %v449, %v682
  %v709 = vsub.f32 %v452, %v682
  %v710 = vsub.f32 %v454, %v682
  %v711 = vsub.f32 %v457, %v682
  %v712 = vsub.f32 %v459, %v682
  %v713 = vsub.f32 %v462, %v682
  %v714 = vsub.f32 %v464, %v682
  %v715 = vsub.f32 %v467, %v682
  %v716 = vsub.f32 %v469, %v682
  %v717 = vsub.f32 %v472, %v682
  %v718 = vsub.f32 %v474, %v682
  %v719 = vsub.f32 %v477, %v682
  %v720 = vsub.f32 %v479, %v682
  %v721 = vsub.f32 %v482, %v682
  %v722 = vsub.f32 %v484, %v682
  %v723 = vsub.f32 %v487, %v682
  %v724 = vsub.f32 %v489, %v682
  %v725 = vsub.f32 %v492, %v682
  %v726 = vsub.f32 %v494, %v682
  %v727 = vsub.f32 %v497, %v682
  %v728 = vsub.f32 %v499, %v682
  %v729 = vsub.f32 %v502, %v682
  %v730 = vsub.f32 %v504, %v682
  %v731 = vsub.f32 %v507, %v682
  %v732 = vsub.f32 %v509, %v682
  %v733 = vsub.f32 %v512, %v682
  %v734 = vsub.f32 %v514, %v682
  %v735 = vsub.f32 %v517, %v682
  %v736 = vsub.f32 %v519, %v682
  %v737 = vsub.f32 %v522, %v682
  %v738 = vsub.f32 %v524, %v682
  %v739 = vsub.f32 %v527, %v682
  %v740 = vsub.f32 %v529, %v682
  %v741 = vsub.f32 %v532, %v682
  %v742 = vsub.f32 %v534, %v682
  %v743 = vsub.f32 %v537, %v682
  %v744 = vsub.f32 %v539, %v682
  %v745 = vsub.f32 %v542, %v682
  %v746 = vsub.f32 %v544, %v682
  %v747 = vmul.f32 %v683, %v683
  %v748 = vmul.f32 %v684, %v684
  %v749 = vmul.f32 %v685, %v685
  %v750 = vmul.f32 %v686, %v686
  %v751 = vmul.f32 %v687, %v687
  %v752 = vmul.f32 %v688, %v688
  %v753 = vmul.f32 %v689, %v689
  %v754 = vmul.f32 %v690, %v690
  %v755 = vmul.f32 %v691, %v691
  %v756 = vmul.f32 %v692, %v692
  %v757 = vmul.f32 %v693, %v693
  %v758 = vmul.f32 %v694, %v694
  %v759 = vmul.f32 %v695, %v695
  %v760 = vmul.f32 %v696, %v696
  %v761 = vmul.f32 %v697, %v697
  %v762 = vmul.f32 %v698, %v698
  %v763 = vmul.f32 %v699, %v699
  %v764 = vmul.f32 %v700, %v700
  %v765 = vmul.f32 %v701, %v701
  %v766 = vmul.f32 %v702, %v702
  %v767 = vmul.f32 %v703, %v703
  %v768 = vmul.f32 %v704, %v704
  %v769 = vmul.f32 %v705, %v705
  %v770 = vmul.f32 %v706, %v706
  %v771 = vmul.f32 %v707, %v707
  %v772 = vmul.f32 %v708, %v708
  %v773 = vmul.f32 %v709, %v709
  %v774 = vmul.f32 %v710, %v710
  %v775 = vmul.f32 %v711, %v711
  %v776 = vmul.f32 %v712, %v712
  %v777 = vmul.f32 %v713, %v713
  %v778 = vmul.f32 %v714, %v714
  %v779 = vmul.f32 %v715, %v715
  %v780 = vmul.f32 %v716, %v716
  %v781 = vmul.f32 %v717, %v717
  %v782 = vmul.f32 %v718, %v718
  %v783 = vmul.f32 %v719, %v719
  %v784 = vmul.f32 %v720, %v720
  %v785 = vmul.f32 %v721, %v721
  %v786 = vmul.f32 %v722, %v722
  %v787 = vmul.f32 %v723, %v723
  %v788 = vmul.f32 %v724, %v724
  %v789 = vmul.f32 %v725, %v725
  %v790 = vmul.f32 %v726, %v726
  %v791 = vmul.f32 %v727, %v727
  %v792 = vmul.f32 %v728, %v728
  %v793 = vmul.f32 %v729, %v729
  %v794 = vmul.f32 %v730, %v730
  %v795 = vmul.f32 %v731, %v731
  %v796 = vmul.f32 %v732, %v732
  %v797 = vmul.f32 %v733, %v733
  %v798 = vmul.f32 %v734, %v734
  %v799 = vmul.f32 %v735, %v735
  %v800 = vmul.f32 %v736, %v736
  %v801 = vmul.f32 %v737, %v737
  %v802 = vmul.f32 %v738, %v738
  %v803 = vmul.f32 %v739, %v739
  %v804 = vmul.f32 %v740, %v740
  %v805 = vmul.f32 %v741, %v741
  %v806 = vmul.f32 %v742, %v742
  %v807 = vmul.f32 %v743, %v743
  %v808 = vmul.f32 %v744, %v744
  %v809 = vmul.f32 %v745, %v745
  %v810 = vmul.f32 %v746, %v746
  %v811 = vsel %vm548, %v747, 0.0
  %v812 = vsel %vm548, %v748, 0.0
  %v813 = vadd.f32 %v811, %v812
  %v814 = vsel %vm548, %v749, 0.0
  %v815 = vadd.f32 %v813, %v814
  %v816 = vsel %vm548, %v750, 0.0
  %v817 = vadd.f32 %v815, %v816
  %v818 = vsel %vm548, %v751, 0.0
  %v819 = vadd.f32 %v817, %v818
  %v820 = vsel %vm548, %v752, 0.0
  %v821 = vadd.f32 %v819, %v820
  %v822 = vsel %vm548, %v753, 0.0
  %v823 = vadd.f32 %v821, %v822
  %v824 = vsel %vm548, %v754, 0.0
  %v825 = vadd.f32 %v823, %v824
  %v826 = vsel %vm548, %v755, 0.0
  %v827 = vadd.f32 %v825, %v826
  %v828 = vsel %vm548, %v756, 0.0
  %v829 = vadd.f32 %v827, %v828
  %v830 = vsel %vm548, %v757, 0.0
  %v831 = vadd.f32 %v829, %v830
  %v832 = vsel %vm548, %v758, 0.0
  %v833 = vadd.f32 %v831, %v832
  %v834 = vsel %vm548, %v759, 0.0
  %v835 = vadd.f32 %v833, %v834
  %v836 = vsel %vm548, %v760, 0.0
  %v837 = vadd.f32 %v835, %v836
  %v838 = vsel %vm548, %v761, 0.0
  %v839 = vadd.f32 %v837, %v838
  %v840 = vsel %vm548, %v762, 0.0
  %v841 = vadd.f32 %v839, %v840
  %v842 = vsel %vm548, %v763, 0.0
  %v843 = vadd.f32 %v841, %v842
  %v844 = vsel %vm548, %v764, 0.0
  %v845 = vadd.f32 %v843, %v844
  %v846 = vsel %vm548, %v765, 0.0
  %v847 = vadd.f32 %v845, %v846
  %v848 = vsel %vm548, %v766, 0.0
  %v849 = vadd.f32 %v847, %v848
  %v850 = vsel %vm548, %v767, 0.0
  %v851 = vadd.f32 %v849, %v850
  %v852 = vsel %vm548, %v768, 0.0
  %v853 = vadd.f32 %v851, %v852
  %v854 = vsel %vm548, %v769, 0.0
  %v855 = vadd.f32 %v853, %v854
  %v856 = vsel %vm548, %v770, 0.0
  %v857 = vadd.f32 %v855, %v856
  %v858 = vsel %vm548, %v771, 0.0
  %v859 = vadd.f32 %v857, %v858
  %v860 = vsel %vm548, %v772, 0.0
  %v861 = vadd.f32 %v859, %v860
  %v862 = vsel %vm548, %v773, 0.0
  %v863 = vadd.f32 %v861, %v862
  %v864 = vsel %vm548, %v774, 0.0
  %v865 = vadd.f32 %v863, %v864
  %v866 = vsel %vm548, %v775, 0.0
  %v867 = vadd.f32 %v865, %v866
  %v868 = vsel %vm548, %v776, 0.0
  %v869 = vadd.f32 %v867, %v868
  %v870 = vsel %vm548, %v777, 0.0
  %v871 = vadd.f32 %v869, %v870
  %v872 = vsel %vm548, %v778, 0.0
  %v873 = vadd.f32 %v871, %v872
  %v874 = vsel %vm548, %v779, 0.0
  %v875 = vadd.f32 %v873, %v874
  %v876 = vsel %vm548, %v780, 0.0
  %v877 = vadd.f32 %v875, %v876
  %v878 = vsel %vm548, %v781, 0.0
  %v879 = vadd.f32 %v877, %v878
  %v880 = vsel %vm548, %v782, 0.0
  %v881 = vadd.f32 %v879, %v880
  %v882 = vsel %vm548, %v783, 0.0
  %v883 = vadd.f32 %v881, %v882
  %v884 = vsel %vm548, %v784, 0.0
  %v885 = vadd.f32 %v883, %v884
  %v886 = vsel %vm548, %v785, 0.0
  %v887 = vadd.f32 %v885, %v886
  %v888 = vsel %vm548, %v786, 0.0
  %v889 = vadd.f32 %v887, %v888
  %v890 = vsel %vm548, %v787, 0.0
  %v891 = vadd.f32 %v889, %v890
  %v892 = vsel %vm548, %v788, 0.0
  %v893 = vadd.f32 %v891, %v892
  %v894 = vsel %vm548, %v789, 0.0
  %v895 = vadd.f32 %v893, %v894
  %v896 = vsel %vm548, %v790, 0.0
  %v897 = vadd.f32 %v895, %v896
  %v898 = vsel %vm548, %v791, 0.0
  %v899 = vadd.f32 %v897, %v898
  %v900 = vsel %vm548, %v792, 0.0
  %v901 = vadd.f32 %v899, %v900
  %v902 = vsel %vm548, %v793, 0.0
  %v903 = vadd.f32 %v901, %v902
  %v904 = vsel %vm548, %v794, 0.0
  %v905 = vadd.f32 %v903, %v904
  %v906 = vsel %vm548, %v795, 0.0
  %v907 = vadd.f32 %v905, %v906
  %v908 = vsel %vm548, %v796, 0.0
  %v909 = vadd.f32 %v907, %v908
  %v910 = vsel %vm548, %v797, 0.0
  %v911 = vadd.f32 %v909, %v910
  %v912 = vsel %vm548, %v798, 0.0
  %v913 = vadd.f32 %v911, %v912
  %v914 = vsel %vm548, %v799, 0.0
  %v915 = vadd.f32 %v913, %v914
  %v916 = vsel %vm548, %v800, 0.0
  %v917 = vadd.f32 %v915, %v916
  %v918 = vsel %vm548, %v801, 0.0
  %v919 = vadd.f32 %v917, %v918
  %v920 = vsel %vm548, %v802, 0.0
  %v921 = vadd.f32 %v919, %v920
  %v922 = vsel %vm548, %v803, 0.0
  %v923 = vadd.f32 %v921, %v922
  %v924 = vsel %vm548, %v804, 0.0
  %v925 = vadd.f32 %v923, %v924
  %v926 = vsel %vm548, %v805, 0.0
  %v927 = vadd.f32 %v925, %v926
  %v928 = vsel %vm548, %v806, 0.0
  %v929 = vadd.f32 %v927, %v928
  %v930 = vsel %vm548, %v807, 0.0
  %v931 = vadd.f32 %v929, %v930
  %v932 = vsel %vm548, %v808, 0.0
  %v933 = vadd.f32 %v931, %v932
  %v934 = vsel %vm548, %v809, 0.0
  %v935 = vadd.f32 %v933, %v934
  %v936 = vsel %vm548, %v810, 0.0
  %v937 = vadd.f32 %v935, %v936
  %v938 = vrot.slane %v937, 4
  %v939 = vadd.f32 %v937, %v938
  %v940 = vrot.slane %v939, 2
  %v941 = vadd.f32 %v939, %v940
  %v942 = vrot.slane %v941, 1
  %v943 = vadd.f32 %v941, %v942
  %v944 = vmul.f32 %v943, 0.001953125
  %v945 = vadd.f32 %v944, 1e-05
  %v946 = vrsqrt.pop %v945
  %v947 = vmul.f32 %v946, %v945
  %v948 = vmul.f32 %v947, %v946
  %v949 = vmul.f32 0.5, %v948
  %v950 = vsub.f32 1.5, %v949
  %v951 = vmul.f32 %v946, %v950
  %vm952 = vweird.f32 %v945
  %vm953 = vweird.f32 %v946
  %vm954 = vmor %vm952, %vm953
  %v955 = vsel %vm954, %v946, %v951
  %v956 = vmul.f32 %v546, %v955
  %v958 = vperm.slane %v956, 0
  %v960 = vmul.f32 %v683, %v958
  %v961 = vmul.f32 %v684, %v958
  %v962 = vmul.f32 %v685, %v958
  %v963 = vmul.f32 %v686, %v958
  %v964 = vmul.f32 %v687, %v958
  %v965 = vmul.f32 %v688, %v958
  %v966 = vmul.f32 %v689, %v958
  %v967 = vmul.f32 %v690, %v958
  %v968 = vmul.f32 %v691, %v958
  %v969 = vmul.f32 %v692, %v958
  %v970 = vmul.f32 %v693, %v958
  %v971 = vmul.f32 %v694, %v958
  %v972 = vmul.f32 %v695, %v958
  %v973 = vmul.f32 %v696, %v958
  %v974 = vmul.f32 %v697, %v958
  %v975 = vmul.f32 %v698, %v958
  %v976 = vmul.f32 %v699, %v958
  %v977 = vmul.f32 %v700, %v958
  %v978 = vmul.f32 %v701, %v958
  %v979 = vmul.f32 %v702, %v958
  %v980 = vmul.f32 %v703, %v958
  %v981 = vmul.f32 %v704, %v958
  %v982 = vmul.f32 %v705, %v958
  %v983 = vmul.f32 %v706, %v958
  %v984 = vmul.f32 %v707, %v958
  %v985 = vmul.f32 %v708, %v958
  %v986 = vmul.f32 %v709, %v958
  %v987 = vmul.f32 %v710, %v958
  %v988 = vmul.f32 %v711, %v958
  %v989 = vmul.f32 %v712, %v958
  %v990 = vmul.f32 %v713, %v958
  %v991 = vmul.f32 %v714, %v958
  %v992 = vmul.f32 %v715, %v958
  %v993 = vmul.f32 %v716, %v958
  %v994 = vmul.f32 %v717, %v958
  %v995 = vmul.f32 %v718, %v958
  %v996 = vmul.f32 %v719, %v958
  %v997 = vmul.f32 %v720, %v958
  %v998 = vmul.f32 %v721, %v958
  %v999 = vmul.f32 %v722, %v958
  %v1000 = vmul.f32 %v723, %v958
  %v1001 = vmul.f32 %v724, %v958
  %v1002 = vmul.f32 %v725, %v958
  %v1003 = vmul.f32 %v726, %v958
  %v1004 = vmul.f32 %v727, %v958
  %v1005 = vmul.f32 %v728, %v958
  %v1006 = vmul.f32 %v729, %v958
  %v1007 = vmul.f32 %v730, %v958
  %v1008 = vmul.f32 %v731, %v958
  %v1009 = vmul.f32 %v732, %v958
  %v1010 = vmul.f32 %v733, %v958
  %v1011 = vmul.f32 %v734, %v958
  %v1012 = vmul.f32 %v735, %v958
  %v1013 = vmul.f32 %v736, %v958
  %v1014 = vmul.f32 %v737, %v958
  %v1015 = vmul.f32 %v738, %v958
  %v1016 = vmul.f32 %v739, %v958
  %v1017 = vmul.f32 %v740, %v958
  %v1018 = vmul.f32 %v741, %v958
  %v1019 = vmul.f32 %v742, %v958
  %v1020 = vmul.f32 %v743, %v958
  %v1021 = vmul.f32 %v744, %v958
  %v1022 = vmul.f32 %v745, %v958
  %v1023 = vmul.f32 %v746, %v958
  %v1025 = vperm.slane %v547, 0
  %v1027 = vadd.f32 %v960, %v1025
  %v1028 = vadd.f32 %v961, %v1025
  %v1029 = vadd.f32 %v962, %v1025
  %v1030 = vadd.f32 %v963, %v1025
  %v1031 = vadd.f32 %v964, %v1025
  %v1032 = vadd.f32 %v965, %v1025
  %v1033 = vadd.f32 %v966, %v1025
  %v1034 = vadd.f32 %v967, %v1025
  %v1035 = vadd.f32 %v968, %v1025
  %v1036 = vadd.f32 %v969, %v1025
  %v1037 = vadd.f32 %v970, %v1025
  %v1038 = vadd.f32 %v971, %v1025
  %v1039 = vadd.f32 %v972, %v1025
  %v1040 = vadd.f32 %v973, %v1025
  %v1041 = vadd.f32 %v974, %v1025
  %v1042 = vadd.f32 %v975, %v1025
  %v1043 = vadd.f32 %v976, %v1025
  %v1044 = vadd.f32 %v977, %v1025
  %v1045 = vadd.f32 %v978, %v1025
  %v1046 = vadd.f32 %v979, %v1025
  %v1047 = vadd.f32 %v980, %v1025
  %v1048 = vadd.f32 %v981, %v1025
  %v1049 = vadd.f32 %v982, %v1025
  %v1050 = vadd.f32 %v983, %v1025
  %v1051 = vadd.f32 %v984, %v1025
  %v1052 = vadd.f32 %v985, %v1025
  %v1053 = vadd.f32 %v986, %v1025
  %v1054 = vadd.f32 %v987, %v1025
  %v1055 = vadd.f32 %v988, %v1025
  %v1056 = vadd.f32 %v989, %v1025
  %v1057 = vadd.f32 %v990, %v1025
  %v1058 = vadd.f32 %v991, %v1025
  %v1059 = vadd.f32 %v992, %v1025
  %v1060 = vadd.f32 %v993, %v1025
  %v1061 = vadd.f32 %v994, %v1025
  %v1062 = vadd.f32 %v995, %v1025
  %v1063 = vadd.f32 %v996, %v1025
  %v1064 = vadd.f32 %v997, %v1025
  %v1065 = vadd.f32 %v998, %v1025
  %v1066 = vadd.f32 %v999, %v1025
  %v1067 = vadd.f32 %v1000, %v1025
  %v1068 = vadd.f32 %v1001, %v1025
  %v1069 = vadd.f32 %v1002, %v1025
  %v1070 = vadd.f32 %v1003, %v1025
  %v1071 = vadd.f32 %v1004, %v1025
  %v1072 = vadd.f32 %v1005, %v1025
  %v1073 = vadd.f32 %v1006, %v1025
  %v1074 = vadd.f32 %v1007, %v1025
  %v1075 = vadd.f32 %v1008, %v1025
  %v1076 = vadd.f32 %v1009, %v1025
  %v1077 = vadd.f32 %v1010, %v1025
  %v1078 = vadd.f32 %v1011, %v1025
  %v1079 = vadd.f32 %v1012, %v1025
  %v1080 = vadd.f32 %v1013, %v1025
  %v1081 = vadd.f32 %v1014, %v1025
  %v1082 = vadd.f32 %v1015, %v1025
  %v1083 = vadd.f32 %v1016, %v1025
  %v1084 = vadd.f32 %v1017, %v1025
  %v1085 = vadd.f32 %v1018, %v1025
  %v1086 = vadd.f32 %v1019, %v1025
  %v1087 = vadd.f32 %v1020, %v1025
  %v1088 = vadd.f32 %v1021, %v1025
  %v1089 = vadd.f32 %v1022, %v1025
  %v1090 = vadd.f32 %v1023, %v1025
  %v1091 = vmax.f32 %v1027, 0.0
  %v1092 = vmax.f32 %v1028, 0.0
  %v1093 = vmax.f32 %v1029, 0.0
  %v1094 = vmax.f32 %v1030, 0.0
  %v1095 = vmax.f32 %v1031, 0.0
  %v1096 = vmax.f32 %v1032, 0.0
  %v1097 = vmax.f32 %v1033, 0.0
  %v1098 = vmax.f32 %v1034, 0.0
  %v1099 = vmax.f32 %v1035, 0.0
  %v1100 = vmax.f32 %v1036, 0.0
  %v1101 = vmax.f32 %v1037, 0.0
  %v1102 = vmax.f32 %v1038, 0.0
  %v1103 = vmax.f32 %v1039, 0.0
  %v1104 = vmax.f32 %v1040, 0.0
  %v1105 = vmax.f32 %v1041, 0.0
  %v1106 = vmax.f32 %v1042, 0.0
  %v1107 = vmax.f32 %v1043, 0.0
  %v1108 = vmax.f32 %v1044, 0.0
  %v1109 = vmax.f32 %v1045, 0.0
  %v1110 = vmax.f32 %v1046, 0.0
  %v1111 = vmax.f32 %v1047, 0.0
  %v1112 = vmax.f32 %v1048, 0.0
  %v1113 = vmax.f32 %v1049, 0.0
  %v1114 = vmax.f32 %v1050, 0.0
  %v1115 = vmax.f32 %v1051, 0.0
  %v1116 = vmax.f32 %v1052, 0.0
  %v1117 = vmax.f32 %v1053, 0.0
  %v1118 = vmax.f32 %v1054, 0.0
  %v1119 = vmax.f32 %v1055, 0.0
  %v1120 = vmax.f32 %v1056, 0.0
  %v1121 = vmax.f32 %v1057, 0.0
  %v1122 = vmax.f32 %v1058, 0.0
  %v1123 = vmax.f32 %v1059, 0.0
  %v1124 = vmax.f32 %v1060, 0.0
  %v1125 = vmax.f32 %v1061, 0.0
  %v1126 = vmax.f32 %v1062, 0.0
  %v1127 = vmax.f32 %v1063, 0.0
  %v1128 = vmax.f32 %v1064, 0.0
  %v1129 = vmax.f32 %v1065, 0.0
  %v1130 = vmax.f32 %v1066, 0.0
  %v1131 = vmax.f32 %v1067, 0.0
  %v1132 = vmax.f32 %v1068, 0.0
  %v1133 = vmax.f32 %v1069, 0.0
  %v1134 = vmax.f32 %v1070, 0.0
  %v1135 = vmax.f32 %v1071, 0.0
  %v1136 = vmax.f32 %v1072, 0.0
  %v1137 = vmax.f32 %v1073, 0.0
  %v1138 = vmax.f32 %v1074, 0.0
  %v1139 = vmax.f32 %v1075, 0.0
  %v1140 = vmax.f32 %v1076, 0.0
  %v1141 = vmax.f32 %v1077, 0.0
  %v1142 = vmax.f32 %v1078, 0.0
  %v1143 = vmax.f32 %v1079, 0.0
  %v1144 = vmax.f32 %v1080, 0.0
  %v1145 = vmax.f32 %v1081, 0.0
  %v1146 = vmax.f32 %v1082, 0.0
  %v1147 = vmax.f32 %v1083, 0.0
  %v1148 = vmax.f32 %v1084, 0.0
  %v1149 = vmax.f32 %v1085, 0.0
  %v1150 = vmax.f32 %v1086, 0.0
  %v1151 = vmax.f32 %v1087, 0.0
  %v1152 = vmax.f32 %v1088, 0.0
  %v1153 = vmax.f32 %v1089, 0.0
  %v1154 = vmax.f32 %v1090, 0.0
  %v1155 = vrot.slane %v1091, 7
  %v1156 = vrot.slane %v1123, 7
  %v1157 = vrot.slane %v1092, 7
  %v1158 = vrot.slane %v1124, 7
  %v1159 = vrot.slane %v1093, 7
  %v1160 = vrot.slane %v1125, 7
  %v1161 = vrot.slane %v1094, 7
  %v1162 = vrot.slane %v1126, 7
  %v1163 = vrot.slane %v1095, 7
  %v1164 = vrot.slane %v1127, 7
  %v1165 = vrot.slane %v1096, 7
  %v1166 = vrot.slane %v1128, 7
  %v1167 = vrot.slane %v1097, 7
  %v1168 = vrot.slane %v1129, 7
  %v1169 = vrot.slane %v1098, 7
  %v1170 = vrot.slane %v1130, 7
  %v1171 = vrot.slane %v1099, 7
  %v1172 = vrot.slane %v1131, 7
  %v1173 = vrot.slane %v1100, 7
  %v1174 = vrot.slane %v1132, 7
  %v1175 = vrot.slane %v1101, 7
  %v1176 = vrot.slane %v1133, 7
  %v1177 = vrot.slane %v1102, 7
  %v1178 = vrot.slane %v1134, 7
  %v1179 = vrot.slane %v1103, 7
  %v1180 = vrot.slane %v1135, 7
  %v1181 = vrot.slane %v1104, 7
  %v1182 = vrot.slane %v1136, 7
  %v1183 = vrot.slane %v1105, 7
  %v1184 = vrot.slane %v1137, 7
  %v1185 = vrot.slane %v1106, 7
  %v1186 = vrot.slane %v1138, 7
  %v1187 = vrot.slane %v1107, 7
  %v1188 = vrot.slane %v1139, 7
  %v1189 = vrot.slane %v1108, 7
  %v1190 = vrot.slane %v1140, 7
  %v1191 = vrot.slane %v1109, 7
  %v1192 = vrot.slane %v1141, 7
  %v1193 = vrot.slane %v1110, 7
  %v1194 = vrot.slane %v1142, 7
  %v1195 = vrot.slane %v1111, 7
  %v1196 = vrot.slane %v1143, 7
  %v1197 = vrot.slane %v1112, 7
  %v1198 = vrot.slane %v1144, 7
  %v1199 = vrot.slane %v1113, 7
  %v1200 = vrot.slane %v1145, 7
  %v1201 = vrot.slane %v1114, 7
  %v1202 = vrot.slane %v1146, 7
  %v1203 = vrot.slane %v1115, 7
  %v1204 = vrot.slane %v1147, 7
  %v1205 = vrot.slane %v1116, 7
  %v1206 = vrot.slane %v1148, 7
  %v1207 = vrot.slane %v1117, 7
  %v1208 = vrot.slane %v1149, 7
  %v1209 = vrot.slane %v1118, 7
  %v1210 = vrot.slane %v1150, 7
  %v1211 = vrot.slane %v1119, 7
  %v1212 = vrot.slane %v1151, 7
  %v1213 = vrot.slane %v1120, 7
  %v1214 = vrot.slane %v1152, 7
  %v1215 = vrot.slane %v1121, 7
  %v1216 = vrot.slane %v1153, 7
  %v1217 = vrot.slane %v1122, 7
  %v1218 = vrot.slane %v1154, 7
  %v1219 = vlaneseq
  %v1220 = vshrl.u32 %v1219, 7
  %vm1221 = vcmp.lt.s32.totalorder %v1220, 1
  %v1222 = vsel %vm1221, %v1215, %v1217
  %v1223 = vsel %vm1221, %v1216, %v1218
  %v1224 = vsel %vm1221, %v1213, %v1215
  %v1225 = vsel %vm1221, %v1214, %v1216
  %v1226 = vsel %vm1221, %v1211, %v1213
  %v1227 = vsel %vm1221, %v1212, %v1214
  %v1228 = vsel %vm1221, %v1209, %v1211
  %v1229 = vsel %vm1221, %v1210, %v1212
  %v1230 = vsel %vm1221, %v1207, %v1209
  %v1231 = vsel %vm1221, %v1208, %v1210
  %v1232 = vsel %vm1221, %v1205, %v1207
  %v1233 = vsel %vm1221, %v1206, %v1208
  %v1234 = vsel %vm1221, %v1203, %v1205
  %v1235 = vsel %vm1221, %v1204, %v1206
  %v1236 = vsel %vm1221, %v1201, %v1203
  %v1237 = vsel %vm1221, %v1202, %v1204
  %v1238 = vsel %vm1221, %v1199, %v1201
  %v1239 = vsel %vm1221, %v1200, %v1202
  %v1240 = vsel %vm1221, %v1197, %v1199
  %v1241 = vsel %vm1221, %v1198, %v1200
  %v1242 = vsel %vm1221, %v1195, %v1197
  %v1243 = vsel %vm1221, %v1196, %v1198
  %v1244 = vsel %vm1221, %v1193, %v1195
  %v1245 = vsel %vm1221, %v1194, %v1196
  %v1246 = vsel %vm1221, %v1191, %v1193
  %v1247 = vsel %vm1221, %v1192, %v1194
  %v1248 = vsel %vm1221, %v1189, %v1191
  %v1249 = vsel %vm1221, %v1190, %v1192
  %v1250 = vsel %vm1221, %v1187, %v1189
  %v1251 = vsel %vm1221, %v1188, %v1190
  %v1252 = vsel %vm1221, %v1185, %v1187
  %v1253 = vsel %vm1221, %v1186, %v1188
  %v1254 = vsel %vm1221, %v1183, %v1185
  %v1255 = vsel %vm1221, %v1184, %v1186
  %v1256 = vsel %vm1221, %v1181, %v1183
  %v1257 = vsel %vm1221, %v1182, %v1184
  %v1258 = vsel %vm1221, %v1179, %v1181
  %v1259 = vsel %vm1221, %v1180, %v1182
  %v1260 = vsel %vm1221, %v1177, %v1179
  %v1261 = vsel %vm1221, %v1178, %v1180
  %v1262 = vsel %vm1221, %v1175, %v1177
  %v1263 = vsel %vm1221, %v1176, %v1178
  %v1264 = vsel %vm1221, %v1173, %v1175
  %v1265 = vsel %vm1221, %v1174, %v1176
  %v1266 = vsel %vm1221, %v1171, %v1173
  %v1267 = vsel %vm1221, %v1172, %v1174
  %v1268 = vsel %vm1221, %v1169, %v1171
  %v1269 = vsel %vm1221, %v1170, %v1172
  %v1270 = vsel %vm1221, %v1167, %v1169
  %v1271 = vsel %vm1221, %v1168, %v1170
  %v1272 = vsel %vm1221, %v1165, %v1167
  %v1273 = vsel %vm1221, %v1166, %v1168
  %v1274 = vsel %vm1221, %v1163, %v1165
  %v1275 = vsel %vm1221, %v1164, %v1166
  %v1276 = vsel %vm1221, %v1161, %v1163
  %v1277 = vsel %vm1221, %v1162, %v1164
  %v1278 = vsel %vm1221, %v1159, %v1161
  %v1279 = vsel %vm1221, %v1160, %v1162
  %v1280 = vsel %vm1221, %v1157, %v1159
  %v1281 = vsel %vm1221, %v1158, %v1160
  %v1282 = vsel %vm1221, %v1155, %v1157
  %v1283 = vsel %vm1221, %v1156, %v1158
  %v1284 = vsel %vm1221, %v1217, %v1155
  %v1285 = vsel %vm1221, %v1218, %v1156
  %v1286 = vld [vmem:[%s4] sm:$0xff]
  %v1287 = vld [vmem:[%s4 + $0x8] sm:$0xff]
  %v1288 = vld [vmem:[%s4 + $0x10] sm:$0xff]
  %v1289 = vld [vmem:[%s4 + $0x18] sm:$0xff]
  %v1290 = vld [vmem:[%s4 + $0x20] sm:$0xff]
  %v1291 = vld [vmem:[%s4 + $0x28] sm:$0xff]
  %v1292 = vld [vmem:[%s4 + $0x30] sm:$0xff]
  %v1293 = vld [vmem:[%s4 + $0x38] sm:$0xff]
  %v1294 = vld [vmem:[%s4 + $0x40] sm:$0xff]
  %v1295 = vld [vmem:[%s4 + $0x48] sm:$0xff]
  %v1296 = vld [vmem:[%s4 + $0x50] sm:$0xff]
  %v1297 = vld [vmem:[%s4 + $0x58] sm:$0xff]
  %v1298 = vld [vmem:[%s4 + $0x60] sm:$0xff]
  %v1299 = vld [vmem:[%s4 + $0x68] sm:$0xff]
  %v1300 = vld [vmem:[%s4 + $0x70] sm:$0xff]
  %v1301 = vld [vmem:[%s4 + $0x78] sm:$0xff]
  %v1302 = vld [vmem:[%s4 + $0x80] sm:$0xff]
  %v1303 = vld [vmem:[%s4 + $0x88] sm:$0xff]
  %v1304 = vld [vmem:[%s4 + $0x90] sm:$0xff]
  %v1305 = vld [vmem:[%s4 + $0x98] sm:$0xff]
  %v1306 = vld [vmem:[%s4 + $0xa0] sm:$0xff]
  %v1307 = vld [vmem:[%s4 + $0xa8] sm:$0xff]
  %v1308 = vld [vmem:[%s4 + $0xb0] sm:$0xff]
  %v1309 = vld [vmem:[%s4 + $0xb8] sm:$0xff]
  %v1310 = vld [vmem:[%s4 + $0xc0] sm:$0xff]
  %v1311 = vld [vmem:[%s4 + $0xc8] sm:$0xff]
  %v1312 = vld [vmem:[%s4 + $0xd0] sm:$0xff]
  %v1313 = vld [vmem:[%s4 + $0xd8] sm:$0xff]
  %v1314 = vld [vmem:[%s4 + $0xe0] sm:$0xff]
  %v1315 = vld [vmem:[%s4 + $0xe8] sm:$0xff]
  %v1316 = vld [vmem:[%s4 + $0xf0] sm:$0xff]
  %v1317 = vld [vmem:[%s4 + $0xf8] sm:$0xff]
  %v1318 = vmul.f32 %v1224, %v1286
  %v1319 = vmul.f32 %v1222, %v1287
  %v1320 = vmul.f32 %v1284, %v1288
  %v1321 = vmul.f32 %v1282, %v1289
  %v1322 = vmul.f32 %v1280, %v1290
  %v1323 = vmul.f32 %v1278, %v1291
  %v1324 = vmul.f32 %v1276, %v1292
  %v1325 = vmul.f32 %v1274, %v1293
  %v1326 = vmul.f32 %v1272, %v1294
  %v1327 = vmul.f32 %v1270, %v1295
  %v1328 = vmul.f32 %v1268, %v1296
  %v1329 = vmul.f32 %v1266, %v1297
  %v1330 = vmul.f32 %v1264, %v1298
  %v1331 = vmul.f32 %v1262, %v1299
  %v1332 = vmul.f32 %v1260, %v1300
  %v1333 = vmul.f32 %v1258, %v1301
  %v1334 = vmul.f32 %v1256, %v1302
  %v1335 = vmul.f32 %v1254, %v1303
  %v1336 = vmul.f32 %v1252, %v1304
  %v1337 = vmul.f32 %v1250, %v1305
  %v1338 = vmul.f32 %v1248, %v1306
  %v1339 = vmul.f32 %v1246, %v1307
  %v1340 = vmul.f32 %v1244, %v1308
  %v1341 = vmul.f32 %v1242, %v1309
  %v1342 = vmul.f32 %v1240, %v1310
  %v1343 = vmul.f32 %v1238, %v1311
  %v1344 = vmul.f32 %v1236, %v1312
  %v1345 = vmul.f32 %v1234, %v1313
  %v1346 = vmul.f32 %v1232, %v1314
  %v1347 = vmul.f32 %v1230, %v1315
  %v1348 = vmul.f32 %v1228, %v1316
  %v1349 = vmul.f32 %v1226, %v1317
  %v1350 = vmul.f32 %v1225, %v1286
  %v1351 = vmul.f32 %v1223, %v1287
  %v1352 = vmul.f32 %v1285, %v1288
  %v1353 = vmul.f32 %v1283, %v1289
  %v1354 = vmul.f32 %v1281, %v1290
  %v1355 = vmul.f32 %v1279, %v1291
  %v1356 = vmul.f32 %v1277, %v1292
  %v1357 = vmul.f32 %v1275, %v1293
  %v1358 = vmul.f32 %v1273, %v1294
  %v1359 = vmul.f32 %v1271, %v1295
  %v1360 = vmul.f32 %v1269, %v1296
  %v1361 = vmul.f32 %v1267, %v1297
  %v1362 = vmul.f32 %v1265, %v1298
  %v1363 = vmul.f32 %v1263, %v1299
  %v1364 = vmul.f32 %v1261, %v1300
  %v1365 = vmul.f32 %v1259, %v1301
  %v1366 = vmul.f32 %v1257, %v1302
  %v1367 = vmul.f32 %v1255, %v1303
  %v1368 = vmul.f32 %v1253, %v1304
  %v1369 = vmul.f32 %v1251, %v1305
  %v1370 = vmul.f32 %v1249, %v1306
  %v1371 = vmul.f32 %v1247, %v1307
  %v1372 = vmul.f32 %v1245, %v1308
  %v1373 = vmul.f32 %v1243, %v1309
  %v1374 = vmul.f32 %v1241, %v1310
  %v1375 = vmul.f32 %v1239, %v1311
  %v1376 = vmul.f32 %v1237, %v1312
  %v1377 = vmul.f32 %v1235, %v1313
  %v1378 = vmul.f32 %v1233, %v1314
  %v1379 = vmul.f32 %v1231, %v1315
  %v1380 = vmul.f32 %v1229, %v1316
  %v1381 = vmul.f32 %v1227, %v1317
  %v1382 = vadd.f32 %v1318, 0.0
  %v1383 = vadd.f32 %v1319, 0.0
  %v1384 = vadd.f32 %v1320, 0.0
  %v1385 = vadd.f32 %v1321, 0.0
  %v1386 = vadd.f32 %v1322, 0.0
  %v1387 = vadd.f32 %v1323, 0.0
  %v1388 = vadd.f32 %v1324, 0.0
  %v1389 = vadd.f32 %v1325, 0.0
  %v1390 = vadd.f32 %v1326, 0.0
  %v1391 = vadd.f32 %v1327, 0.0
  %v1392 = vadd.f32 %v1328, 0.0
  %v1393 = vadd.f32 %v1329, 0.0
  %v1394 = vadd.f32 %v1330, 0.0
  %v1395 = vadd.f32 %v1331, 0.0
  %v1396 = vadd.f32 %v1332, 0.0
  %v1397 = vadd.f32 %v1333, 0.0
  %v1398 = vadd.f32 %v1334, 0.0
  %v1399 = vadd.f32 %v1335, 0.0
  %v1400 = vadd.f32 %v1336, 0.0
  %v1401 = vadd.f32 %v1337, 0.0
  %v1402 = vadd.f32 %v1338, 0.0
  %v1403 = vadd.f32 %v1339, 0.0
  %v1404 = vadd.f32 %v1340, 0.0
  %v1405 = vadd.f32 %v1341, 0.0
  %v1406 = vadd.f32 %v1342, 0.0
  %v1407 = vadd.f32 %v1343, 0.0
  %v1408 = vadd.f32 %v1344, 0.0
  %v1409 = vadd.f32 %v1345, 0.0
  %v1410 = vadd.f32 %v1346, 0.0
  %v1411 = vadd.f32 %v1347, 0.0
  %v1412 = vadd.f32 %v1348, 0.0
  %v1413 = vadd.f32 %v1349, 0.0
  %v1414 = vadd.f32 %v1350, 0.0
  %v1415 = vadd.f32 %v1351, 0.0
  %v1416 = vadd.f32 %v1352, 0.0
  %v1417 = vadd.f32 %v1353, 0.0
  %v1418 = vadd.f32 %v1354, 0.0
  %v1419 = vadd.f32 %v1355, 0.0
  %v1420 = vadd.f32 %v1356, 0.0
  %v1421 = vadd.f32 %v1357, 0.0
  %v1422 = vadd.f32 %v1358, 0.0
  %v1423 = vadd.f32 %v1359, 0.0
  %v1424 = vadd.f32 %v1360, 0.0
  %v1425 = vadd.f32 %v1361, 0.0
  %v1426 = vadd.f32 %v1362, 0.0
  %v1427 = vadd.f32 %v1363, 0.0
  %v1428 = vadd.f32 %v1364, 0.0
  %v1429 = vadd.f32 %v1365, 0.0
  %v1430 = vadd.f32 %v1366, 0.0
  %v1431 = vadd.f32 %v1367, 0.0
  %v1432 = vadd.f32 %v1368, 0.0
  %v1433 = vadd.f32 %v1369, 0.0
  %v1434 = vadd.f32 %v1370, 0.0
  %v1435 = vadd.f32 %v1371, 0.0
  %v1436 = vadd.f32 %v1372, 0.0
  %v1437 = vadd.f32 %v1373, 0.0
  %v1438 = vadd.f32 %v1374, 0.0
  %v1439 = vadd.f32 %v1375, 0.0
  %v1440 = vadd.f32 %v1376, 0.0
  %v1441 = vadd.f32 %v1377, 0.0
  %v1442 = vadd.f32 %v1378, 0.0
  %v1443 = vadd.f32 %v1379, 0.0
  %v1444 = vadd.f32 %v1380, 0.0
  %v1445 = vadd.f32 %v1381, 0.0
  %s1446 = scalar_lea.vmem %s4, 256
  %v1447 = vld [vmem:[%s1446] sm:$0xff]
  %v1448 = vld [vmem:[%s1446 + $0x8] sm:$0xff]
  %v1449 = vld [vmem:[%s1446 + $0x10] sm:$0xff]
  %v1450 = vld [vmem:[%s1446 + $0x18] sm:$0xff]
  %v1451 = vld [vmem:[%s1446 + $0x20] sm:$0xff]
  %v1452 = vld [vmem:[%s1446 + $0x28] sm:$0xff]
  %v1453 = vld [vmem:[%s1446 + $0x30] sm:$0xff]
  %v1454 = vld [vmem:[%s1446 + $0x38] sm:$0xff]
  %v1455 = vld [vmem:[%s1446 + $0x40] sm:$0xff]
  %v1456 = vld [vmem:[%s1446 + $0x48] sm:$0xff]
  %v1457 = vld [vmem:[%s1446 + $0x50] sm:$0xff]
  %v1458 = vld [vmem:[%s1446 + $0x58] sm:$0xff]
  %v1459 = vld [vmem:[%s1446 + $0x60] sm:$0xff]
  %v1460 = vld [vmem:[%s1446 + $0x68] sm:$0xff]
  %v1461 = vld [vmem:[%s1446 + $0x70] sm:$0xff]
  %v1462 = vld [vmem:[%s1446 + $0x78] sm:$0xff]
  %v1463 = vld [vmem:[%s1446 + $0x80] sm:$0xff]
  %v1464 = vld [vmem:[%s1446 + $0x88] sm:$0xff]
  %v1465 = vld [vmem:[%s1446 + $0x90] sm:$0xff]
  %v1466 = vld [vmem:[%s1446 + $0x98] sm:$0xff]
  %v1467 = vld [vmem:[%s1446 + $0xa0] sm:$0xff]
  %v1468 = vld [vmem:[%s1446 + $0xa8] sm:$0xff]
  %v1469 = vld [vmem:[%s1446 + $0xb0] sm:$0xff]
  %v1470 = vld [vmem:[%s1446 + $0xb8] sm:$0xff]
  %v1471 = vld [vmem:[%s1446 + $0xc0] sm:$0xff]
  %v1472 = vld [vmem:[%s1446 + $0xc8] sm:$0xff]
  %v1473 = vld [vmem:[%s1446 + $0xd0] sm:$0xff]
  %v1474 = vld [vmem:[%s1446 + $0xd8] sm:$0xff]
  %v1475 = vld [vmem:[%s1446 + $0xe0] sm:$0xff]
  %v1476 = vld [vmem:[%s1446 + $0xe8] sm:$0xff]
  %v1477 = vld [vmem:[%s1446 + $0xf0] sm:$0xff]
  %v1478 = vld [vmem:[%s1446 + $0xf8] sm:$0xff]
  %v1479 = vmul.f32 %v1121, %v1447
  %v1480 = vmul.f32 %v1122, %v1448
  %v1481 = vmul.f32 %v1091, %v1449
  %v1482 = vmul.f32 %v1092, %v1450
  %v1483 = vmul.f32 %v1093, %v1451
  %v1484 = vmul.f32 %v1094, %v1452
  %v1485 = vmul.f32 %v1095, %v1453
  %v1486 = vmul.f32 %v1096, %v1454
  %v1487 = vmul.f32 %v1097, %v1455
  %v1488 = vmul.f32 %v1098, %v1456
  %v1489 = vmul.f32 %v1099, %v1457
  %v1490 = vmul.f32 %v1100, %v1458
  %v1491 = vmul.f32 %v1101, %v1459
  %v1492 = vmul.f32 %v1102, %v1460
  %v1493 = vmul.f32 %v1103, %v1461
  %v1494 = vmul.f32 %v1104, %v1462
  %v1495 = vmul.f32 %v1105, %v1463
  %v1496 = vmul.f32 %v1106, %v1464
  %v1497 = vmul.f32 %v1107, %v1465
  %v1498 = vmul.f32 %v1108, %v1466
  %v1499 = vmul.f32 %v1109, %v1467
  %v1500 = vmul.f32 %v1110, %v1468
  %v1501 = vmul.f32 %v1111, %v1469
  %v1502 = vmul.f32 %v1112, %v1470
  %v1503 = vmul.f32 %v1113, %v1471
  %v1504 = vmul.f32 %v1114, %v1472
  %v1505 = vmul.f32 %v1115, %v1473
  %v1506 = vmul.f32 %v1116, %v1474
  %v1507 = vmul.f32 %v1117, %v1475
  %v1508 = vmul.f32 %v1118, %v1476
  %v1509 = vmul.f32 %v1119, %v1477
  %v1510 = vmul.f32 %v1120, %v1478
  %v1511 = vmul.f32 %v1153, %v1447
  %v1512 = vmul.f32 %v1154, %v1448
  %v1513 = vmul.f32 %v1123, %v1449
  %v1514 = vmul.f32 %v1124, %v1450
  %v1515 = vmul.f32 %v1125, %v1451
  %v1516 = vmul.f32 %v1126, %v1452
  %v1517 = vmul.f32 %v1127, %v1453
  %v1518 = vmul.f32 %v1128, %v1454
  %v1519 = vmul.f32 %v1129, %v1455
  %v1520 = vmul.f32 %v1130, %v1456
  %v1521 = vmul.f32 %v1131, %v1457
  %v1522 = vmul.f32 %v1132, %v1458
  %v1523 = vmul.f32 %v1133, %v1459
  %v1524 = vmul.f32 %v1134, %v1460
  %v1525 = vmul.f32 %v1135, %v1461
  %v1526 = vmul.f32 %v1136, %v1462
  %v1527 = vmul.f32 %v1137, %v1463
  %v1528 = vmul.f32 %v1138, %v1464
  %v1529 = vmul.f32 %v1139, %v1465
  %v1530 = vmul.f32 %v1140, %v1466
  %v1531 = vmul.f32 %v1141, %v1467
  %v1532 = vmul.f32 %v1142, %v1468
  %v1533 = vmul.f32 %v1143, %v1469
  %v1534 = vmul.f32 %v1144, %v1470
  %v1535 = vmul.f32 %v1145, %v1471
  %v1536 = vmul.f32 %v1146, %v1472
  %v1537 = vmul.f32 %v1147, %v1473
  %v1538 = vmul.f32 %v1148, %v1474
  %v1539 = vmul.f32 %v1149, %v1475
  %v1540 = vmul.f32 %v1150, %v1476
  %v1541 = vmul.f32 %v1151, %v1477
  %v1542 = vmul.f32 %v1152, %v1478
  %v1543 = vadd.f32 %v1382, %v1479
  %v1544 = vadd.f32 %v1383, %v1480
  %v1545 = vadd.f32 %v1384, %v1481
  %v1546 = vadd.f32 %v1385, %v1482
  %v1547 = vadd.f32 %v1386, %v1483
  %v1548 = vadd.f32 %v1387, %v1484
  %v1549 = vadd.f32 %v1388, %v1485
  %v1550 = vadd.f32 %v1389, %v1486
  %v1551 = vadd.f32 %v1390, %v1487
  %v1552 = vadd.f32 %v1391, %v1488
  %v1553 = vadd.f32 %v1392, %v1489
  %v1554 = vadd.f32 %v1393, %v1490
  %v1555 = vadd.f32 %v1394, %v1491
  %v1556 = vadd.f32 %v1395, %v1492
  %v1557 = vadd.f32 %v1396, %v1493
  %v1558 = vadd.f32 %v1397, %v1494
  %v1559 = vadd.f32 %v1398, %v1495
  %v1560 = vadd.f32 %v1399, %v1496
  %v1561 = vadd.f32 %v1400, %v1497
  %v1562 = vadd.f32 %v1401, %v1498
  %v1563 = vadd.f32 %v1402, %v1499
  %v1564 = vadd.f32 %v1403, %v1500
  %v1565 = vadd.f32 %v1404, %v1501
  %v1566 = vadd.f32 %v1405, %v1502
  %v1567 = vadd.f32 %v1406, %v1503
  %v1568 = vadd.f32 %v1407, %v1504
  %v1569 = vadd.f32 %v1408, %v1505
  %v1570 = vadd.f32 %v1409, %v1506
  %v1571 = vadd.f32 %v1410, %v1507
  %v1572 = vadd.f32 %v1411, %v1508
  %v1573 = vadd.f32 %v1412, %v1509
  %v1574 = vadd.f32 %v1413, %v1510
  %v1575 = vadd.f32 %v1414, %v1511
  %v1576 = vadd.f32 %v1415, %v1512
  %v1577 = vadd.f32 %v1416, %v1513
  %v1578 = vadd.f32 %v1417, %v1514
  %v1579 = vadd.f32 %v1418, %v1515
  %v1580 = vadd.f32 %v1419, %v1516
  %v1581 = vadd.f32 %v1420, %v1517
  %v1582 = vadd.f32 %v1421, %v1518
  %v1583 = vadd.f32 %v1422, %v1519
  %v1584 = vadd.f32 %v1423, %v1520
  %v1585 = vadd.f32 %v1424, %v1521
  %v1586 = vadd.f32 %v1425, %v1522
  %v1587 = vadd.f32 %v1426, %v1523
  %v1588 = vadd.f32 %v1427, %v1524
  %v1589 = vadd.f32 %v1428, %v1525
  %v1590 = vadd.f32 %v1429, %v1526
  %v1591 = vadd.f32 %v1430, %v1527
  %v1592 = vadd.f32 %v1431, %v1528
  %v1593 = vadd.f32 %v1432, %v1529
  %v1594 = vadd.f32 %v1433, %v1530
  %v1595 = vadd.f32 %v1434, %v1531
  %v1596 = vadd.f32 %v1435, %v1532
  %v1597 = vadd.f32 %v1436, %v1533
  %v1598 = vadd.f32 %v1437, %v1534
  %v1599 = vadd.f32 %v1438, %v1535
  %v1600 = vadd.f32 %v1439, %v1536
  %v1601 = vadd.f32 %v1440, %v1537
  %v1602 = vadd.f32 %v1441, %v1538
  %v1603 = vadd.f32 %v1442, %v1539
  %v1604 = vadd.f32 %v1443, %v1540
  %v1605 = vadd.f32 %v1444, %v1541
  %v1606 = vadd.f32 %v1445, %v1542
  %v1607 = vrot.slane %v1091, 1
  %v1608 = vrot.slane %v1123, 1
  %v1609 = vrot.slane %v1092, 1
  %v1610 = vrot.slane %v1124, 1
  %v1611 = vrot.slane %v1093, 1
  %v1612 = vrot.slane %v1125, 1
  %v1613 = vrot.slane %v1094, 1
  %v1614 = vrot.slane %v1126, 1
  %v1615 = vrot.slane %v1095, 1
  %v1616 = vrot.slane %v1127, 1
  %v1617 = vrot.slane %v1096, 1
  %v1618 = vrot.slane %v1128, 1
  %v1619 = vrot.slane %v1097, 1
  %v1620 = vrot.slane %v1129, 1
  %v1621 = vrot.slane %v1098, 1
  %v1622 = vrot.slane %v1130, 1
  %v1623 = vrot.slane %v1099, 1
  %v1624 = vrot.slane %v1131, 1
  %v1625 = vrot.slane %v1100, 1
  %v1626 = vrot.slane %v1132, 1
  %v1627 = vrot.slane %v1101, 1
  %v1628 = vrot.slane %v1133, 1
  %v1629 = vrot.slane %v1102, 1
  %v1630 = vrot.slane %v1134, 1
  %v1631 = vrot.slane %v1103, 1
  %v1632 = vrot.slane %v1135, 1
  %v1633 = vrot.slane %v1104, 1
  %v1634 = vrot.slane %v1136, 1
  %v1635 = vrot.slane %v1105, 1
  %v1636 = vrot.slane %v1137, 1
  %v1637 = vrot.slane %v1106, 1
  %v1638 = vrot.slane %v1138, 1
  %v1639 = vrot.slane %v1107, 1
  %v1640 = vrot.slane %v1139, 1
  %v1641 = vrot.slane %v1108, 1
  %v1642 = vrot.slane %v1140, 1
  %v1643 = vrot.slane %v1109, 1
  %v1644 = vrot.slane %v1141, 1
  %v1645 = vrot.slane %v1110, 1
  %v1646 = vrot.slane %v1142, 1
  %v1647 = vrot.slane %v1111, 1
  %v1648 = vrot.slane %v1143, 1
  %v1649 = vrot.slane %v1112, 1
  %v1650 = vrot.slane %v1144, 1
  %v1651 = vrot.slane %v1113, 1
  %v1652 = vrot.slane %v1145, 1
  %v1653 = vrot.slane %v1114, 1
  %v1654 = vrot.slane %v1146, 1
  %v1655 = vrot.slane %v1115, 1
  %v1656 = vrot.slane %v1147, 1
  %v1657 = vrot.slane %v1116, 1
  %v1658 = vrot.slane %v1148, 1
  %v1659 = vrot.slane %v1117, 1
  %v1660 = vrot.slane %v1149, 1
  %v1661 = vrot.slane %v1118, 1
  %v1662 = vrot.slane %v1150, 1
  %v1663 = vrot.slane %v1119, 1
  %v1664 = vrot.slane %v1151, 1
  %v1665 = vrot.slane %v1120, 1
  %v1666 = vrot.slane %v1152, 1
  %v1667 = vrot.slane %v1121, 1
  %v1668 = vrot.slane %v1153, 1
  %v1669 = vrot.slane %v1122, 1
  %v1670 = vrot.slane %v1154, 1
  %vm1671 = vcmp.lt.s32.totalorder %v1220, 7
  %v1672 = vsel %vm1671, %v1667, %v1669
  %v1673 = vsel %vm1671, %v1668, %v1670
  %v1674 = vsel %vm1671, %v1665, %v1667
  %v1675 = vsel %vm1671, %v1666, %v1668
  %v1676 = vsel %vm1671, %v1663, %v1665
  %v1677 = vsel %vm1671, %v1664, %v1666
  %v1678 = vsel %vm1671, %v1661, %v1663
  %v1679 = vsel %vm1671, %v1662, %v1664
  %v1680 = vsel %vm1671, %v1659, %v1661
  %v1681 = vsel %vm1671, %v1660, %v1662
  %v1682 = vsel %vm1671, %v1657, %v1659
  %v1683 = vsel %vm1671, %v1658, %v1660
  %v1684 = vsel %vm1671, %v1655, %v1657
  %v1685 = vsel %vm1671, %v1656, %v1658
  %v1686 = vsel %vm1671, %v1653, %v1655
  %v1687 = vsel %vm1671, %v1654, %v1656
  %v1688 = vsel %vm1671, %v1651, %v1653
  %v1689 = vsel %vm1671, %v1652, %v1654
  %v1690 = vsel %vm1671, %v1649, %v1651
  %v1691 = vsel %vm1671, %v1650, %v1652
  %v1692 = vsel %vm1671, %v1647, %v1649
  %v1693 = vsel %vm1671, %v1648, %v1650
  %v1694 = vsel %vm1671, %v1645, %v1647
  %v1695 = vsel %vm1671, %v1646, %v1648
  %v1696 = vsel %vm1671, %v1643, %v1645
  %v1697 = vsel %vm1671, %v1644, %v1646
  %v1698 = vsel %vm1671, %v1641, %v1643
  %v1699 = vsel %vm1671, %v1642, %v1644
  %v1700 = vsel %vm1671, %v1639, %v1641
  %v1701 = vsel %vm1671, %v1640, %v1642
  %v1702 = vsel %vm1671, %v1637, %v1639
  %v1703 = vsel %vm1671, %v1638, %v1640
  %v1704 = vsel %vm1671, %v1635, %v1637
  %v1705 = vsel %vm1671, %v1636, %v1638
  %v1706 = vsel %vm1671, %v1633, %v1635
  %v1707 = vsel %vm1671, %v1634, %v1636
  %v1708 = vsel %vm1671, %v1631, %v1633
  %v1709 = vsel %vm1671, %v1632, %v1634
  %v1710 = vsel %vm1671, %v1629, %v1631
  %v1711 = vsel %vm1671, %v1630, %v1632
  %v1712 = vsel %vm1671, %v1627, %v1629
  %v1713 = vsel %vm1671, %v1628, %v1630
  %v1714 = vsel %vm1671, %v1625, %v1627
  %v1715 = vsel %vm1671, %v1626, %v1628
  %v1716 = vsel %vm1671, %v1623, %v1625
  %v1717 = vsel %vm1671, %v1624, %v1626
  %v1718 = vsel %vm1671, %v1621, %v1623
  %v1719 = vsel %vm1671, %v1622, %v1624
  %v1720 = vsel %vm1671, %v1619, %v1621
  %v1721 = vsel %vm1671, %v1620, %v1622
  %v1722 = vsel %vm1671, %v1617, %v1619
  %v1723 = vsel %vm1671, %v1618, %v1620
  %v1724 = vsel %vm1671, %v1615, %v1617
  %v1725 = vsel %vm1671, %v1616, %v1618
  %v1726 = vsel %vm1671, %v1613, %v1615
  %v1727 = vsel %vm1671, %v1614, %v1616
  %v1728 = vsel %vm1671, %v1611, %v1613
  %v1729 = vsel %vm1671, %v1612, %v1614
  %v1730 = vsel %vm1671, %v1609, %v1611
  %v1731 = vsel %vm1671, %v1610, %v1612
  %v1732 = vsel %vm1671, %v1607, %v1609
  %v1733 = vsel %vm1671, %v1608, %v1610
  %v1734 = vsel %vm1671, %v1669, %v1607
  %v1735 = vsel %vm1671, %v1670, %v1608
  %s1736 = scalar_lea.vmem %s4, 512
  %v1737 = vld [vmem:[%s1736] sm:$0xff]
  %v1738 = vld [vmem:[%s1736 + $0x8] sm:$0xff]
  %v1739 = vld [vmem:[%s1736 + $0x10] sm:$0xff]
  %v1740 = vld [vmem:[%s1736 + $0x18] sm:$0xff]
  %v1741 = vld [vmem:[%s1736 + $0x20] sm:$0xff]
  %v1742 = vld [vmem:[%s1736 + $0x28] sm:$0xff]
  %v1743 = vld [vmem:[%s1736 + $0x30] sm:$0xff]
  %v1744 = vld [vmem:[%s1736 + $0x38] sm:$0xff]
  %v1745 = vld [vmem:[%s1736 + $0x40] sm:$0xff]
  %v1746 = vld [vmem:[%s1736 + $0x48] sm:$0xff]
  %v1747 = vld [vmem:[%s1736 + $0x50] sm:$0xff]
  %v1748 = vld [vmem:[%s1736 + $0x58] sm:$0xff]
  %v1749 = vld [vmem:[%s1736 + $0x60] sm:$0xff]
  %v1750 = vld [vmem:[%s1736 + $0x68] sm:$0xff]
  %v1751 = vld [vmem:[%s1736 + $0x70] sm:$0xff]
  %v1752 = vld [vmem:[%s1736 + $0x78] sm:$0xff]
  %v1753 = vld [vmem:[%s1736 + $0x80] sm:$0xff]
  %v1754 = vld [vmem:[%s1736 + $0x88] sm:$0xff]
  %v1755 = vld [vmem:[%s1736 + $0x90] sm:$0xff]
  %v1756 = vld [vmem:[%s1736 + $0x98] sm:$0xff]
  %v1757 = vld [vmem:[%s1736 + $0xa0] sm:$0xff]
  %v1758 = vld [vmem:[%s1736 + $0xa8] sm:$0xff]
  %v1759 = vld [vmem:[%s1736 + $0xb0] sm:$0xff]
  %v1760 = vld [vmem:[%s1736 + $0xb8] sm:$0xff]
  %v1761 = vld [vmem:[%s1736 + $0xc0] sm:$0xff]
  %v1762 = vld [vmem:[%s1736 + $0xc8] sm:$0xff]
  %v1763 = vld [vmem:[%s1736 + $0xd0] sm:$0xff]
  %v1764 = vld [vmem:[%s1736 + $0xd8] sm:$0xff]
  %v1765 = vld [vmem:[%s1736 + $0xe0] sm:$0xff]
  %v1766 = vld [vmem:[%s1736 + $0xe8] sm:$0xff]
  %v1767 = vld [vmem:[%s1736 + $0xf0] sm:$0xff]
  %v1768 = vld [vmem:[%s1736 + $0xf8] sm:$0xff]
  %v1769 = vmul.f32 %v1672, %v1737
  %v1770 = vmul.f32 %v1734, %v1738
  %v1771 = vmul.f32 %v1732, %v1739
  %v1772 = vmul.f32 %v1730, %v1740
  %v1773 = vmul.f32 %v1728, %v1741
  %v1774 = vmul.f32 %v1726, %v1742
  %v1775 = vmul.f32 %v1724, %v1743
  %v1776 = vmul.f32 %v1722, %v1744
  %v1777 = vmul.f32 %v1720, %v1745
  %v1778 = vmul.f32 %v1718, %v1746
  %v1779 = vmul.f32 %v1716, %v1747
  %v1780 = vmul.f32 %v1714, %v1748
  %v1781 = vmul.f32 %v1712, %v1749
  %v1782 = vmul.f32 %v1710, %v1750
  %v1783 = vmul.f32 %v1708, %v1751
  %v1784 = vmul.f32 %v1706, %v1752
  %v1785 = vmul.f32 %v1704, %v1753
  %v1786 = vmul.f32 %v1702, %v1754
  %v1787 = vmul.f32 %v1700, %v1755
  %v1788 = vmul.f32 %v1698, %v1756
  %v1789 = vmul.f32 %v1696, %v1757
  %v1790 = vmul.f32 %v1694, %v1758
  %v1791 = vmul.f32 %v1692, %v1759
  %v1792 = vmul.f32 %v1690, %v1760
  %v1793 = vmul.f32 %v1688, %v1761
  %v1794 = vmul.f32 %v1686, %v1762
  %v1795 = vmul.f32 %v1684, %v1763
  %v1796 = vmul.f32 %v1682, %v1764
  %v1797 = vmul.f32 %v1680, %v1765
  %v1798 = vmul.f32 %v1678, %v1766
  %v1799 = vmul.f32 %v1676, %v1767
  %v1800 = vmul.f32 %v1674, %v1768
  %v1801 = vmul.f32 %v1673, %v1737
  %v1802 = vmul.f32 %v1735, %v1738
  %v1803 = vmul.f32 %v1733, %v1739
  %v1804 = vmul.f32 %v1731, %v1740
  %v1805 = vmul.f32 %v1729, %v1741
  %v1806 = vmul.f32 %v1727, %v1742
  %v1807 = vmul.f32 %v1725, %v1743
  %v1808 = vmul.f32 %v1723, %v1744
  %v1809 = vmul.f32 %v1721, %v1745
  %v1810 = vmul.f32 %v1719, %v1746
  %v1811 = vmul.f32 %v1717, %v1747
  %v1812 = vmul.f32 %v1715, %v1748
  %v1813 = vmul.f32 %v1713, %v1749
  %v1814 = vmul.f32 %v1711, %v1750
  %v1815 = vmul.f32 %v1709, %v1751
  %v1816 = vmul.f32 %v1707, %v1752
  %v1817 = vmul.f32 %v1705, %v1753
  %v1818 = vmul.f32 %v1703, %v1754
  %v1819 = vmul.f32 %v1701, %v1755
  %v1820 = vmul.f32 %v1699, %v1756
  %v1821 = vmul.f32 %v1697, %v1757
  %v1822 = vmul.f32 %v1695, %v1758
  %v1823 = vmul.f32 %v1693, %v1759
  %v1824 = vmul.f32 %v1691, %v1760
  %v1825 = vmul.f32 %v1689, %v1761
  %v1826 = vmul.f32 %v1687, %v1762
  %v1827 = vmul.f32 %v1685, %v1763
  %v1828 = vmul.f32 %v1683, %v1764
  %v1829 = vmul.f32 %v1681, %v1765
  %v1830 = vmul.f32 %v1679, %v1766
  %v1831 = vmul.f32 %v1677, %v1767
  %v1832 = vmul.f32 %v1675, %v1768
  %v1833 = vadd.f32 %v1543, %v1769
  %v1834 = vadd.f32 %v1544, %v1770
  %v1835 = vadd.f32 %v1545, %v1771
  %v1836 = vadd.f32 %v1546, %v1772
  %v1837 = vadd.f32 %v1547, %v1773
  %v1838 = vadd.f32 %v1548, %v1774
  %v1839 = vadd.f32 %v1549, %v1775
  %v1840 = vadd.f32 %v1550, %v1776
  %v1841 = vadd.f32 %v1551, %v1777
  %v1842 = vadd.f32 %v1552, %v1778
  %v1843 = vadd.f32 %v1553, %v1779
  %v1844 = vadd.f32 %v1554, %v1780
  %v1845 = vadd.f32 %v1555, %v1781
  %v1846 = vadd.f32 %v1556, %v1782
  %v1847 = vadd.f32 %v1557, %v1783
  %v1848 = vadd.f32 %v1558, %v1784
  %v1849 = vadd.f32 %v1559, %v1785
  %v1850 = vadd.f32 %v1560, %v1786
  %v1851 = vadd.f32 %v1561, %v1787
  %v1852 = vadd.f32 %v1562, %v1788
  %v1853 = vadd.f32 %v1563, %v1789
  %v1854 = vadd.f32 %v1564, %v1790
  %v1855 = vadd.f32 %v1565, %v1791
  %v1856 = vadd.f32 %v1566, %v1792
  %v1857 = vadd.f32 %v1567, %v1793
  %v1858 = vadd.f32 %v1568, %v1794
  %v1859 = vadd.f32 %v1569, %v1795
  %v1860 = vadd.f32 %v1570, %v1796
  %v1861 = vadd.f32 %v1571, %v1797
  %v1862 = vadd.f32 %v1572, %v1798
  %v1863 = vadd.f32 %v1573, %v1799
  %v1864 = vadd.f32 %v1574, %v1800
  %v1865 = vadd.f32 %v1575, %v1801
  %v1866 = vadd.f32 %v1576, %v1802
  %v1867 = vadd.f32 %v1577, %v1803
  %v1868 = vadd.f32 %v1578, %v1804
  %v1869 = vadd.f32 %v1579, %v1805
  %v1870 = vadd.f32 %v1580, %v1806
  %v1871 = vadd.f32 %v1581, %v1807
  %v1872 = vadd.f32 %v1582, %v1808
  %v1873 = vadd.f32 %v1583, %v1809
  %v1874 = vadd.f32 %v1584, %v1810
  %v1875 = vadd.f32 %v1585, %v1811
  %v1876 = vadd.f32 %v1586, %v1812
  %v1877 = vadd.f32 %v1587, %v1813
  %v1878 = vadd.f32 %v1588, %v1814
  %v1879 = vadd.f32 %v1589, %v1815
  %v1880 = vadd.f32 %v1590, %v1816
  %v1881 = vadd.f32 %v1591, %v1817
  %v1882 = vadd.f32 %v1592, %v1818
  %v1883 = vadd.f32 %v1593, %v1819
  %v1884 = vadd.f32 %v1594, %v1820
  %v1885 = vadd.f32 %v1595, %v1821
  %v1886 = vadd.f32 %v1596, %v1822
  %v1887 = vadd.f32 %v1597, %v1823
  %v1888 = vadd.f32 %v1598, %v1824
  %v1889 = vadd.f32 %v1599, %v1825
  %v1890 = vadd.f32 %v1600, %v1826
  %v1891 = vadd.f32 %v1601, %v1827
  %v1892 = vadd.f32 %v1602, %v1828
  %v1893 = vadd.f32 %v1603, %v1829
  %v1894 = vadd.f32 %v1604, %v1830
  %v1895 = vadd.f32 %v1605, %v1831
  %v1896 = vadd.f32 %v1606, %v1832
  %s1897 = scalar_lea.vmem %s4, 768
  %v1898 = vld [vmem:[%s1897] sm:$0xff]
  %v1899 = vld [vmem:[%s1897 + $0x8] sm:$0xff]
  %v1900 = vld [vmem:[%s1897 + $0x10] sm:$0xff]
  %v1901 = vld [vmem:[%s1897 + $0x18] sm:$0xff]
  %v1902 = vld [vmem:[%s1897 + $0x20] sm:$0xff]
  %v1903 = vld [vmem:[%s1897 + $0x28] sm:$0xff]
  %v1904 = vld [vmem:[%s1897 + $0x30] sm:$0xff]
  %v1905 = vld [vmem:[%s1897 + $0x38] sm:$0xff]
  %v1906 = vld [vmem:[%s1897 + $0x40] sm:$0xff]
  %v1907 = vld [vmem:[%s1897 + $0x48] sm:$0xff]
  %v1908 = vld [vmem:[%s1897 + $0x50] sm:$0xff]
  %v1909 = vld [vmem:[%s1897 + $0x58] sm:$0xff]
  %v1910 = vld [vmem:[%s1897 + $0x60] sm:$0xff]
  %v1911 = vld [vmem:[%s1897 + $0x68] sm:$0xff]
  %v1912 = vld [vmem:[%s1897 + $0x70] sm:$0xff]
  %v1913 = vld [vmem:[%s1897 + $0x78] sm:$0xff]
  %v1914 = vld [vmem:[%s1897 + $0x80] sm:$0xff]
  %v1915 = vld [vmem:[%s1897 + $0x88] sm:$0xff]
  %v1916 = vld [vmem:[%s1897 + $0x90] sm:$0xff]
  %v1917 = vld [vmem:[%s1897 + $0x98] sm:$0xff]
  %v1918 = vld [vmem:[%s1897 + $0xa0] sm:$0xff]
  %v1919 = vld [vmem:[%s1897 + $0xa8] sm:$0xff]
  %v1920 = vld [vmem:[%s1897 + $0xb0] sm:$0xff]
  %v1921 = vld [vmem:[%s1897 + $0xb8] sm:$0xff]
  %v1922 = vld [vmem:[%s1897 + $0xc0] sm:$0xff]
  %v1923 = vld [vmem:[%s1897 + $0xc8] sm:$0xff]
  %v1924 = vld [vmem:[%s1897 + $0xd0] sm:$0xff]
  %v1925 = vld [vmem:[%s1897 + $0xd8] sm:$0xff]
  %v1926 = vld [vmem:[%s1897 + $0xe0] sm:$0xff]
  %v1927 = vld [vmem:[%s1897 + $0xe8] sm:$0xff]
  %v1928 = vld [vmem:[%s1897 + $0xf0] sm:$0xff]
  %v1929 = vld [vmem:[%s1897 + $0xf8] sm:$0xff]
  %v1930 = vmul.f32 %v1284, %v1898
  %v1931 = vmul.f32 %v1282, %v1899
  %v1932 = vmul.f32 %v1280, %v1900
  %v1933 = vmul.f32 %v1278, %v1901
  %v1934 = vmul.f32 %v1276, %v1902
  %v1935 = vmul.f32 %v1274, %v1903
  %v1936 = vmul.f32 %v1272, %v1904
  %v1937 = vmul.f32 %v1270, %v1905
  %v1938 = vmul.f32 %v1268, %v1906
  %v1939 = vmul.f32 %v1266, %v1907
  %v1940 = vmul.f32 %v1264, %v1908
  %v1941 = vmul.f32 %v1262, %v1909
  %v1942 = vmul.f32 %v1260, %v1910
  %v1943 = vmul.f32 %v1258, %v1911
  %v1944 = vmul.f32 %v1256, %v1912
  %v1945 = vmul.f32 %v1254, %v1913
  %v1946 = vmul.f32 %v1252, %v1914
  %v1947 = vmul.f32 %v1250, %v1915
  %v1948 = vmul.f32 %v1248, %v1916
  %v1949 = vmul.f32 %v1246, %v1917
  %v1950 = vmul.f32 %v1244, %v1918
  %v1951 = vmul.f32 %v1242, %v1919
  %v1952 = vmul.f32 %v1240, %v1920
  %v1953 = vmul.f32 %v1238, %v1921
  %v1954 = vmul.f32 %v1236, %v1922
  %v1955 = vmul.f32 %v1234, %v1923
  %v1956 = vmul.f32 %v1232, %v1924
  %v1957 = vmul.f32 %v1230, %v1925
  %v1958 = vmul.f32 %v1228, %v1926
  %v1959 = vmul.f32 %v1226, %v1927
  %v1960 = vmul.f32 %v1224, %v1928
  %v1961 = vmul.f32 %v1222, %v1929
  %v1962 = vmul.f32 %v1285, %v1898
  %v1963 = vmul.f32 %v1283, %v1899
  %v1964 = vmul.f32 %v1281, %v1900
  %v1965 = vmul.f32 %v1279, %v1901
  %v1966 = vmul.f32 %v1277, %v1902
  %v1967 = vmul.f32 %v1275, %v1903
  %v1968 = vmul.f32 %v1273, %v1904
  %v1969 = vmul.f32 %v1271, %v1905
  %v1970 = vmul.f32 %v1269, %v1906
  %v1971 = vmul.f32 %v1267, %v1907
  %v1972 = vmul.f32 %v1265, %v1908
  %v1973 = vmul.f32 %v1263, %v1909
  %v1974 = vmul.f32 %v1261, %v1910
  %v1975 = vmul.f32 %v1259, %v1911
  %v1976 = vmul.f32 %v1257, %v1912
  %v1977 = vmul.f32 %v1255, %v1913
  %v1978 = vmul.f32 %v1253, %v1914
  %v1979 = vmul.f32 %v1251, %v1915
  %v1980 = vmul.f32 %v1249, %v1916
  %v1981 = vmul.f32 %v1247, %v1917
  %v1982 = vmul.f32 %v1245, %v1918
  %v1983 = vmul.f32 %v1243, %v1919
  %v1984 = vmul.f32 %v1241, %v1920
  %v1985 = vmul.f32 %v1239, %v1921
  %v1986 = vmul.f32 %v1237, %v1922
  %v1987 = vmul.f32 %v1235, %v1923
  %v1988 = vmul.f32 %v1233, %v1924
  %v1989 = vmul.f32 %v1231, %v1925
  %v1990 = vmul.f32 %v1229, %v1926
  %v1991 = vmul.f32 %v1227, %v1927
  %v1992 = vmul.f32 %v1225, %v1928
  %v1993 = vmul.f32 %v1223, %v1929
  %v1994 = vadd.f32 %v1833, %v1930
  %v1995 = vadd.f32 %v1834, %v1931
  %v1996 = vadd.f32 %v1835, %v1932
  %v1997 = vadd.f32 %v1836, %v1933
  %v1998 = vadd.f32 %v1837, %v1934
  %v1999 = vadd.f32 %v1838, %v1935
  %v2000 = vadd.f32 %v1839, %v1936
  %v2001 = vadd.f32 %v1840, %v1937
  %v2002 = vadd.f32 %v1841, %v1938
  %v2003 = vadd.f32 %v1842, %v1939
  %v2004 = vadd.f32 %v1843, %v1940
  %v2005 = vadd.f32 %v1844, %v1941
  %v2006 = vadd.f32 %v1845, %v1942
  %v2007 = vadd.f32 %v1846, %v1943
  %v2008 = vadd.f32 %v1847, %v1944
  %v2009 = vadd.f32 %v1848, %v1945
  %v2010 = vadd.f32 %v1849, %v1946
  %v2011 = vadd.f32 %v1850, %v1947
  %v2012 = vadd.f32 %v1851, %v1948
  %v2013 = vadd.f32 %v1852, %v1949
  %v2014 = vadd.f32 %v1853, %v1950
  %v2015 = vadd.f32 %v1854, %v1951
  %v2016 = vadd.f32 %v1855, %v1952
  %v2017 = vadd.f32 %v1856, %v1953
  %v2018 = vadd.f32 %v1857, %v1954
  %v2019 = vadd.f32 %v1858, %v1955
  %v2020 = vadd.f32 %v1859, %v1956
  %v2021 = vadd.f32 %v1860, %v1957
  %v2022 = vadd.f32 %v1861, %v1958
  %v2023 = vadd.f32 %v1862, %v1959
  %v2024 = vadd.f32 %v1863, %v1960
  %v2025 = vadd.f32 %v1864, %v1961
  %v2026 = vadd.f32 %v1865, %v1962
  %v2027 = vadd.f32 %v1866, %v1963
  %v2028 = vadd.f32 %v1867, %v1964
  %v2029 = vadd.f32 %v1868, %v1965
  %v2030 = vadd.f32 %v1869, %v1966
  %v2031 = vadd.f32 %v1870, %v1967
  %v2032 = vadd.f32 %v1871, %v1968
  %v2033 = vadd.f32 %v1872, %v1969
  %v2034 = vadd.f32 %v1873, %v1970
  %v2035 = vadd.f32 %v1874, %v1971
  %v2036 = vadd.f32 %v1875, %v1972
  %v2037 = vadd.f32 %v1876, %v1973
  %v2038 = vadd.f32 %v1877, %v1974
  %v2039 = vadd.f32 %v1878, %v1975
  %v2040 = vadd.f32 %v1879, %v1976
  %v2041 = vadd.f32 %v1880, %v1977
  %v2042 = vadd.f32 %v1881, %v1978
  %v2043 = vadd.f32 %v1882, %v1979
  %v2044 = vadd.f32 %v1883, %v1980
  %v2045 = vadd.f32 %v1884, %v1981
  %v2046 = vadd.f32 %v1885, %v1982
  %v2047 = vadd.f32 %v1886, %v1983
  %v2048 = vadd.f32 %v1887, %v1984
  %v2049 = vadd.f32 %v1888, %v1985
  %v2050 = vadd.f32 %v1889, %v1986
  %v2051 = vadd.f32 %v1890, %v1987
  %v2052 = vadd.f32 %v1891, %v1988
  %v2053 = vadd.f32 %v1892, %v1989
  %v2054 = vadd.f32 %v1893, %v1990
  %v2055 = vadd.f32 %v1894, %v1991
  %v2056 = vadd.f32 %v1895, %v1992
  %v2057 = vadd.f32 %v1896, %v1993
  %s2058 = scalar_lea.vmem %s4, 1024
  %v2059 = vld [vmem:[%s2058] sm:$0xff]
  %v2060 = vld [vmem:[%s2058 + $0x8] sm:$0xff]
  %v2061 = vld [vmem:[%s2058 + $0x10] sm:$0xff]
  %v2062 = vld [vmem:[%s2058 + $0x18] sm:$0xff]
  %v2063 = vld [vmem:[%s2058 + $0x20] sm:$0xff]
  %v2064 = vld [vmem:[%s2058 + $0x28] sm:$0xff]
  %v2065 = vld [vmem:[%s2058 + $0x30] sm:$0xff]
  %v2066 = vld [vmem:[%s2058 + $0x38] sm:$0xff]
  %v2067 = vld [vmem:[%s2058 + $0x40] sm:$0xff]
  %v2068 = vld [vmem:[%s2058 + $0x48] sm:$0xff]
  %v2069 = vld [vmem:[%s2058 + $0x50] sm:$0xff]
  %v2070 = vld [vmem:[%s2058 + $0x58] sm:$0xff]
  %v2071 = vld [vmem:[%s2058 + $0x60] sm:$0xff]
  %v2072 = vld [vmem:[%s2058 + $0x68] sm:$0xff]
  %v2073 = vld [vmem:[%s2058 + $0x70] sm:$0xff]
  %v2074 = vld [vmem:[%s2058 + $0x78] sm:$0xff]
  %v2075 = vld [vmem:[%s2058 + $0x80] sm:$0xff]
  %v2076 = vld [vmem:[%s2058 + $0x88] sm:$0xff]
  %v2077 = vld [vmem:[%s2058 + $0x90] sm:$0xff]
  %v2078 = vld [vmem:[%s2058 + $0x98] sm:$0xff]
  %v2079 = vld [vmem:[%s2058 + $0xa0] sm:$0xff]
  %v2080 = vld [vmem:[%s2058 + $0xa8] sm:$0xff]
  %v2081 = vld [vmem:[%s2058 + $0xb0] sm:$0xff]
  %v2082 = vld [vmem:[%s2058 + $0xb8] sm:$0xff]
  %v2083 = vld [vmem:[%s2058 + $0xc0] sm:$0xff]
  %v2084 = vld [vmem:[%s2058 + $0xc8] sm:$0xff]
  %v2085 = vld [vmem:[%s2058 + $0xd0] sm:$0xff]
  %v2086 = vld [vmem:[%s2058 + $0xd8] sm:$0xff]
  %v2087 = vld [vmem:[%s2058 + $0xe0] sm:$0xff]
  %v2088 = vld [vmem:[%s2058 + $0xe8] sm:$0xff]
  %v2089 = vld [vmem:[%s2058 + $0xf0] sm:$0xff]
  %v2090 = vld [vmem:[%s2058 + $0xf8] sm:$0xff]
  %v2091 = vmul.f32 %v1091, %v2059
  %v2092 = vmul.f32 %v1092, %v2060
  %v2093 = vmul.f32 %v1093, %v2061
  %v2094 = vmul.f32 %v1094, %v2062
  %v2095 = vmul.f32 %v1095, %v2063
  %v2096 = vmul.f32 %v1096, %v2064
  %v2097 = vmul.f32 %v1097, %v2065
  %v2098 = vmul.f32 %v1098, %v2066
  %v2099 = vmul.f32 %v1099, %v2067
  %v2100 = vmul.f32 %v1100, %v2068
  %v2101 = vmul.f32 %v1101, %v2069
  %v2102 = vmul.f32 %v1102, %v2070
  %v2103 = vmul.f32 %v1103, %v2071
  %v2104 = vmul.f32 %v1104, %v2072
  %v2105 = vmul.f32 %v1105, %v2073
  %v2106 = vmul.f32 %v1106, %v2074
  %v2107 = vmul.f32 %v1107, %v2075
  %v2108 = vmul.f32 %v1108, %v2076
  %v2109 = vmul.f32 %v1109, %v2077
  %v2110 = vmul.f32 %v1110, %v2078
  %v2111 = vmul.f32 %v1111, %v2079
  %v2112 = vmul.f32 %v1112, %v2080
  %v2113 = vmul.f32 %v1113, %v2081
  %v2114 = vmul.f32 %v1114, %v2082
  %v2115 = vmul.f32 %v1115, %v2083
  %v2116 = vmul.f32 %v1116, %v2084
  %v2117 = vmul.f32 %v1117, %v2085
  %v2118 = vmul.f32 %v1118, %v2086
  %v2119 = vmul.f32 %v1119, %v2087
  %v2120 = vmul.f32 %v1120, %v2088
  %v2121 = vmul.f32 %v1121, %v2089
  %v2122 = vmul.f32 %v1122, %v2090
  %v2123 = vmul.f32 %v1123, %v2059
  %v2124 = vmul.f32 %v1124, %v2060
  %v2125 = vmul.f32 %v1125, %v2061
  %v2126 = vmul.f32 %v1126, %v2062
  %v2127 = vmul.f32 %v1127, %v2063
  %v2128 = vmul.f32 %v1128, %v2064
  %v2129 = vmul.f32 %v1129, %v2065
  %v2130 = vmul.f32 %v1130, %v2066
  %v2131 = vmul.f32 %v1131, %v2067
  %v2132 = vmul.f32 %v1132, %v2068
  %v2133 = vmul.f32 %v1133, %v2069
  %v2134 = vmul.f32 %v1134, %v2070
  %v2135 = vmul.f32 %v1135, %v2071
  %v2136 = vmul.f32 %v1136, %v2072
  %v2137 = vmul.f32 %v1137, %v2073
  %v2138 = vmul.f32 %v1138, %v2074
  %v2139 = vmul.f32 %v1139, %v2075
  %v2140 = vmul.f32 %v1140, %v2076
  %v2141 = vmul.f32 %v1141, %v2077
  %v2142 = vmul.f32 %v1142, %v2078
  %v2143 = vmul.f32 %v1143, %v2079
  %v2144 = vmul.f32 %v1144, %v2080
  %v2145 = vmul.f32 %v1145, %v2081
  %v2146 = vmul.f32 %v1146, %v2082
  %v2147 = vmul.f32 %v1147, %v2083
  %v2148 = vmul.f32 %v1148, %v2084
  %v2149 = vmul.f32 %v1149, %v2085
  %v2150 = vmul.f32 %v1150, %v2086
  %v2151 = vmul.f32 %v1151, %v2087
  %v2152 = vmul.f32 %v1152, %v2088
  %v2153 = vmul.f32 %v1153, %v2089
  %v2154 = vmul.f32 %v1154, %v2090
  %v2155 = vadd.f32 %v1994, %v2091
  %v2156 = vadd.f32 %v1995, %v2092
  %v2157 = vadd.f32 %v1996, %v2093
  %v2158 = vadd.f32 %v1997, %v2094
  %v2159 = vadd.f32 %v1998, %v2095
  %v2160 = vadd.f32 %v1999, %v2096
  %v2161 = vadd.f32 %v2000, %v2097
  %v2162 = vadd.f32 %v2001, %v2098
  %v2163 = vadd.f32 %v2002, %v2099
  %v2164 = vadd.f32 %v2003, %v2100
  %v2165 = vadd.f32 %v2004, %v2101
  %v2166 = vadd.f32 %v2005, %v2102
  %v2167 = vadd.f32 %v2006, %v2103
  %v2168 = vadd.f32 %v2007, %v2104
  %v2169 = vadd.f32 %v2008, %v2105
  %v2170 = vadd.f32 %v2009, %v2106
  %v2171 = vadd.f32 %v2010, %v2107
  %v2172 = vadd.f32 %v2011, %v2108
  %v2173 = vadd.f32 %v2012, %v2109
  %v2174 = vadd.f32 %v2013, %v2110
  %v2175 = vadd.f32 %v2014, %v2111
  %v2176 = vadd.f32 %v2015, %v2112
  %v2177 = vadd.f32 %v2016, %v2113
  %v2178 = vadd.f32 %v2017, %v2114
  %v2179 = vadd.f32 %v2018, %v2115
  %v2180 = vadd.f32 %v2019, %v2116
  %v2181 = vadd.f32 %v2020, %v2117
  %v2182 = vadd.f32 %v2021, %v2118
  %v2183 = vadd.f32 %v2022, %v2119
  %v2184 = vadd.f32 %v2023, %v2120
  %v2185 = vadd.f32 %v2024, %v2121
  %v2186 = vadd.f32 %v2025, %v2122
  %v2187 = vadd.f32 %v2026, %v2123
  %v2188 = vadd.f32 %v2027, %v2124
  %v2189 = vadd.f32 %v2028, %v2125
  %v2190 = vadd.f32 %v2029, %v2126
  %v2191 = vadd.f32 %v2030, %v2127
  %v2192 = vadd.f32 %v2031, %v2128
  %v2193 = vadd.f32 %v2032, %v2129
  %v2194 = vadd.f32 %v2033, %v2130
  %v2195 = vadd.f32 %v2034, %v2131
  %v2196 = vadd.f32 %v2035, %v2132
  %v2197 = vadd.f32 %v2036, %v2133
  %v2198 = vadd.f32 %v2037, %v2134
  %v2199 = vadd.f32 %v2038, %v2135
  %v2200 = vadd.f32 %v2039, %v2136
  %v2201 = vadd.f32 %v2040, %v2137
  %v2202 = vadd.f32 %v2041, %v2138
  %v2203 = vadd.f32 %v2042, %v2139
  %v2204 = vadd.f32 %v2043, %v2140
  %v2205 = vadd.f32 %v2044, %v2141
  %v2206 = vadd.f32 %v2045, %v2142
  %v2207 = vadd.f32 %v2046, %v2143
  %v2208 = vadd.f32 %v2047, %v2144
  %v2209 = vadd.f32 %v2048, %v2145
  %v2210 = vadd.f32 %v2049, %v2146
  %v2211 = vadd.f32 %v2050, %v2147
  %v2212 = vadd.f32 %v2051, %v2148
  %v2213 = vadd.f32 %v2052, %v2149
  %v2214 = vadd.f32 %v2053, %v2150
  %v2215 = vadd.f32 %v2054, %v2151
  %v2216 = vadd.f32 %v2055, %v2152
  %v2217 = vadd.f32 %v2056, %v2153
  %v2218 = vadd.f32 %v2057, %v2154
  %s2219 = scalar_lea.vmem %s4, 1280
  %v2220 = vld [vmem:[%s2219] sm:$0xff]
  %v2221 = vld [vmem:[%s2219 + $0x8] sm:$0xff]
  %v2222 = vld [vmem:[%s2219 + $0x10] sm:$0xff]
  %v2223 = vld [vmem:[%s2219 + $0x18] sm:$0xff]
  %v2224 = vld [vmem:[%s2219 + $0x20] sm:$0xff]
  %v2225 = vld [vmem:[%s2219 + $0x28] sm:$0xff]
  %v2226 = vld [vmem:[%s2219 + $0x30] sm:$0xff]
  %v2227 = vld [vmem:[%s2219 + $0x38] sm:$0xff]
  %v2228 = vld [vmem:[%s2219 + $0x40] sm:$0xff]
  %v2229 = vld [vmem:[%s2219 + $0x48] sm:$0xff]
  %v2230 = vld [vmem:[%s2219 + $0x50] sm:$0xff]
  %v2231 = vld [vmem:[%s2219 + $0x58] sm:$0xff]
  %v2232 = vld [vmem:[%s2219 + $0x60] sm:$0xff]
  %v2233 = vld [vmem:[%s2219 + $0x68] sm:$0xff]
  %v2234 = vld [vmem:[%s2219 + $0x70] sm:$0xff]
  %v2235 = vld [vmem:[%s2219 + $0x78] sm:$0xff]
  %v2236 = vld [vmem:[%s2219 + $0x80] sm:$0xff]
  %v2237 = vld [vmem:[%s2219 + $0x88] sm:$0xff]
  %v2238 = vld [vmem:[%s2219 + $0x90] sm:$0xff]
  %v2239 = vld [vmem:[%s2219 + $0x98] sm:$0xff]
  %v2240 = vld [vmem:[%s2219 + $0xa0] sm:$0xff]
  %v2241 = vld [vmem:[%s2219 + $0xa8] sm:$0xff]
  %v2242 = vld [vmem:[%s2219 + $0xb0] sm:$0xff]
  %v2243 = vld [vmem:[%s2219 + $0xb8] sm:$0xff]
  %v2244 = vld [vmem:[%s2219 + $0xc0] sm:$0xff]
  %v2245 = vld [vmem:[%s2219 + $0xc8] sm:$0xff]
  %v2246 = vld [vmem:[%s2219 + $0xd0] sm:$0xff]
  %v2247 = vld [vmem:[%s2219 + $0xd8] sm:$0xff]
  %v2248 = vld [vmem:[%s2219 + $0xe0] sm:$0xff]
  %v2249 = vld [vmem:[%s2219 + $0xe8] sm:$0xff]
  %v2250 = vld [vmem:[%s2219 + $0xf0] sm:$0xff]
  %v2251 = vld [vmem:[%s2219 + $0xf8] sm:$0xff]
  %v2252 = vmul.f32 %v1732, %v2220
  %v2253 = vmul.f32 %v1730, %v2221
  %v2254 = vmul.f32 %v1728, %v2222
  %v2255 = vmul.f32 %v1726, %v2223
  %v2256 = vmul.f32 %v1724, %v2224
  %v2257 = vmul.f32 %v1722, %v2225
  %v2258 = vmul.f32 %v1720, %v2226
  %v2259 = vmul.f32 %v1718, %v2227
  %v2260 = vmul.f32 %v1716, %v2228
  %v2261 = vmul.f32 %v1714, %v2229
  %v2262 = vmul.f32 %v1712, %v2230
  %v2263 = vmul.f32 %v1710, %v2231
  %v2264 = vmul.f32 %v1708, %v2232
  %v2265 = vmul.f32 %v1706, %v2233
  %v2266 = vmul.f32 %v1704, %v2234
  %v2267 = vmul.f32 %v1702, %v2235
  %v2268 = vmul.f32 %v1700, %v2236
  %v2269 = vmul.f32 %v1698, %v2237
  %v2270 = vmul.f32 %v1696, %v2238
  %v2271 = vmul.f32 %v1694, %v2239
  %v2272 = vmul.f32 %v1692, %v2240
  %v2273 = vmul.f32 %v1690, %v2241
  %v2274 = vmul.f32 %v1688, %v2242
  %v2275 = vmul.f32 %v1686, %v2243
  %v2276 = vmul.f32 %v1684, %v2244
  %v2277 = vmul.f32 %v1682, %v2245
  %v2278 = vmul.f32 %v1680, %v2246
  %v2279 = vmul.f32 %v1678, %v2247
  %v2280 = vmul.f32 %v1676, %v2248
  %v2281 = vmul.f32 %v1674, %v2249
  %v2282 = vmul.f32 %v1672, %v2250
  %v2283 = vmul.f32 %v1734, %v2251
  %v2284 = vmul.f32 %v1733, %v2220
  %v2285 = vmul.f32 %v1731, %v2221
  %v2286 = vmul.f32 %v1729, %v2222
  %v2287 = vmul.f32 %v1727, %v2223
  %v2288 = vmul.f32 %v1725, %v2224
  %v2289 = vmul.f32 %v1723, %v2225
  %v2290 = vmul.f32 %v1721, %v2226
  %v2291 = vmul.f32 %v1719, %v2227
  %v2292 = vmul.f32 %v1717, %v2228
  %v2293 = vmul.f32 %v1715, %v2229
  %v2294 = vmul.f32 %v1713, %v2230
  %v2295 = vmul.f32 %v1711, %v2231
  %v2296 = vmul.f32 %v1709, %v2232
  %v2297 = vmul.f32 %v1707, %v2233
  %v2298 = vmul.f32 %v1705, %v2234
  %v2299 = vmul.f32 %v1703, %v2235
  %v2300 = vmul.f32 %v1701, %v2236
  %v2301 = vmul.f32 %v1699, %v2237
  %v2302 = vmul.f32 %v1697, %v2238
  %v2303 = vmul.f32 %v1695, %v2239
  %v2304 = vmul.f32 %v1693, %v2240
  %v2305 = vmul.f32 %v1691, %v2241
  %v2306 = vmul.f32 %v1689, %v2242
  %v2307 = vmul.f32 %v1687, %v2243
  %v2308 = vmul.f32 %v1685, %v2244
  %v2309 = vmul.f32 %v1683, %v2245
  %v2310 = vmul.f32 %v1681, %v2246
  %v2311 = vmul.f32 %v1679, %v2247
  %v2312 = vmul.f32 %v1677, %v2248
  %v2313 = vmul.f32 %v1675, %v2249
  %v2314 = vmul.f32 %v1673, %v2250
  %v2315 = vmul.f32 %v1735, %v2251
  %v2316 = vadd.f32 %v2155, %v2252
  %v2317 = vadd.f32 %v2156, %v2253
  %v2318 = vadd.f32 %v2157, %v2254
  %v2319 = vadd.f32 %v2158, %v2255
  %v2320 = vadd.f32 %v2159, %v2256
  %v2321 = vadd.f32 %v2160, %v2257
  %v2322 = vadd.f32 %v2161, %v2258
  %v2323 = vadd.f32 %v2162, %v2259
  %v2324 = vadd.f32 %v2163, %v2260
  %v2325 = vadd.f32 %v2164, %v2261
  %v2326 = vadd.f32 %v2165, %v2262
  %v2327 = vadd.f32 %v2166, %v2263
  %v2328 = vadd.f32 %v2167, %v2264
  %v2329 = vadd.f32 %v2168, %v2265
  %v2330 = vadd.f32 %v2169, %v2266
  %v2331 = vadd.f32 %v2170, %v2267
  %v2332 = vadd.f32 %v2171, %v2268
  %v2333 = vadd.f32 %v2172, %v2269
  %v2334 = vadd.f32 %v2173, %v2270
  %v2335 = vadd.f32 %v2174, %v2271
  %v2336 = vadd.f32 %v2175, %v2272
  %v2337 = vadd.f32 %v2176, %v2273
  %v2338 = vadd.f32 %v2177, %v2274
  %v2339 = vadd.f32 %v2178, %v2275
  %v2340 = vadd.f32 %v2179, %v2276
  %v2341 = vadd.f32 %v2180, %v2277
  %v2342 = vadd.f32 %v2181, %v2278
  %v2343 = vadd.f32 %v2182, %v2279
  %v2344 = vadd.f32 %v2183, %v2280
  %v2345 = vadd.f32 %v2184, %v2281
  %v2346 = vadd.f32 %v2185, %v2282
  %v2347 = vadd.f32 %v2186, %v2283
  %v2348 = vadd.f32 %v2187, %v2284
  %v2349 = vadd.f32 %v2188, %v2285
  %v2350 = vadd.f32 %v2189, %v2286
  %v2351 = vadd.f32 %v2190, %v2287
  %v2352 = vadd.f32 %v2191, %v2288
  %v2353 = vadd.f32 %v2192, %v2289
  %v2354 = vadd.f32 %v2193, %v2290
  %v2355 = vadd.f32 %v2194, %v2291
  %v2356 = vadd.f32 %v2195, %v2292
  %v2357 = vadd.f32 %v2196, %v2293
  %v2358 = vadd.f32 %v2197, %v2294
  %v2359 = vadd.f32 %v2198, %v2295
  %v2360 = vadd.f32 %v2199, %v2296
  %v2361 = vadd.f32 %v2200, %v2297
  %v2362 = vadd.f32 %v2201, %v2298
  %v2363 = vadd.f32 %v2202, %v2299
  %v2364 = vadd.f32 %v2203, %v2300
  %v2365 = vadd.f32 %v2204, %v2301
  %v2366 = vadd.f32 %v2205, %v2302
  %v2367 = vadd.f32 %v2206, %v2303
  %v2368 = vadd.f32 %v2207, %v2304
  %v2369 = vadd.f32 %v2208, %v2305
  %v2370 = vadd.f32 %v2209, %v2306
  %v2371 = vadd.f32 %v2210, %v2307
  %v2372 = vadd.f32 %v2211, %v2308
  %v2373 = vadd.f32 %v2212, %v2309
  %v2374 = vadd.f32 %v2213, %v2310
  %v2375 = vadd.f32 %v2214, %v2311
  %v2376 = vadd.f32 %v2215, %v2312
  %v2377 = vadd.f32 %v2216, %v2313
  %v2378 = vadd.f32 %v2217, %v2314
  %v2379 = vadd.f32 %v2218, %v2315
  %s2380 = scalar_lea.vmem %s4, 1536
  %v2381 = vld [vmem:[%s2380] sm:$0xff]
  %v2382 = vld [vmem:[%s2380 + $0x8] sm:$0xff]
  %v2383 = vld [vmem:[%s2380 + $0x10] sm:$0xff]
  %v2384 = vld [vmem:[%s2380 + $0x18] sm:$0xff]
  %v2385 = vld [vmem:[%s2380 + $0x20] sm:$0xff]
  %v2386 = vld [vmem:[%s2380 + $0x28] sm:$0xff]
  %v2387 = vld [vmem:[%s2380 + $0x30] sm:$0xff]
  %v2388 = vld [vmem:[%s2380 + $0x38] sm:$0xff]
  %v2389 = vld [vmem:[%s2380 + $0x40] sm:$0xff]
  %v2390 = vld [vmem:[%s2380 + $0x48] sm:$0xff]
  %v2391 = vld [vmem:[%s2380 + $0x50] sm:$0xff]
  %v2392 = vld [vmem:[%s2380 + $0x58] sm:$0xff]
  %v2393 = vld [vmem:[%s2380 + $0x60] sm:$0xff]
  %v2394 = vld [vmem:[%s2380 + $0x68] sm:$0xff]
  %v2395 = vld [vmem:[%s2380 + $0x70] sm:$0xff]
  %v2396 = vld [vmem:[%s2380 + $0x78] sm:$0xff]
  %v2397 = vld [vmem:[%s2380 + $0x80] sm:$0xff]
  %v2398 = vld [vmem:[%s2380 + $0x88] sm:$0xff]
  %v2399 = vld [vmem:[%s2380 + $0x90] sm:$0xff]
  %v2400 = vld [vmem:[%s2380 + $0x98] sm:$0xff]
  %v2401 = vld [vmem:[%s2380 + $0xa0] sm:$0xff]
  %v2402 = vld [vmem:[%s2380 + $0xa8] sm:$0xff]
  %v2403 = vld [vmem:[%s2380 + $0xb0] sm:$0xff]
  %v2404 = vld [vmem:[%s2380 + $0xb8] sm:$0xff]
  %v2405 = vld [vmem:[%s2380 + $0xc0] sm:$0xff]
  %v2406 = vld [vmem:[%s2380 + $0xc8] sm:$0xff]
  %v2407 = vld [vmem:[%s2380 + $0xd0] sm:$0xff]
  %v2408 = vld [vmem:[%s2380 + $0xd8] sm:$0xff]
  %v2409 = vld [vmem:[%s2380 + $0xe0] sm:$0xff]
  %v2410 = vld [vmem:[%s2380 + $0xe8] sm:$0xff]
  %v2411 = vld [vmem:[%s2380 + $0xf0] sm:$0xff]
  %v2412 = vld [vmem:[%s2380 + $0xf8] sm:$0xff]
  %v2413 = vmul.f32 %v1280, %v2381
  %v2414 = vmul.f32 %v1278, %v2382
  %v2415 = vmul.f32 %v1276, %v2383
  %v2416 = vmul.f32 %v1274, %v2384
  %v2417 = vmul.f32 %v1272, %v2385
  %v2418 = vmul.f32 %v1270, %v2386
  %v2419 = vmul.f32 %v1268, %v2387
  %v2420 = vmul.f32 %v1266, %v2388
  %v2421 = vmul.f32 %v1264, %v2389
  %v2422 = vmul.f32 %v1262, %v2390
  %v2423 = vmul.f32 %v1260, %v2391
  %v2424 = vmul.f32 %v1258, %v2392
  %v2425 = vmul.f32 %v1256, %v2393
  %v2426 = vmul.f32 %v1254, %v2394
  %v2427 = vmul.f32 %v1252, %v2395
  %v2428 = vmul.f32 %v1250, %v2396
  %v2429 = vmul.f32 %v1248, %v2397
  %v2430 = vmul.f32 %v1246, %v2398
  %v2431 = vmul.f32 %v1244, %v2399
  %v2432 = vmul.f32 %v1242, %v2400
  %v2433 = vmul.f32 %v1240, %v2401
  %v2434 = vmul.f32 %v1238, %v2402
  %v2435 = vmul.f32 %v1236, %v2403
  %v2436 = vmul.f32 %v1234, %v2404
  %v2437 = vmul.f32 %v1232, %v2405
  %v2438 = vmul.f32 %v1230, %v2406
  %v2439 = vmul.f32 %v1228, %v2407
  %v2440 = vmul.f32 %v1226, %v2408
  %v2441 = vmul.f32 %v1224, %v2409
  %v2442 = vmul.f32 %v1222, %v2410
  %v2443 = vmul.f32 %v1284, %v2411
  %v2444 = vmul.f32 %v1282, %v2412
  %v2445 = vmul.f32 %v1281, %v2381
  %v2446 = vmul.f32 %v1279, %v2382
  %v2447 = vmul.f32 %v1277, %v2383
  %v2448 = vmul.f32 %v1275, %v2384
  %v2449 = vmul.f32 %v1273, %v2385
  %v2450 = vmul.f32 %v1271, %v2386
  %v2451 = vmul.f32 %v1269, %v2387
  %v2452 = vmul.f32 %v1267, %v2388
  %v2453 = vmul.f32 %v1265, %v2389
  %v2454 = vmul.f32 %v1263, %v2390
  %v2455 = vmul.f32 %v1261, %v2391
  %v2456 = vmul.f32 %v1259, %v2392
  %v2457 = vmul.f32 %v1257, %v2393
  %v2458 = vmul.f32 %v1255, %v2394
  %v2459 = vmul.f32 %v1253, %v2395
  %v2460 = vmul.f32 %v1251, %v2396
  %v2461 = vmul.f32 %v1249, %v2397
  %v2462 = vmul.f32 %v1247, %v2398
  %v2463 = vmul.f32 %v1245, %v2399
  %v2464 = vmul.f32 %v1243, %v2400
  %v2465 = vmul.f32 %v1241, %v2401
  %v2466 = vmul.f32 %v1239, %v2402
  %v2467 = vmul.f32 %v1237, %v2403
  %v2468 = vmul.f32 %v1235, %v2404
  %v2469 = vmul.f32 %v1233, %v2405
  %v2470 = vmul.f32 %v1231, %v2406
  %v2471 = vmul.f32 %v1229, %v2407
  %v2472 = vmul.f32 %v1227, %v2408
  %v2473 = vmul.f32 %v1225, %v2409
  %v2474 = vmul.f32 %v1223, %v2410
  %v2475 = vmul.f32 %v1285, %v2411
  %v2476 = vmul.f32 %v1283, %v2412
  %v2477 = vadd.f32 %v2316, %v2413
  %v2478 = vadd.f32 %v2317, %v2414
  %v2479 = vadd.f32 %v2318, %v2415
  %v2480 = vadd.f32 %v2319, %v2416
  %v2481 = vadd.f32 %v2320, %v2417
  %v2482 = vadd.f32 %v2321, %v2418
  %v2483 = vadd.f32 %v2322, %v2419
  %v2484 = vadd.f32 %v2323, %v2420
  %v2485 = vadd.f32 %v2324, %v2421
  %v2486 = vadd.f32 %v2325, %v2422
  %v2487 = vadd.f32 %v2326, %v2423
  %v2488 = vadd.f32 %v2327, %v2424
  %v2489 = vadd.f32 %v2328, %v2425
  %v2490 = vadd.f32 %v2329, %v2426
  %v2491 = vadd.f32 %v2330, %v2427
  %v2492 = vadd.f32 %v2331, %v2428
  %v2493 = vadd.f32 %v2332, %v2429
  %v2494 = vadd.f32 %v2333, %v2430
  %v2495 = vadd.f32 %v2334, %v2431
  %v2496 = vadd.f32 %v2335, %v2432
  %v2497 = vadd.f32 %v2336, %v2433
  %v2498 = vadd.f32 %v2337, %v2434
  %v2499 = vadd.f32 %v2338, %v2435
  %v2500 = vadd.f32 %v2339, %v2436
  %v2501 = vadd.f32 %v2340, %v2437
  %v2502 = vadd.f32 %v2341, %v2438
  %v2503 = vadd.f32 %v2342, %v2439
  %v2504 = vadd.f32 %v2343, %v2440
  %v2505 = vadd.f32 %v2344, %v2441
  %v2506 = vadd.f32 %v2345, %v2442
  %v2507 = vadd.f32 %v2346, %v2443
  %v2508 = vadd.f32 %v2347, %v2444
  %v2509 = vadd.f32 %v2348, %v2445
  %v2510 = vadd.f32 %v2349, %v2446
  %v2511 = vadd.f32 %v2350, %v2447
  %v2512 = vadd.f32 %v2351, %v2448
  %v2513 = vadd.f32 %v2352, %v2449
  %v2514 = vadd.f32 %v2353, %v2450
  %v2515 = vadd.f32 %v2354, %v2451
  %v2516 = vadd.f32 %v2355, %v2452
  %v2517 = vadd.f32 %v2356, %v2453
  %v2518 = vadd.f32 %v2357, %v2454
  %v2519 = vadd.f32 %v2358, %v2455
  %v2520 = vadd.f32 %v2359, %v2456
  %v2521 = vadd.f32 %v2360, %v2457
  %v2522 = vadd.f32 %v2361, %v2458
  %v2523 = vadd.f32 %v2362, %v2459
  %v2524 = vadd.f32 %v2363, %v2460
  %v2525 = vadd.f32 %v2364, %v2461
  %v2526 = vadd.f32 %v2365, %v2462
  %v2527 = vadd.f32 %v2366, %v2463
  %v2528 = vadd.f32 %v2367, %v2464
  %v2529 = vadd.f32 %v2368, %v2465
  %v2530 = vadd.f32 %v2369, %v2466
  %v2531 = vadd.f32 %v2370, %v2467
  %v2532 = vadd.f32 %v2371, %v2468
  %v2533 = vadd.f32 %v2372, %v2469
  %v2534 = vadd.f32 %v2373, %v2470
  %v2535 = vadd.f32 %v2374, %v2471
  %v2536 = vadd.f32 %v2375, %v2472
  %v2537 = vadd.f32 %v2376, %v2473
  %v2538 = vadd.f32 %v2377, %v2474
  %v2539 = vadd.f32 %v2378, %v2475
  %v2540 = vadd.f32 %v2379, %v2476
  %s2541 = scalar_lea.vmem %s4, 1792
  %v2542 = vld [vmem:[%s2541] sm:$0xff]
  %v2543 = vld [vmem:[%s2541 + $0x8] sm:$0xff]
  %v2544 = vld [vmem:[%s2541 + $0x10] sm:$0xff]
  %v2545 = vld [vmem:[%s2541 + $0x18] sm:$0xff]
  %v2546 = vld [vmem:[%s2541 + $0x20] sm:$0xff]
  %v2547 = vld [vmem:[%s2541 + $0x28] sm:$0xff]
  %v2548 = vld [vmem:[%s2541 + $0x30] sm:$0xff]
  %v2549 = vld [vmem:[%s2541 + $0x38] sm:$0xff]
  %v2550 = vld [vmem:[%s2541 + $0x40] sm:$0xff]
  %v2551 = vld [vmem:[%s2541 + $0x48] sm:$0xff]
  %v2552 = vld [vmem:[%s2541 + $0x50] sm:$0xff]
  %v2553 = vld [vmem:[%s2541 + $0x58] sm:$0xff]
  %v2554 = vld [vmem:[%s2541 + $0x60] sm:$0xff]
  %v2555 = vld [vmem:[%s2541 + $0x68] sm:$0xff]
  %v2556 = vld [vmem:[%s2541 + $0x70] sm:$0xff]
  %v2557 = vld [vmem:[%s2541 + $0x78] sm:$0xff]
  %v2558 = vld [vmem:[%s2541 + $0x80] sm:$0xff]
  %v2559 = vld [vmem:[%s2541 + $0x88] sm:$0xff]
  %v2560 = vld [vmem:[%s2541 + $0x90] sm:$0xff]
  %v2561 = vld [vmem:[%s2541 + $0x98] sm:$0xff]
  %v2562 = vld [vmem:[%s2541 + $0xa0] sm:$0xff]
  %v2563 = vld [vmem:[%s2541 + $0xa8] sm:$0xff]
  %v2564 = vld [vmem:[%s2541 + $0xb0] sm:$0xff]
  %v2565 = vld [vmem:[%s2541 + $0xb8] sm:$0xff]
  %v2566 = vld [vmem:[%s2541 + $0xc0] sm:$0xff]
  %v2567 = vld [vmem:[%s2541 + $0xc8] sm:$0xff]
  %v2568 = vld [vmem:[%s2541 + $0xd0] sm:$0xff]
  %v2569 = vld [vmem:[%s2541 + $0xd8] sm:$0xff]
  %v2570 = vld [vmem:[%s2541 + $0xe0] sm:$0xff]
  %v2571 = vld [vmem:[%s2541 + $0xe8] sm:$0xff]
  %v2572 = vld [vmem:[%s2541 + $0xf0] sm:$0xff]
  %v2573 = vld [vmem:[%s2541 + $0xf8] sm:$0xff]
  %v2574 = vmul.f32 %v1093, %v2542
  %v2575 = vmul.f32 %v1094, %v2543
  %v2576 = vmul.f32 %v1095, %v2544
  %v2577 = vmul.f32 %v1096, %v2545
  %v2578 = vmul.f32 %v1097, %v2546
  %v2579 = vmul.f32 %v1098, %v2547
  %v2580 = vmul.f32 %v1099, %v2548
  %v2581 = vmul.f32 %v1100, %v2549
  %v2582 = vmul.f32 %v1101, %v2550
  %v2583 = vmul.f32 %v1102, %v2551
  %v2584 = vmul.f32 %v1103, %v2552
  %v2585 = vmul.f32 %v1104, %v2553
  %v2586 = vmul.f32 %v1105, %v2554
  %v2587 = vmul.f32 %v1106, %v2555
  %v2588 = vmul.f32 %v1107, %v2556
  %v2589 = vmul.f32 %v1108, %v2557
  %v2590 = vmul.f32 %v1109, %v2558
  %v2591 = vmul.f32 %v1110, %v2559
  %v2592 = vmul.f32 %v1111, %v2560
  %v2593 = vmul.f32 %v1112, %v2561
  %v2594 = vmul.f32 %v1113, %v2562
  %v2595 = vmul.f32 %v1114, %v2563
  %v2596 = vmul.f32 %v1115, %v2564
  %v2597 = vmul.f32 %v1116, %v2565
  %v2598 = vmul.f32 %v1117, %v2566
  %v2599 = vmul.f32 %v1118, %v2567
  %v2600 = vmul.f32 %v1119, %v2568
  %v2601 = vmul.f32 %v1120, %v2569
  %v2602 = vmul.f32 %v1121, %v2570
  %v2603 = vmul.f32 %v1122, %v2571
  %v2604 = vmul.f32 %v1091, %v2572
  %v2605 = vmul.f32 %v1092, %v2573
  %v2606 = vmul.f32 %v1125, %v2542
  %v2607 = vmul.f32 %v1126, %v2543
  %v2608 = vmul.f32 %v1127, %v2544
  %v2609 = vmul.f32 %v1128, %v2545
  %v2610 = vmul.f32 %v1129, %v2546
  %v2611 = vmul.f32 %v1130, %v2547
  %v2612 = vmul.f32 %v1131, %v2548
  %v2613 = vmul.f32 %v1132, %v2549
  %v2614 = vmul.f32 %v1133, %v2550
  %v2615 = vmul.f32 %v1134, %v2551
  %v2616 = vmul.f32 %v1135, %v2552
  %v2617 = vmul.f32 %v1136, %v2553
  %v2618 = vmul.f32 %v1137, %v2554
  %v2619 = vmul.f32 %v1138, %v2555
  %v2620 = vmul.f32 %v1139, %v2556
  %v2621 = vmul.f32 %v1140, %v2557
  %v2622 = vmul.f32 %v1141, %v2558
  %v2623 = vmul.f32 %v1142, %v2559
  %v2624 = vmul.f32 %v1143, %v2560
  %v2625 = vmul.f32 %v1144, %v2561
  %v2626 = vmul.f32 %v1145, %v2562
  %v2627 = vmul.f32 %v1146, %v2563
  %v2628 = vmul.f32 %v1147, %v2564
  %v2629 = vmul.f32 %v1148, %v2565
  %v2630 = vmul.f32 %v1149, %v2566
  %v2631 = vmul.f32 %v1150, %v2567
  %v2632 = vmul.f32 %v1151, %v2568
  %v2633 = vmul.f32 %v1152, %v2569
  %v2634 = vmul.f32 %v1153, %v2570
  %v2635 = vmul.f32 %v1154, %v2571
  %v2636 = vmul.f32 %v1123, %v2572
  %v2637 = vmul.f32 %v1124, %v2573
  %v2638 = vadd.f32 %v2477, %v2574
  %v2639 = vadd.f32 %v2478, %v2575
  %v2640 = vadd.f32 %v2479, %v2576
  %v2641 = vadd.f32 %v2480, %v2577
  %v2642 = vadd.f32 %v2481, %v2578
  %v2643 = vadd.f32 %v2482, %v2579
  %v2644 = vadd.f32 %v2483, %v2580
  %v2645 = vadd.f32 %v2484, %v2581
  %v2646 = vadd.f32 %v2485, %v2582
  %v2647 = vadd.f32 %v2486, %v2583
  %v2648 = vadd.f32 %v2487, %v2584
  %v2649 = vadd.f32 %v2488, %v2585
  %v2650 = vadd.f32 %v2489, %v2586
  %v2651 = vadd.f32 %v2490, %v2587
  %v2652 = vadd.f32 %v2491, %v2588
  %v2653 = vadd.f32 %v2492, %v2589
  %v2654 = vadd.f32 %v2493, %v2590
  %v2655 = vadd.f32 %v2494, %v2591
  %v2656 = vadd.f32 %v2495, %v2592
  %v2657 = vadd.f32 %v2496, %v2593
  %v2658 = vadd.f32 %v2497, %v2594
  %v2659 = vadd.f32 %v2498, %v2595
  %v2660 = vadd.f32 %v2499, %v2596
  %v2661 = vadd.f32 %v2500, %v2597
  %v2662 = vadd.f32 %v2501, %v2598
  %v2663 = vadd.f32 %v2502, %v2599
  %v2664 = vadd.f32 %v2503, %v2600
  %v2665 = vadd.f32 %v2504, %v2601
  %v2666 = vadd.f32 %v2505, %v2602
  %v2667 = vadd.f32 %v2506, %v2603
  %v2668 = vadd.f32 %v2507, %v2604
  %v2669 = vadd.f32 %v2508, %v2605
  %v2670 = vadd.f32 %v2509, %v2606
  %v2671 = vadd.f32 %v2510, %v2607
  %v2672 = vadd.f32 %v2511, %v2608
  %v2673 = vadd.f32 %v2512, %v2609
  %v2674 = vadd.f32 %v2513, %v2610
  %v2675 = vadd.f32 %v2514, %v2611
  %v2676 = vadd.f32 %v2515, %v2612
  %v2677 = vadd.f32 %v2516, %v2613
  %v2678 = vadd.f32 %v2517, %v2614
  %v2679 = vadd.f32 %v2518, %v2615
  %v2680 = vadd.f32 %v2519, %v2616
  %v2681 = vadd.f32 %v2520, %v2617
  %v2682 = vadd.f32 %v2521, %v2618
  %v2683 = vadd.f32 %v2522, %v2619
  %v2684 = vadd.f32 %v2523, %v2620
  %v2685 = vadd.f32 %v2524, %v2621
  %v2686 = vadd.f32 %v2525, %v2622
  %v2687 = vadd.f32 %v2526, %v2623
  %v2688 = vadd.f32 %v2527, %v2624
  %v2689 = vadd.f32 %v2528, %v2625
  %v2690 = vadd.f32 %v2529, %v2626
  %v2691 = vadd.f32 %v2530, %v2627
  %v2692 = vadd.f32 %v2531, %v2628
  %v2693 = vadd.f32 %v2532, %v2629
  %v2694 = vadd.f32 %v2533, %v2630
  %v2695 = vadd.f32 %v2534, %v2631
  %v2696 = vadd.f32 %v2535, %v2632
  %v2697 = vadd.f32 %v2536, %v2633
  %v2698 = vadd.f32 %v2537, %v2634
  %v2699 = vadd.f32 %v2538, %v2635
  %v2700 = vadd.f32 %v2539, %v2636
  %v2701 = vadd.f32 %v2540, %v2637
  %s2702 = scalar_lea.vmem %s4, 2048
  %v2703 = vld [vmem:[%s2702] sm:$0xff]
  %v2704 = vld [vmem:[%s2702 + $0x8] sm:$0xff]
  %v2705 = vld [vmem:[%s2702 + $0x10] sm:$0xff]
  %v2706 = vld [vmem:[%s2702 + $0x18] sm:$0xff]
  %v2707 = vld [vmem:[%s2702 + $0x20] sm:$0xff]
  %v2708 = vld [vmem:[%s2702 + $0x28] sm:$0xff]
  %v2709 = vld [vmem:[%s2702 + $0x30] sm:$0xff]
  %v2710 = vld [vmem:[%s2702 + $0x38] sm:$0xff]
  %v2711 = vld [vmem:[%s2702 + $0x40] sm:$0xff]
  %v2712 = vld [vmem:[%s2702 + $0x48] sm:$0xff]
  %v2713 = vld [vmem:[%s2702 + $0x50] sm:$0xff]
  %v2714 = vld [vmem:[%s2702 + $0x58] sm:$0xff]
  %v2715 = vld [vmem:[%s2702 + $0x60] sm:$0xff]
  %v2716 = vld [vmem:[%s2702 + $0x68] sm:$0xff]
  %v2717 = vld [vmem:[%s2702 + $0x70] sm:$0xff]
  %v2718 = vld [vmem:[%s2702 + $0x78] sm:$0xff]
  %v2719 = vld [vmem:[%s2702 + $0x80] sm:$0xff]
  %v2720 = vld [vmem:[%s2702 + $0x88] sm:$0xff]
  %v2721 = vld [vmem:[%s2702 + $0x90] sm:$0xff]
  %v2722 = vld [vmem:[%s2702 + $0x98] sm:$0xff]
  %v2723 = vld [vmem:[%s2702 + $0xa0] sm:$0xff]
  %v2724 = vld [vmem:[%s2702 + $0xa8] sm:$0xff]
  %v2725 = vld [vmem:[%s2702 + $0xb0] sm:$0xff]
  %v2726 = vld [vmem:[%s2702 + $0xb8] sm:$0xff]
  %v2727 = vld [vmem:[%s2702 + $0xc0] sm:$0xff]
  %v2728 = vld [vmem:[%s2702 + $0xc8] sm:$0xff]
  %v2729 = vld [vmem:[%s2702 + $0xd0] sm:$0xff]
  %v2730 = vld [vmem:[%s2702 + $0xd8] sm:$0xff]
  %v2731 = vld [vmem:[%s2702 + $0xe0] sm:$0xff]
  %v2732 = vld [vmem:[%s2702 + $0xe8] sm:$0xff]
  %v2733 = vld [vmem:[%s2702 + $0xf0] sm:$0xff]
  %v2734 = vld [vmem:[%s2702 + $0xf8] sm:$0xff]
  %v2735 = vmul.f32 %v1728, %v2703
  %v2736 = vmul.f32 %v1726, %v2704
  %v2737 = vmul.f32 %v1724, %v2705
  %v2738 = vmul.f32 %v1722, %v2706
  %v2739 = vmul.f32 %v1720, %v2707
  %v2740 = vmul.f32 %v1718, %v2708
  %v2741 = vmul.f32 %v1716, %v2709
  %v2742 = vmul.f32 %v1714, %v2710
  %v2743 = vmul.f32 %v1712, %v2711
  %v2744 = vmul.f32 %v1710, %v2712
  %v2745 = vmul.f32 %v1708, %v2713
  %v2746 = vmul.f32 %v1706, %v2714
  %v2747 = vmul.f32 %v1704, %v2715
  %v2748 = vmul.f32 %v1702, %v2716
  %v2749 = vmul.f32 %v1700, %v2717
  %v2750 = vmul.f32 %v1698, %v2718
  %v2751 = vmul.f32 %v1696, %v2719
  %v2752 = vmul.f32 %v1694, %v2720
  %v2753 = vmul.f32 %v1692, %v2721
  %v2754 = vmul.f32 %v1690, %v2722
  %v2755 = vmul.f32 %v1688, %v2723
  %v2756 = vmul.f32 %v1686, %v2724
  %v2757 = vmul.f32 %v1684, %v2725
  %v2758 = vmul.f32 %v1682, %v2726
  %v2759 = vmul.f32 %v1680, %v2727
  %v2760 = vmul.f32 %v1678, %v2728
  %v2761 = vmul.f32 %v1676, %v2729
  %v2762 = vmul.f32 %v1674, %v2730
  %v2763 = vmul.f32 %v1672, %v2731
  %v2764 = vmul.f32 %v1734, %v2732
  %v2765 = vmul.f32 %v1732, %v2733
  %v2766 = vmul.f32 %v1730, %v2734
  %v2767 = vmul.f32 %v1729, %v2703
  %v2768 = vmul.f32 %v1727, %v2704
  %v2769 = vmul.f32 %v1725, %v2705
  %v2770 = vmul.f32 %v1723, %v2706
  %v2771 = vmul.f32 %v1721, %v2707
  %v2772 = vmul.f32 %v1719, %v2708
  %v2773 = vmul.f32 %v1717, %v2709
  %v2774 = vmul.f32 %v1715, %v2710
  %v2775 = vmul.f32 %v1713, %v2711
  %v2776 = vmul.f32 %v1711, %v2712
  %v2777 = vmul.f32 %v1709, %v2713
  %v2778 = vmul.f32 %v1707, %v2714
  %v2779 = vmul.f32 %v1705, %v2715
  %v2780 = vmul.f32 %v1703, %v2716
  %v2781 = vmul.f32 %v1701, %v2717
  %v2782 = vmul.f32 %v1699, %v2718
  %v2783 = vmul.f32 %v1697, %v2719
  %v2784 = vmul.f32 %v1695, %v2720
  %v2785 = vmul.f32 %v1693, %v2721
  %v2786 = vmul.f32 %v1691, %v2722
  %v2787 = vmul.f32 %v1689, %v2723
  %v2788 = vmul.f32 %v1687, %v2724
  %v2789 = vmul.f32 %v1685, %v2725
  %v2790 = vmul.f32 %v1683, %v2726
  %v2791 = vmul.f32 %v1681, %v2727
  %v2792 = vmul.f32 %v1679, %v2728
  %v2793 = vmul.f32 %v1677, %v2729
  %v2794 = vmul.f32 %v1675, %v2730
  %v2795 = vmul.f32 %v1673, %v2731
  %v2796 = vmul.f32 %v1735, %v2732
  %v2797 = vmul.f32 %v1733, %v2733
  %v2798 = vmul.f32 %v1731, %v2734
  %v2799 = vadd.f32 %v2638, %v2735
  %v2800 = vadd.f32 %v2639, %v2736
  %v2801 = vadd.f32 %v2640, %v2737
  %v2802 = vadd.f32 %v2641, %v2738
  %v2803 = vadd.f32 %v2642, %v2739
  %v2804 = vadd.f32 %v2643, %v2740
  %v2805 = vadd.f32 %v2644, %v2741
  %v2806 = vadd.f32 %v2645, %v2742
  %v2807 = vadd.f32 %v2646, %v2743
  %v2808 = vadd.f32 %v2647, %v2744
  %v2809 = vadd.f32 %v2648, %v2745
  %v2810 = vadd.f32 %v2649, %v2746
  %v2811 = vadd.f32 %v2650, %v2747
  %v2812 = vadd.f32 %v2651, %v2748
  %v2813 = vadd.f32 %v2652, %v2749
  %v2814 = vadd.f32 %v2653, %v2750
  %v2815 = vadd.f32 %v2654, %v2751
  %v2816 = vadd.f32 %v2655, %v2752
  %v2817 = vadd.f32 %v2656, %v2753
  %v2818 = vadd.f32 %v2657, %v2754
  %v2819 = vadd.f32 %v2658, %v2755
  %v2820 = vadd.f32 %v2659, %v2756
  %v2821 = vadd.f32 %v2660, %v2757
  %v2822 = vadd.f32 %v2661, %v2758
  %v2823 = vadd.f32 %v2662, %v2759
  %v2824 = vadd.f32 %v2663, %v2760
  %v2825 = vadd.f32 %v2664, %v2761
  %v2826 = vadd.f32 %v2665, %v2762
  %v2827 = vadd.f32 %v2666, %v2763
  %v2828 = vadd.f32 %v2667, %v2764
  %v2829 = vadd.f32 %v2668, %v2765
  %v2830 = vadd.f32 %v2669, %v2766
  %v2831 = vadd.f32 %v2670, %v2767
  %v2832 = vadd.f32 %v2671, %v2768
  %v2833 = vadd.f32 %v2672, %v2769
  %v2834 = vadd.f32 %v2673, %v2770
  %v2835 = vadd.f32 %v2674, %v2771
  %v2836 = vadd.f32 %v2675, %v2772
  %v2837 = vadd.f32 %v2676, %v2773
  %v2838 = vadd.f32 %v2677, %v2774
  %v2839 = vadd.f32 %v2678, %v2775
  %v2840 = vadd.f32 %v2679, %v2776
  %v2841 = vadd.f32 %v2680, %v2777
  %v2842 = vadd.f32 %v2681, %v2778
  %v2843 = vadd.f32 %v2682, %v2779
  %v2844 = vadd.f32 %v2683, %v2780
  %v2845 = vadd.f32 %v2684, %v2781
  %v2846 = vadd.f32 %v2685, %v2782
  %v2847 = vadd.f32 %v2686, %v2783
  %v2848 = vadd.f32 %v2687, %v2784
  %v2849 = vadd.f32 %v2688, %v2785
  %v2850 = vadd.f32 %v2689, %v2786
  %v2851 = vadd.f32 %v2690, %v2787
  %v2852 = vadd.f32 %v2691, %v2788
  %v2853 = vadd.f32 %v2692, %v2789
  %v2854 = vadd.f32 %v2693, %v2790
  %v2855 = vadd.f32 %v2694, %v2791
  %v2856 = vadd.f32 %v2695, %v2792
  %v2857 = vadd.f32 %v2696, %v2793
  %v2858 = vadd.f32 %v2697, %v2794
  %v2859 = vadd.f32 %v2698, %v2795
  %v2860 = vadd.f32 %v2699, %v2796
  %v2861 = vadd.f32 %v2700, %v2797
  %v2862 = vadd.f32 %v2701, %v2798
  %v2863 = vld [vmem:[%s5] sm:$0x1]
  %v2864 = vld [vmem:[%s6] sm:$0x1]
  %v2865 = vsel %vm548, %v2799, 0.0
  %v2866 = vsel %vm548, %v2800, 0.0
  %v2867 = vadd.f32 %v2865, %v2866
  %v2868 = vsel %vm548, %v2801, 0.0
  %v2869 = vadd.f32 %v2867, %v2868
  %v2870 = vsel %vm548, %v2802, 0.0
  %v2871 = vadd.f32 %v2869, %v2870
  %v2872 = vsel %vm548, %v2803, 0.0
  %v2873 = vadd.f32 %v2871, %v2872
  %v2874 = vsel %vm548, %v2804, 0.0
  %v2875 = vadd.f32 %v2873, %v2874
  %v2876 = vsel %vm548, %v2805, 0.0
  %v2877 = vadd.f32 %v2875, %v2876
  %v2878 = vsel %vm548, %v2806, 0.0
  %v2879 = vadd.f32 %v2877, %v2878
  %v2880 = vsel %vm548, %v2807, 0.0
  %v2881 = vadd.f32 %v2879, %v2880
  %v2882 = vsel %vm548, %v2808, 0.0
  %v2883 = vadd.f32 %v2881, %v2882
  %v2884 = vsel %vm548, %v2809, 0.0
  %v2885 = vadd.f32 %v2883, %v2884
  %v2886 = vsel %vm548, %v2810, 0.0
  %v2887 = vadd.f32 %v2885, %v2886
  %v2888 = vsel %vm548, %v2811, 0.0
  %v2889 = vadd.f32 %v2887, %v2888
  %v2890 = vsel %vm548, %v2812, 0.0
  %v2891 = vadd.f32 %v2889, %v2890
  %v2892 = vsel %vm548, %v2813, 0.0
  %v2893 = vadd.f32 %v2891, %v2892
  %v2894 = vsel %vm548, %v2814, 0.0
  %v2895 = vadd.f32 %v2893, %v2894
  %v2896 = vsel %vm548, %v2815, 0.0
  %v2897 = vadd.f32 %v2895, %v2896
  %v2898 = vsel %vm548, %v2816, 0.0
  %v2899 = vadd.f32 %v2897, %v2898
  %v2900 = vsel %vm548, %v2817, 0.0
  %v2901 = vadd.f32 %v2899, %v2900
  %v2902 = vsel %vm548, %v2818, 0.0
  %v2903 = vadd.f32 %v2901, %v2902
  %v2904 = vsel %vm548, %v2819, 0.0
  %v2905 = vadd.f32 %v2903, %v2904
  %v2906 = vsel %vm548, %v2820, 0.0
  %v2907 = vadd.f32 %v2905, %v2906
  %v2908 = vsel %vm548, %v2821, 0.0
  %v2909 = vadd.f32 %v2907, %v2908
  %v2910 = vsel %vm548, %v2822, 0.0
  %v2911 = vadd.f32 %v2909, %v2910
  %v2912 = vsel %vm548, %v2823, 0.0
  %v2913 = vadd.f32 %v2911, %v2912
  %v2914 = vsel %vm548, %v2824, 0.0
  %v2915 = vadd.f32 %v2913, %v2914
  %v2916 = vsel %vm548, %v2825, 0.0
  %v2917 = vadd.f32 %v2915, %v2916
  %v2918 = vsel %vm548, %v2826, 0.0
  %v2919 = vadd.f32 %v2917, %v2918
  %v2920 = vsel %vm548, %v2827, 0.0
  %v2921 = vadd.f32 %v2919, %v2920
  %v2922 = vsel %vm548, %v2828, 0.0
  %v2923 = vadd.f32 %v2921, %v2922
  %v2924 = vsel %vm548, %v2829, 0.0
  %v2925 = vadd.f32 %v2923, %v2924
  %v2926 = vsel %vm548, %v2830, 0.0
  %v2927 = vadd.f32 %v2925, %v2926
  %v2928 = vsel %vm548, %v2831, 0.0
  %v2929 = vadd.f32 %v2927, %v2928
  %v2930 = vsel %vm548, %v2832, 0.0
  %v2931 = vadd.f32 %v2929, %v2930
  %v2932 = vsel %vm548, %v2833, 0.0
  %v2933 = vadd.f32 %v2931, %v2932
  %v2934 = vsel %vm548, %v2834, 0.0
  %v2935 = vadd.f32 %v2933, %v2934
  %v2936 = vsel %vm548, %v2835, 0.0
  %v2937 = vadd.f32 %v2935, %v2936
  %v2938 = vsel %vm548, %v2836, 0.0
  %v2939 = vadd.f32 %v2937, %v2938
  %v2940 = vsel %vm548, %v2837, 0.0
  %v2941 = vadd.f32 %v2939, %v2940
  %v2942 = vsel %vm548, %v2838, 0.0
  %v2943 = vadd.f32 %v2941, %v2942
  %v2944 = vsel %vm548, %v2839, 0.0
  %v2945 = vadd.f32 %v2943, %v2944
  %v2946 = vsel %vm548, %v2840, 0.0
  %v2947 = vadd.f32 %v2945, %v2946
  %v2948 = vsel %vm548, %v2841, 0.0
  %v2949 = vadd.f32 %v2947, %v2948
  %v2950 = vsel %vm548, %v2842, 0.0
  %v2951 = vadd.f32 %v2949, %v2950
  %v2952 = vsel %vm548, %v2843, 0.0
  %v2953 = vadd.f32 %v2951, %v2952
  %v2954 = vsel %vm548, %v2844, 0.0
  %v2955 = vadd.f32 %v2953, %v2954
  %v2956 = vsel %vm548, %v2845, 0.0
  %v2957 = vadd.f32 %v2955, %v2956
  %v2958 = vsel %vm548, %v2846, 0.0
  %v2959 = vadd.f32 %v2957, %v2958
  %v2960 = vsel %vm548, %v2847, 0.0
  %v2961 = vadd.f32 %v2959, %v2960
  %v2962 = vsel %vm548, %v2848, 0.0
  %v2963 = vadd.f32 %v2961, %v2962
  %v2964 = vsel %vm548, %v2849, 0.0
  %v2965 = vadd.f32 %v2963, %v2964
  %v2966 = vsel %vm548, %v2850, 0.0
  %v2967 = vadd.f32 %v2965, %v2966
  %v2968 = vsel %vm548, %v2851, 0.0
  %v2969 = vadd.f32 %v2967, %v2968
  %v2970 = vsel %vm548, %v2852, 0.0
  %v2971 = vadd.f32 %v2969, %v2970
  %v2972 = vsel %vm548, %v2853, 0.0
  %v2973 = vadd.f32 %v2971, %v2972
  %v2974 = vsel %vm548, %v2854, 0.0
  %v2975 = vadd.f32 %v2973, %v2974
  %v2976 = vsel %vm548, %v2855, 0.0
  %v2977 = vadd.f32 %v2975, %v2976
  %v2978 = vsel %vm548, %v2856, 0.0
  %v2979 = vadd.f32 %v2977, %v2978
  %v2980 = vsel %vm548, %v2857, 0.0
  %v2981 = vadd.f32 %v2979, %v2980
  %v2982 = vsel %vm548, %v2858, 0.0
  %v2983 = vadd.f32 %v2981, %v2982
  %v2984 = vsel %vm548, %v2859, 0.0
  %v2985 = vadd.f32 %v2983, %v2984
  %v2986 = vsel %vm548, %v2860, 0.0
  %v2987 = vadd.f32 %v2985, %v2986
  %v2988 = vsel %vm548, %v2861, 0.0
  %v2989 = vadd.f32 %v2987, %v2988
  %v2990 = vsel %vm548, %v2862, 0.0
  %v2991 = vadd.f32 %v2989, %v2990
  %v2992 = vrot.slane %v2991, 4
  %v2993 = vadd.f32 %v2991, %v2992
  %v2994 = vrot.slane %v2993, 2
  %v2995 = vadd.f32 %v2993, %v2994
  %v2996 = vrot.slane %v2995, 1
  %v2997 = vadd.f32 %v2995, %v2996
  %v2998 = vmul.f32 %v2997, 0.001953125
  %v2999 = vsub.f32 %v2799, %v2998
  %v3000 = vsub.f32 %v2800, %v2998
  %v3001 = vsub.f32 %v2801, %v2998
  %v3002 = vsub.f32 %v2802, %v2998
  %v3003 = vsub.f32 %v2803, %v2998
  %v3004 = vsub.f32 %v2804, %v2998
  %v3005 = vsub.f32 %v2805, %v2998
  %v3006 = vsub.f32 %v2806, %v2998
  %v3007 = vsub.f32 %v2807, %v2998
  %v3008 = vsub.f32 %v2808, %v2998
  %v3009 = vsub.f32 %v2809, %v2998
  %v3010 = vsub.f32 %v2810, %v2998
  %v3011 = vsub.f32 %v2811, %v2998
  %v3012 = vsub.f32 %v2812, %v2998
  %v3013 = vsub.f32 %v2813, %v2998
  %v3014 = vsub.f32 %v2814, %v2998
  %v3015 = vsub.f32 %v2815, %v2998
  %v3016 = vsub.f32 %v2816, %v2998
  %v3017 = vsub.f32 %v2817, %v2998
  %v3018 = vsub.f32 %v2818, %v2998
  %v3019 = vsub.f32 %v2819, %v2998
  %v3020 = vsub.f32 %v2820, %v2998
  %v3021 = vsub.f32 %v2821, %v2998
  %v3022 = vsub.f32 %v2822, %v2998
  %v3023 = vsub.f32 %v2823, %v2998
  %v3024 = vsub.f32 %v2824, %v2998
  %v3025 = vsub.f32 %v2825, %v2998
  %v3026 = vsub.f32 %v2826, %v2998
  %v3027 = vsub.f32 %v2827, %v2998
  %v3028 = vsub.f32 %v2828, %v2998
  %v3029 = vsub.f32 %v2829, %v2998
  %v3030 = vsub.f32 %v2830, %v2998
  %v3031 = vsub.f32 %v2831, %v2998
  %v3032 = vsub.f32 %v2832, %v2998
  %v3033 = vsub.f32 %v2833, %v2998
  %v3034 = vsub.f32 %v2834, %v2998
  %v3035 = vsub.f32 %v2835, %v2998
  %v3036 = vsub.f32 %v2836, %v2998
  %v3037 = vsub.f32 %v2837, %v2998
  %v3038 = vsub.f32 %v2838, %v2998
  %v3039 = vsub.f32 %v2839, %v2998
  %v3040 = vsub.f32 %v2840, %v2998
  %v3041 = vsub.f32 %v2841, %v2998
  %v3042 = vsub.f32 %v2842, %v2998
  %v3043 = vsub.f32 %v2843, %v2998
  %v3044 = vsub.f32 %v2844, %v2998
  %v3045 = vsub.f32 %v2845, %v2998
  %v3046 = vsub.f32 %v2846, %v2998
  %v3047 = vsub.f32 %v2847, %v2998
  %v3048 = vsub.f32 %v2848, %v2998
  %v3049 = vsub.f32 %v2849, %v2998
  %v3050 = vsub.f32 %v2850, %v2998
  %v3051 = vsub.f32 %v2851, %v2998
  %v3052 = vsub.f32 %v2852, %v2998
  %v3053 = vsub.f32 %v2853, %v2998
  %v3054 = vsub.f32 %v2854, %v2998
  %v3055 = vsub.f32 %v2855, %v2998
  %v3056 = vsub.f32 %v2856, %v2998
  %v3057 = vsub.f32 %v2857, %v2998
  %v3058 = vsub.f32 %v2858, %v2998
  %v3059 = vsub.f32 %v2859, %v2998
  %v3060 = vsub.f32 %v2860, %v2998
  %v3061 = vsub.f32 %v2861, %v2998
  %v3062 = vsub.f32 %v2862, %v2998
  %v3063 = vmul.f32 %v2999, %v2999
  %v3064 = vmul.f32 %v3000, %v3000
  %v3065 = vmul.f32 %v3001, %v3001
  %v3066 = vmul.f32 %v3002, %v3002
  %v3067 = vmul.f32 %v3003, %v3003
  %v3068 = vmul.f32 %v3004, %v3004
  %v3069 = vmul.f32 %v3005, %v3005
  %v3070 = vmul.f32 %v3006, %v3006
  %v3071 = vmul.f32 %v3007, %v3007
  %v3072 = vmul.f32 %v3008, %v3008
  %v3073 = vmul.f32 %v3009, %v3009
  %v3074 = vmul.f32 %v3010, %v3010
  %v3075 = vmul.f32 %v3011, %v3011
  %v3076 = vmul.f32 %v3012, %v3012
  %v3077 = vmul.f32 %v3013, %v3013
  %v3078 = vmul.f32 %v3014, %v3014
  %v3079 = vmul.f32 %v3015, %v3015
  %v3080 = vmul.f32 %v3016, %v3016
  %v3081 = vmul.f32 %v3017, %v3017
  %v3082 = vmul.f32 %v3018, %v3018
  %v3083 = vmul.f32 %v3019, %v3019
  %v3084 = vmul.f32 %v3020, %v3020
  %v3085 = vmul.f32 %v3021, %v3021
  %v3086 = vmul.f32 %v3022, %v3022
  %v3087 = vmul.f32 %v3023, %v3023
  %v3088 = vmul.f32 %v3024, %v3024
  %v3089 = vmul.f32 %v3025, %v3025
  %v3090 = vmul.f32 %v3026, %v3026
  %v3091 = vmul.f32 %v3027, %v3027
  %v3092 = vmul.f32 %v3028, %v3028
  %v3093 = vmul.f32 %v3029, %v3029
  %v3094 = vmul.f32 %v3030, %v3030
  %v3095 = vmul.f32 %v3031, %v3031
  %v3096 = vmul.f32 %v3032, %v3032
  %v3097 = vmul.f32 %v3033, %v3033
  %v3098 = vmul.f32 %v3034, %v3034
  %v3099 = vmul.f32 %v3035, %v3035
  %v3100 = vmul.f32 %v3036, %v3036
  %v3101 = vmul.f32 %v3037, %v3037
  %v3102 = vmul.f32 %v3038, %v3038
  %v3103 = vmul.f32 %v3039, %v3039
  %v3104 = vmul.f32 %v3040, %v3040
  %v3105 = vmul.f32 %v3041, %v3041
  %v3106 = vmul.f32 %v3042, %v3042
  %v3107 = vmul.f32 %v3043, %v3043
  %v3108 = vmul.f32 %v3044, %v3044
  %v3109 = vmul.f32 %v3045, %v3045
  %v3110 = vmul.f32 %v3046, %v3046
  %v3111 = vmul.f32 %v3047, %v3047
  %v3112 = vmul.f32 %v3048, %v3048
  %v3113 = vmul.f32 %v3049, %v3049
  %v3114 = vmul.f32 %v3050, %v3050
  %v3115 = vmul.f32 %v3051, %v3051
  %v3116 = vmul.f32 %v3052, %v3052
  %v3117 = vmul.f32 %v3053, %v3053
  %v3118 = vmul.f32 %v3054, %v3054
  %v3119 = vmul.f32 %v3055, %v3055
  %v3120 = vmul.f32 %v3056, %v3056
  %v3121 = vmul.f32 %v3057, %v3057
  %v3122 = vmul.f32 %v3058, %v3058
  %v3123 = vmul.f32 %v3059, %v3059
  %v3124 = vmul.f32 %v3060, %v3060
  %v3125 = vmul.f32 %v3061, %v3061
  %v3126 = vmul.f32 %v3062, %v3062
  %v3127 = vsel %vm548, %v3063, 0.0
  %v3128 = vsel %vm548, %v3064, 0.0
  %v3129 = vadd.f32 %v3127, %v3128
  %v3130 = vsel %vm548, %v3065, 0.0
  %v3131 = vadd.f32 %v3129, %v3130
  %v3132 = vsel %vm548, %v3066, 0.0
  %v3133 = vadd.f32 %v3131, %v3132
  %v3134 = vsel %vm548, %v3067, 0.0
  %v3135 = vadd.f32 %v3133, %v3134
  %v3136 = vsel %vm548, %v3068, 0.0
  %v3137 = vadd.f32 %v3135, %v3136
  %v3138 = vsel %vm548, %v3069, 0.0
  %v3139 = vadd.f32 %v3137, %v3138
  %v3140 = vsel %vm548, %v3070, 0.0
  %v3141 = vadd.f32 %v3139, %v3140
  %v3142 = vsel %vm548, %v3071, 0.0
  %v3143 = vadd.f32 %v3141, %v3142
  %v3144 = vsel %vm548, %v3072, 0.0
  %v3145 = vadd.f32 %v3143, %v3144
  %v3146 = vsel %vm548, %v3073, 0.0
  %v3147 = vadd.f32 %v3145, %v3146
  %v3148 = vsel %vm548, %v3074, 0.0
  %v3149 = vadd.f32 %v3147, %v3148
  %v3150 = vsel %vm548, %v3075, 0.0
  %v3151 = vadd.f32 %v3149, %v3150
  %v3152 = vsel %vm548, %v3076, 0.0
  %v3153 = vadd.f32 %v3151, %v3152
  %v3154 = vsel %vm548, %v3077, 0.0
  %v3155 = vadd.f32 %v3153, %v3154
  %v3156 = vsel %vm548, %v3078, 0.0
  %v3157 = vadd.f32 %v3155, %v3156
  %v3158 = vsel %vm548, %v3079, 0.0
  %v3159 = vadd.f32 %v3157, %v3158
  %v3160 = vsel %vm548, %v3080, 0.0
  %v3161 = vadd.f32 %v3159, %v3160
  %v3162 = vsel %vm548, %v3081, 0.0
  %v3163 = vadd.f32 %v3161, %v3162
  %v3164 = vsel %vm548, %v3082, 0.0
  %v3165 = vadd.f32 %v3163, %v3164
  %v3166 = vsel %vm548, %v3083, 0.0
  %v3167 = vadd.f32 %v3165, %v3166
  %v3168 = vsel %vm548, %v3084, 0.0
  %v3169 = vadd.f32 %v3167, %v3168
  %v3170 = vsel %vm548, %v3085, 0.0
  %v3171 = vadd.f32 %v3169, %v3170
  %v3172 = vsel %vm548, %v3086, 0.0
  %v3173 = vadd.f32 %v3171, %v3172
  %v3174 = vsel %vm548, %v3087, 0.0
  %v3175 = vadd.f32 %v3173, %v3174
  %v3176 = vsel %vm548, %v3088, 0.0
  %v3177 = vadd.f32 %v3175, %v3176
  %v3178 = vsel %vm548, %v3089, 0.0
  %v3179 = vadd.f32 %v3177, %v3178
  %v3180 = vsel %vm548, %v3090, 0.0
  %v3181 = vadd.f32 %v3179, %v3180
  %v3182 = vsel %vm548, %v3091, 0.0
  %v3183 = vadd.f32 %v3181, %v3182
  %v3184 = vsel %vm548, %v3092, 0.0
  %v3185 = vadd.f32 %v3183, %v3184
  %v3186 = vsel %vm548, %v3093, 0.0
  %v3187 = vadd.f32 %v3185, %v3186
  %v3188 = vsel %vm548, %v3094, 0.0
  %v3189 = vadd.f32 %v3187, %v3188
  %v3190 = vsel %vm548, %v3095, 0.0
  %v3191 = vadd.f32 %v3189, %v3190
  %v3192 = vsel %vm548, %v3096, 0.0
  %v3193 = vadd.f32 %v3191, %v3192
  %v3194 = vsel %vm548, %v3097, 0.0
  %v3195 = vadd.f32 %v3193, %v3194
  %v3196 = vsel %vm548, %v3098, 0.0
  %v3197 = vadd.f32 %v3195, %v3196
  %v3198 = vsel %vm548, %v3099, 0.0
  %v3199 = vadd.f32 %v3197, %v3198
  %v3200 = vsel %vm548, %v3100, 0.0
  %v3201 = vadd.f32 %v3199, %v3200
  %v3202 = vsel %vm548, %v3101, 0.0
  %v3203 = vadd.f32 %v3201, %v3202
  %v3204 = vsel %vm548, %v3102, 0.0
  %v3205 = vadd.f32 %v3203, %v3204
  %v3206 = vsel %vm548, %v3103, 0.0
  %v3207 = vadd.f32 %v3205, %v3206
  %v3208 = vsel %vm548, %v3104, 0.0
  %v3209 = vadd.f32 %v3207, %v3208
  %v3210 = vsel %vm548, %v3105, 0.0
  %v3211 = vadd.f32 %v3209, %v3210
  %v3212 = vsel %vm548, %v3106, 0.0
  %v3213 = vadd.f32 %v3211, %v3212
  %v3214 = vsel %vm548, %v3107, 0.0
  %v3215 = vadd.f32 %v3213, %v3214
  %v3216 = vsel %vm548, %v3108, 0.0
  %v3217 = vadd.f32 %v3215, %v3216
  %v3218 = vsel %vm548, %v3109, 0.0
  %v3219 = vadd.f32 %v3217, %v3218
  %v3220 = vsel %vm548, %v3110, 0.0
  %v3221 = vadd.f32 %v3219, %v3220
  %v3222 = vsel %vm548, %v3111, 0.0
  %v3223 = vadd.f32 %v3221, %v3222
  %v3224 = vsel %vm548, %v3112, 0.0
  %v3225 = vadd.f32 %v3223, %v3224
  %v3226 = vsel %vm548, %v3113, 0.0
  %v3227 = vadd.f32 %v3225, %v3226
  %v3228 = vsel %vm548, %v3114, 0.0
  %v3229 = vadd.f32 %v3227, %v3228
  %v3230 = vsel %vm548, %v3115, 0.0
  %v3231 = vadd.f32 %v3229, %v3230
  %v3232 = vsel %vm548, %v3116, 0.0
  %v3233 = vadd.f32 %v3231, %v3232
  %v3234 = vsel %vm548, %v3117, 0.0
  %v3235 = vadd.f32 %v3233, %v3234
  %v3236 = vsel %vm548, %v3118, 0.0
  %v3237 = vadd.f32 %v3235, %v3236
  %v3238 = vsel %vm548, %v3119, 0.0
  %v3239 = vadd.f32 %v3237, %v3238
  %v3240 = vsel %vm548, %v3120, 0.0
  %v3241 = vadd.f32 %v3239, %v3240
  %v3242 = vsel %vm548, %v3121, 0.0
  %v3243 = vadd.f32 %v3241, %v3242
  %v3244 = vsel %vm548, %v3122, 0.0
  %v3245 = vadd.f32 %v3243, %v3244
  %v3246 = vsel %vm548, %v3123, 0.0
  %v3247 = vadd.f32 %v3245, %v3246
  %v3248 = vsel %vm548, %v3124, 0.0
  %v3249 = vadd.f32 %v3247, %v3248
  %v3250 = vsel %vm548, %v3125, 0.0
  %v3251 = vadd.f32 %v3249, %v3250
  %v3252 = vsel %vm548, %v3126, 0.0
  %v3253 = vadd.f32 %v3251, %v3252
  %v3254 = vrot.slane %v3253, 4
  %v3255 = vadd.f32 %v3253, %v3254
  %v3256 = vrot.slane %v3255, 2
  %v3257 = vadd.f32 %v3255, %v3256
  %v3258 = vrot.slane %v3257, 1
  %v3259 = vadd.f32 %v3257, %v3258
  %v3260 = vmul.f32 %v3259, 0.001953125
  %v3261 = vadd.f32 %v3260, 1e-05
  %v3262 = vrsqrt.pop %v3261
  %v3263 = vmul.f32 %v3262, %v3261
  %v3264 = vmul.f32 %v3263, %v3262
  %v3265 = vmul.f32 0.5, %v3264
  %v3266 = vsub.f32 1.5, %v3265
  %v3267 = vmul.f32 %v3262, %v3266
  %vm3268 = vweird.f32 %v3261
  %vm3269 = vweird.f32 %v3262
  %vm3270 = vmor %vm3268, %vm3269
  %v3271 = vsel %vm3270, %v3262, %v3267
  %v3272 = vmul.f32 %v2863, %v3271
  %v3274 = vperm.slane %v3272, 0
  %v3276 = vmul.f32 %v2999, %v3274
  %v3277 = vmul.f32 %v3000, %v3274
  %v3278 = vmul.f32 %v3001, %v3274
  %v3279 = vmul.f32 %v3002, %v3274
  %v3280 = vmul.f32 %v3003, %v3274
  %v3281 = vmul.f32 %v3004, %v3274
  %v3282 = vmul.f32 %v3005, %v3274
  %v3283 = vmul.f32 %v3006, %v3274
  %v3284 = vmul.f32 %v3007, %v3274
  %v3285 = vmul.f32 %v3008, %v3274
  %v3286 = vmul.f32 %v3009, %v3274
  %v3287 = vmul.f32 %v3010, %v3274
  %v3288 = vmul.f32 %v3011, %v3274
  %v3289 = vmul.f32 %v3012, %v3274
  %v3290 = vmul.f32 %v3013, %v3274
  %v3291 = vmul.f32 %v3014, %v3274
  %v3292 = vmul.f32 %v3015, %v3274
  %v3293 = vmul.f32 %v3016, %v3274
  %v3294 = vmul.f32 %v3017, %v3274
  %v3295 = vmul.f32 %v3018, %v3274
  %v3296 = vmul.f32 %v3019, %v3274
  %v3297 = vmul.f32 %v3020, %v3274
  %v3298 = vmul.f32 %v3021, %v3274
  %v3299 = vmul.f32 %v3022, %v3274
  %v3300 = vmul.f32 %v3023, %v3274
  %v3301 = vmul.f32 %v3024, %v3274
  %v3302 = vmul.f32 %v3025, %v3274
  %v3303 = vmul.f32 %v3026, %v3274
  %v3304 = vmul.f32 %v3027, %v3274
  %v3305 = vmul.f32 %v3028, %v3274
  %v3306 = vmul.f32 %v3029, %v3274
  %v3307 = vmul.f32 %v3030, %v3274
  %v3308 = vmul.f32 %v3031, %v3274
  %v3309 = vmul.f32 %v3032, %v3274
  %v3310 = vmul.f32 %v3033, %v3274
  %v3311 = vmul.f32 %v3034, %v3274
  %v3312 = vmul.f32 %v3035, %v3274
  %v3313 = vmul.f32 %v3036, %v3274
  %v3314 = vmul.f32 %v3037, %v3274
  %v3315 = vmul.f32 %v3038, %v3274
  %v3316 = vmul.f32 %v3039, %v3274
  %v3317 = vmul.f32 %v3040, %v3274
  %v3318 = vmul.f32 %v3041, %v3274
  %v3319 = vmul.f32 %v3042, %v3274
  %v3320 = vmul.f32 %v3043, %v3274
  %v3321 = vmul.f32 %v3044, %v3274
  %v3322 = vmul.f32 %v3045, %v3274
  %v3323 = vmul.f32 %v3046, %v3274
  %v3324 = vmul.f32 %v3047, %v3274
  %v3325 = vmul.f32 %v3048, %v3274
  %v3326 = vmul.f32 %v3049, %v3274
  %v3327 = vmul.f32 %v3050, %v3274
  %v3328 = vmul.f32 %v3051, %v3274
  %v3329 = vmul.f32 %v3052, %v3274
  %v3330 = vmul.f32 %v3053, %v3274
  %v3331 = vmul.f32 %v3054, %v3274
  %v3332 = vmul.f32 %v3055, %v3274
  %v3333 = vmul.f32 %v3056, %v3274
  %v3334 = vmul.f32 %v3057, %v3274
  %v3335 = vmul.f32 %v3058, %v3274
  %v3336 = vmul.f32 %v3059, %v3274
  %v3337 = vmul.f32 %v3060, %v3274
  %v3338 = vmul.f32 %v3061, %v3274
  %v3339 = vmul.f32 %v3062, %v3274
  %v3341 = vperm.slane %v2864, 0
  %v3343 = vadd.f32 %v3276, %v3341
  %v3344 = vadd.f32 %v3277, %v3341
  %v3345 = vadd.f32 %v3278, %v3341
  %v3346 = vadd.f32 %v3279, %v3341
  %v3347 = vadd.f32 %v3280, %v3341
  %v3348 = vadd.f32 %v3281, %v3341
  %v3349 = vadd.f32 %v3282, %v3341
  %v3350 = vadd.f32 %v3283, %v3341
  %v3351 = vadd.f32 %v3284, %v3341
  %v3352 = vadd.f32 %v3285, %v3341
  %v3353 = vadd.f32 %v3286, %v3341
  %v3354 = vadd.f32 %v3287, %v3341
  %v3355 = vadd.f32 %v3288, %v3341
  %v3356 = vadd.f32 %v3289, %v3341
  %v3357 = vadd.f32 %v3290, %v3341
  %v3358 = vadd.f32 %v3291, %v3341
  %v3359 = vadd.f32 %v3292, %v3341
  %v3360 = vadd.f32 %v3293, %v3341
  %v3361 = vadd.f32 %v3294, %v3341
  %v3362 = vadd.f32 %v3295, %v3341
  %v3363 = vadd.f32 %v3296, %v3341
  %v3364 = vadd.f32 %v3297, %v3341
  %v3365 = vadd.f32 %v3298, %v3341
  %v3366 = vadd.f32 %v3299, %v3341
  %v3367 = vadd.f32 %v3300, %v3341
  %v3368 = vadd.f32 %v3301, %v3341
  %v3369 = vadd.f32 %v3302, %v3341
  %v3370 = vadd.f32 %v3303, %v3341
  %v3371 = vadd.f32 %v3304, %v3341
  %v3372 = vadd.f32 %v3305, %v3341
  %v3373 = vadd.f32 %v3306, %v3341
  %v3374 = vadd.f32 %v3307, %v3341
  %v3375 = vadd.f32 %v3308, %v3341
  %v3376 = vadd.f32 %v3309, %v3341
  %v3377 = vadd.f32 %v3310, %v3341
  %v3378 = vadd.f32 %v3311, %v3341
  %v3379 = vadd.f32 %v3312, %v3341
  %v3380 = vadd.f32 %v3313, %v3341
  %v3381 = vadd.f32 %v3314, %v3341
  %v3382 = vadd.f32 %v3315, %v3341
  %v3383 = vadd.f32 %v3316, %v3341
  %v3384 = vadd.f32 %v3317, %v3341
  %v3385 = vadd.f32 %v3318, %v3341
  %v3386 = vadd.f32 %v3319, %v3341
  %v3387 = vadd.f32 %v3320, %v3341
  %v3388 = vadd.f32 %v3321, %v3341
  %v3389 = vadd.f32 %v3322, %v3341
  %v3390 = vadd.f32 %v3323, %v3341
  %v3391 = vadd.f32 %v3324, %v3341
  %v3392 = vadd.f32 %v3325, %v3341
  %v3393 = vadd.f32 %v3326, %v3341
  %v3394 = vadd.f32 %v3327, %v3341
  %v3395 = vadd.f32 %v3328, %v3341
  %v3396 = vadd.f32 %v3329, %v3341
  %v3397 = vadd.f32 %v3330, %v3341
  %v3398 = vadd.f32 %v3331, %v3341
  %v3399 = vadd.f32 %v3332, %v3341
  %v3400 = vadd.f32 %v3333, %v3341
  %v3401 = vadd.f32 %v3334, %v3341
  %v3402 = vadd.f32 %v3335, %v3341
  %v3403 = vadd.f32 %v3336, %v3341
  %v3404 = vadd.f32 %v3337, %v3341
  %v3405 = vadd.f32 %v3338, %v3341
  %v3406 = vadd.f32 %v3339, %v3341
  %v3407 = vmax.f32 %v3343, 0.0
  %v3408 = vmax.f32 %v3344, 0.0
  %v3409 = vmax.f32 %v3345, 0.0
  %v3410 = vmax.f32 %v3346, 0.0
  %v3411 = vmax.f32 %v3347, 0.0
  %v3412 = vmax.f32 %v3348, 0.0
  %v3413 = vmax.f32 %v3349, 0.0
  %v3414 = vmax.f32 %v3350, 0.0
  %v3415 = vmax.f32 %v3351, 0.0
  %v3416 = vmax.f32 %v3352, 0.0
  %v3417 = vmax.f32 %v3353, 0.0
  %v3418 = vmax.f32 %v3354, 0.0
  %v3419 = vmax.f32 %v3355, 0.0
  %v3420 = vmax.f32 %v3356, 0.0
  %v3421 = vmax.f32 %v3357, 0.0
  %v3422 = vmax.f32 %v3358, 0.0
  %v3423 = vmax.f32 %v3359, 0.0
  %v3424 = vmax.f32 %v3360, 0.0
  %v3425 = vmax.f32 %v3361, 0.0
  %v3426 = vmax.f32 %v3362, 0.0
  %v3427 = vmax.f32 %v3363, 0.0
  %v3428 = vmax.f32 %v3364, 0.0
  %v3429 = vmax.f32 %v3365, 0.0
  %v3430 = vmax.f32 %v3366, 0.0
  %v3431 = vmax.f32 %v3367, 0.0
  %v3432 = vmax.f32 %v3368, 0.0
  %v3433 = vmax.f32 %v3369, 0.0
  %v3434 = vmax.f32 %v3370, 0.0
  %v3435 = vmax.f32 %v3371, 0.0
  %v3436 = vmax.f32 %v3372, 0.0
  %v3437 = vmax.f32 %v3373, 0.0
  %v3438 = vmax.f32 %v3374, 0.0
  %v3439 = vmax.f32 %v3375, 0.0
  %v3440 = vmax.f32 %v3376, 0.0
  %v3441 = vmax.f32 %v3377, 0.0
  %v3442 = vmax.f32 %v3378, 0.0
  %v3443 = vmax.f32 %v3379, 0.0
  %v3444 = vmax.f32 %v3380, 0.0
  %v3445 = vmax.f32 %v3381, 0.0
  %v3446 = vmax.f32 %v3382, 0.0
  %v3447 = vmax.f32 %v3383, 0.0
  %v3448 = vmax.f32 %v3384, 0.0
  %v3449 = vmax.f32 %v3385, 0.0
  %v3450 = vmax.f32 %v3386, 0.0
  %v3451 = vmax.f32 %v3387, 0.0
  %v3452 = vmax.f32 %v3388, 0.0
  %v3453 = vmax.f32 %v3389, 0.0
  %v3454 = vmax.f32 %v3390, 0.0
  %v3455 = vmax.f32 %v3391, 0.0
  %v3456 = vmax.f32 %v3392, 0.0
  %v3457 = vmax.f32 %v3393, 0.0
  %v3458 = vmax.f32 %v3394, 0.0
  %v3459 = vmax.f32 %v3395, 0.0
  %v3460 = vmax.f32 %v3396, 0.0
  %v3461 = vmax.f32 %v3397, 0.0
  %v3462 = vmax.f32 %v3398, 0.0
  %v3463 = vmax.f32 %v3399, 0.0
  %v3464 = vmax.f32 %v3400, 0.0
  %v3465 = vmax.f32 %v3401, 0.0
  %v3466 = vmax.f32 %v3402, 0.0
  %v3467 = vmax.f32 %v3403, 0.0
  %v3468 = vmax.f32 %v3404, 0.0
  %v3469 = vmax.f32 %v3405, 0.0
  %v3470 = vmax.f32 %v3406, 0.0
  %v3471 = vld [vmem:[%s7] sm:$0x3]
  %v3472 = vld [vmem:[%s8] sm:$0xff]
  %v3473 = vld [vmem:[%s8 + $0x8] sm:$0x3]
  %3475 = vset.pattern.permute.xlu0 0
  %3476 = vperm.xlu0 %3475, %v3471
  %v3477 = vpop.permute.xlu0 %3476
  %v3479 = vperm.slane %v3472, 0
  %v3480 = vmul.f32 %v3477, %v3479
  %v3481 = vadd.f32 %v3480, 0.0
  %3482 = vset.pattern.permute.xlu0 1
  %3483 = vperm.xlu0 %3482, %v3471
  %v3484 = vpop.permute.xlu0 %3483
  %v3486 = vperm.slane %v3472, 1
  %v3487 = vmul.f32 %v3484, %v3486
  %v3488 = vadd.f32 %v3481, %v3487
  %3489 = vset.pattern.permute.xlu0 2
  %3490 = vperm.xlu0 %3489, %v3471
  %v3491 = vpop.permute.xlu0 %3490
  %v3493 = vperm.slane %v3472, 2
  %v3494 = vmul.f32 %v3491, %v3493
  %v3495 = vadd.f32 %v3488, %v3494
  %3496 = vset.pattern.permute.xlu0 3
  %3497 = vperm.xlu0 %3496, %v3471
  %v3498 = vpop.permute.xlu0 %3497
  %v3500 = vperm.slane %v3472, 3
  %v3501 = vmul.f32 %v3498, %v3500
  %v3502 = vadd.f32 %v3495, %v3501
  %3503 = vset.pattern.permute.xlu0 4
  %3504 = vperm.xlu0 %3503, %v3471
  %v3505 = vpop.permute.xlu0 %3504
  %v3507 = vperm.slane %v3472, 4
  %v3508 = vmul.f32 %v3505, %v3507
  %v3509 = vadd.f32 %v3502, %v3508
  %3510 = vset.pattern.permute.xlu0 5
  %3511 = vperm.xlu0 %3510, %v3471
  %v3512 = vpop.permute.xlu0 %3511
  %v3514 = vperm.slane %v3472, 5
  %v3515 = vmul.f32 %v3512, %v3514
  %v3516 = vadd.f32 %v3509, %v3515
  %3517 = vset.pattern.permute.xlu0 6
  %3518 = vperm.xlu0 %3517, %v3471
  %v3519 = vpop.permute.xlu0 %3518
  %v3521 = vperm.slane %v3472, 6
  %v3522 = vmul.f32 %v3519, %v3521
  %v3523 = vadd.f32 %v3516, %v3522
  %3524 = vset.pattern.permute.xlu0 7
  %3525 = vperm.xlu0 %3524, %v3471
  %v3526 = vpop.permute.xlu0 %3525
  %v3528 = vperm.slane %v3472, 7
  %v3529 = vmul.f32 %v3526, %v3528
  %v3530 = vadd.f32 %v3523, %v3529
  %3531 = vset.pattern.permute.xlu0 8
  %3532 = vperm.xlu0 %3531, %v3471
  %v3533 = vpop.permute.xlu0 %3532
  %v3535 = vperm.slane %v3473, 0
  %v3536 = vmul.f32 %v3533, %v3535
  %v3537 = vadd.f32 %v3530, %v3536
  %3538 = vset.pattern.permute.xlu0 9
  %3539 = vperm.xlu0 %3538, %v3471
  %v3540 = vpop.permute.xlu0 %3539
  %v3542 = vperm.slane %v3473, 1
  %v3543 = vmul.f32 %v3540, %v3542
  %v3544 = vadd.f32 %v3537, %v3543
  %v3546 = vrot.slane %v3544, 1
  %v3547 = vperm.slane %v3544, 0
  %v3548 = vperm.slane %v3546, 0
  %v3551 = vmul.f32 %v3407, %v3547
  %v3552 = vmul.f32 %v3408, %v3547
  %v3553 = vmul.f32 %v3409, %v3547
  %v3554 = vmul.f32 %v3410, %v3547
  %v3555 = vmul.f32 %v3411, %v3547
  %v3556 = vmul.f32 %v3412, %v3547
  %v3557 = vmul.f32 %v3413, %v3547
  %v3558 = vmul.f32 %v3414, %v3547
  %v3559 = vmul.f32 %v3415, %v3547
  %v3560 = vmul.f32 %v3416, %v3547
  %v3561 = vmul.f32 %v3417, %v3547
  %v3562 = vmul.f32 %v3418, %v3547
  %v3563 = vmul.f32 %v3419, %v3547
  %v3564 = vmul.f32 %v3420, %v3547
  %v3565 = vmul.f32 %v3421, %v3547
  %v3566 = vmul.f32 %v3422, %v3547
  %v3567 = vmul.f32 %v3423, %v3547
  %v3568 = vmul.f32 %v3424, %v3547
  %v3569 = vmul.f32 %v3425, %v3547
  %v3570 = vmul.f32 %v3426, %v3547
  %v3571 = vmul.f32 %v3427, %v3547
  %v3572 = vmul.f32 %v3428, %v3547
  %v3573 = vmul.f32 %v3429, %v3547
  %v3574 = vmul.f32 %v3430, %v3547
  %v3575 = vmul.f32 %v3431, %v3547
  %v3576 = vmul.f32 %v3432, %v3547
  %v3577 = vmul.f32 %v3433, %v3547
  %v3578 = vmul.f32 %v3434, %v3547
  %v3579 = vmul.f32 %v3435, %v3547
  %v3580 = vmul.f32 %v3436, %v3547
  %v3581 = vmul.f32 %v3437, %v3547
  %v3582 = vmul.f32 %v3438, %v3547
  %v3583 = vmul.f32 %v3439, %v3548
  %v3584 = vmul.f32 %v3440, %v3548
  %v3585 = vmul.f32 %v3441, %v3548
  %v3586 = vmul.f32 %v3442, %v3548
  %v3587 = vmul.f32 %v3443, %v3548
  %v3588 = vmul.f32 %v3444, %v3548
  %v3589 = vmul.f32 %v3445, %v3548
  %v3590 = vmul.f32 %v3446, %v3548
  %v3591 = vmul.f32 %v3447, %v3548
  %v3592 = vmul.f32 %v3448, %v3548
  %v3593 = vmul.f32 %v3449, %v3548
  %v3594 = vmul.f32 %v3450, %v3548
  %v3595 = vmul.f32 %v3451, %v3548
  %v3596 = vmul.f32 %v3452, %v3548
  %v3597 = vmul.f32 %v3453, %v3548
  %v3598 = vmul.f32 %v3454, %v3548
  %v3599 = vmul.f32 %v3455, %v3548
  %v3600 = vmul.f32 %v3456, %v3548
  %v3601 = vmul.f32 %v3457, %v3548
  %v3602 = vmul.f32 %v3458, %v3548
  %v3603 = vmul.f32 %v3459, %v3548
  %v3604 = vmul.f32 %v3460, %v3548
  %v3605 = vmul.f32 %v3461, %v3548
  %v3606 = vmul.f32 %v3462, %v3548
  %v3607 = vmul.f32 %v3463, %v3548
  %v3608 = vmul.f32 %v3464, %v3548
  %v3609 = vmul.f32 %v3465, %v3548
  %v3610 = vmul.f32 %v3466, %v3548
  %v3611 = vmul.f32 %v3467, %v3548
  %v3612 = vmul.f32 %v3468, %v3548
  %v3613 = vmul.f32 %v3469, %v3548
  %v3614 = vmul.f32 %v3470, %v3548
  %v3615 = vpack.c.bf16 %v3552, %v3551
  %v3616 = vpack.c.bf16 %v3554, %v3553
  %v3617 = vpack.c.bf16 %v3556, %v3555
  %v3618 = vpack.c.bf16 %v3558, %v3557
  %v3619 = vpack.c.bf16 %v3560, %v3559
  %v3620 = vpack.c.bf16 %v3562, %v3561
  %v3621 = vpack.c.bf16 %v3564, %v3563
  %v3622 = vpack.c.bf16 %v3566, %v3565
  %v3623 = vpack.c.bf16 %v3568, %v3567
  %v3624 = vpack.c.bf16 %v3570, %v3569
  %v3625 = vpack.c.bf16 %v3572, %v3571
  %v3626 = vpack.c.bf16 %v3574, %v3573
  %v3627 = vpack.c.bf16 %v3576, %v3575
  %v3628 = vpack.c.bf16 %v3578, %v3577
  %v3629 = vpack.c.bf16 %v3580, %v3579
  %v3630 = vpack.c.bf16 %v3582, %v3581
  %v3631 = vpack.c.bf16 %v3584, %v3583
  %v3632 = vpack.c.bf16 %v3586, %v3585
  %v3633 = vpack.c.bf16 %v3588, %v3587
  %v3634 = vpack.c.bf16 %v3590, %v3589
  %v3635 = vpack.c.bf16 %v3592, %v3591
  %v3636 = vpack.c.bf16 %v3594, %v3593
  %v3637 = vpack.c.bf16 %v3596, %v3595
  %v3638 = vpack.c.bf16 %v3598, %v3597
  %v3639 = vpack.c.bf16 %v3600, %v3599
  %v3640 = vpack.c.bf16 %v3602, %v3601
  %v3641 = vpack.c.bf16 %v3604, %v3603
  %v3642 = vpack.c.bf16 %v3606, %v3605
  %v3643 = vpack.c.bf16 %v3608, %v3607
  %v3644 = vpack.c.bf16 %v3610, %v3609
  %v3645 = vpack.c.bf16 %v3612, %v3611
  %v3646 = vpack.c.bf16 %v3614, %v3613
  %v3647 = vld [vmem:[%s9] sm:$0xf]
  %v3649 = vsel %vm548, %v3615, 0
  %v3652 = vsel %vm548, %v3616, 0
  %v3655 = vsel %vm548, %v3617, 0
  %v3658 = vsel %vm548, %v3618, 0
  %v3661 = vsel %vm548, %v3619, 0
  %v3664 = vsel %vm548, %v3620, 0
  %v3667 = vsel %vm548, %v3621, 0
  %v3670 = vsel %vm548, %v3622, 0
  %v3673 = vsel %vm548, %v3623, 0
  %v3676 = vsel %vm548, %v3624, 0
  %v3679 = vsel %vm548, %v3625, 0
  %v3682 = vsel %vm548, %v3626, 0
  %v3685 = vsel %vm548, %v3627, 0
  %v3688 = vsel %vm548, %v3628, 0
  %v3691 = vsel %vm548, %v3629, 0
  %v3694 = vsel %vm548, %v3630, 0
  %v3697 = vsel %vm548, %v3631, 0
  %v3700 = vsel %vm548, %v3632, 0
  %v3703 = vsel %vm548, %v3633, 0
  %v3706 = vsel %vm548, %v3634, 0
  %v3709 = vsel %vm548, %v3635, 0
  %v3712 = vsel %vm548, %v3636, 0
  %v3715 = vsel %vm548, %v3637, 0
  %v3718 = vsel %vm548, %v3638, 0
  %v3721 = vsel %vm548, %v3639, 0
  %v3724 = vsel %vm548, %v3640, 0
  %v3727 = vsel %vm548, %v3641, 0
  %v3730 = vsel %vm548, %v3642, 0
  %v3733 = vsel %vm548, %v3643, 0
  %v3736 = vsel %vm548, %v3644, 0
  %v3739 = vsel %vm548, %v3645, 0
  %v3742 = vsel %vm548, %v3646, 0
  %vm3744 = vcmask 1043456
  %v3746 = vsel %vm3744, %v3647, 0
  %3748 = vmatpush.bf16.msra.mxu0 0
  %3749 = vmatpush.bf16.msra.mxu0 0
  %3750 = vmatpush.bf16.msra.mxu0 0
  %3751 = vmatpush.bf16.msra.mxu0 0
  %3752 = vmatpush.bf16.msra.mxu0 0
  %3753 = vmatpush.bf16.msra.mxu0 0
  %3754 = vmatpush.bf16.msra.mxu0 0
  %3755 = vmatpush.bf16.msra.mxu0 %v3746
  %3756 = vmatmul.bf16.gmra.mxu0 %v3649
  %v3757 = vpop.f32.mrf.mxu0
  %v3758 = vadd.f32 0.0, %v3757
  %v3759 = vpop.f32.mrf.mxu0
  %v3760 = vadd.f32 0.0, %v3759
  %3761 = vmatmul.bf16.gmra.mxu0 %v3652
  %v3762 = vpop.f32.mrf.mxu0
  %v3763 = vadd.f32 0.0, %v3762
  %v3764 = vpop.f32.mrf.mxu0
  %v3765 = vadd.f32 0.0, %v3764
  %3766 = vmatmul.bf16.gmra.mxu0 %v3655
  %v3767 = vpop.f32.mrf.mxu0
  %v3768 = vadd.f32 0.0, %v3767
  %v3769 = vpop.f32.mrf.mxu0
  %v3770 = vadd.f32 0.0, %v3769
  %3771 = vmatmul.bf16.gmra.mxu0 %v3658
  %v3772 = vpop.f32.mrf.mxu0
  %v3773 = vadd.f32 0.0, %v3772
  %v3774 = vpop.f32.mrf.mxu0
  %v3775 = vadd.f32 0.0, %v3774
  %3776 = vmatmul.bf16.gmra.mxu0 %v3661
  %v3777 = vpop.f32.mrf.mxu0
  %v3778 = vadd.f32 0.0, %v3777
  %v3779 = vpop.f32.mrf.mxu0
  %v3780 = vadd.f32 0.0, %v3779
  %3781 = vmatmul.bf16.gmra.mxu0 %v3664
  %v3782 = vpop.f32.mrf.mxu0
  %v3783 = vadd.f32 0.0, %v3782
  %v3784 = vpop.f32.mrf.mxu0
  %v3785 = vadd.f32 0.0, %v3784
  %3786 = vmatmul.bf16.gmra.mxu0 %v3667
  %v3787 = vpop.f32.mrf.mxu0
  %v3788 = vadd.f32 0.0, %v3787
  %v3789 = vpop.f32.mrf.mxu0
  %v3790 = vadd.f32 0.0, %v3789
  %3791 = vmatmul.bf16.gmra.mxu0 %v3670
  %v3792 = vpop.f32.mrf.mxu0
  %v3793 = vadd.f32 0.0, %v3792
  %v3794 = vpop.f32.mrf.mxu0
  %v3795 = vadd.f32 0.0, %v3794
  %3796 = vmatmul.bf16.gmra.mxu0 %v3673
  %v3797 = vpop.f32.mrf.mxu0
  %v3798 = vadd.f32 0.0, %v3797
  %v3799 = vpop.f32.mrf.mxu0
  %v3800 = vadd.f32 0.0, %v3799
  %3801 = vmatmul.bf16.gmra.mxu0 %v3676
  %v3802 = vpop.f32.mrf.mxu0
  %v3803 = vadd.f32 0.0, %v3802
  %v3804 = vpop.f32.mrf.mxu0
  %v3805 = vadd.f32 0.0, %v3804
  %3806 = vmatmul.bf16.gmra.mxu0 %v3679
  %v3807 = vpop.f32.mrf.mxu0
  %v3808 = vadd.f32 0.0, %v3807
  %v3809 = vpop.f32.mrf.mxu0
  %v3810 = vadd.f32 0.0, %v3809
  %3811 = vmatmul.bf16.gmra.mxu0 %v3682
  %v3812 = vpop.f32.mrf.mxu0
  %v3813 = vadd.f32 0.0, %v3812
  %v3814 = vpop.f32.mrf.mxu0
  %v3815 = vadd.f32 0.0, %v3814
  %3816 = vmatmul.bf16.gmra.mxu0 %v3685
  %v3817 = vpop.f32.mrf.mxu0
  %v3818 = vadd.f32 0.0, %v3817
  %v3819 = vpop.f32.mrf.mxu0
  %v3820 = vadd.f32 0.0, %v3819
  %3821 = vmatmul.bf16.gmra.mxu0 %v3688
  %v3822 = vpop.f32.mrf.mxu0
  %v3823 = vadd.f32 0.0, %v3822
  %v3824 = vpop.f32.mrf.mxu0
  %v3825 = vadd.f32 0.0, %v3824
  %3826 = vmatmul.bf16.gmra.mxu0 %v3691
  %v3827 = vpop.f32.mrf.mxu0
  %v3828 = vadd.f32 0.0, %v3827
  %v3829 = vpop.f32.mrf.mxu0
  %v3830 = vadd.f32 0.0, %v3829
  %3831 = vmatmul.bf16.gmra.mxu0 %v3694
  %v3832 = vpop.f32.mrf.mxu0
  %v3833 = vadd.f32 0.0, %v3832
  %v3834 = vpop.f32.mrf.mxu0
  %v3835 = vadd.f32 0.0, %v3834
  %3836 = vmatmul.bf16.gmra.mxu0 %v3697
  %v3837 = vpop.f32.mrf.mxu0
  %v3838 = vadd.f32 0.0, %v3837
  %v3839 = vpop.f32.mrf.mxu0
  %v3840 = vadd.f32 0.0, %v3839
  %3841 = vmatmul.bf16.gmra.mxu0 %v3700
  %v3842 = vpop.f32.mrf.mxu0
  %v3843 = vadd.f32 0.0, %v3842
  %v3844 = vpop.f32.mrf.mxu0
  %v3845 = vadd.f32 0.0, %v3844
  %3846 = vmatmul.bf16.gmra.mxu0 %v3703
  %v3847 = vpop.f32.mrf.mxu0
  %v3848 = vadd.f32 0.0, %v3847
  %v3849 = vpop.f32.mrf.mxu0
  %v3850 = vadd.f32 0.0, %v3849
  %3851 = vmatmul.bf16.gmra.mxu0 %v3706
  %v3852 = vpop.f32.mrf.mxu0
  %v3853 = vadd.f32 0.0, %v3852
  %v3854 = vpop.f32.mrf.mxu0
  %v3855 = vadd.f32 0.0, %v3854
  %3856 = vmatmul.bf16.gmra.mxu0 %v3709
  %v3857 = vpop.f32.mrf.mxu0
  %v3858 = vadd.f32 0.0, %v3857
  %v3859 = vpop.f32.mrf.mxu0
  %v3860 = vadd.f32 0.0, %v3859
  %3861 = vmatmul.bf16.gmra.mxu0 %v3712
  %v3862 = vpop.f32.mrf.mxu0
  %v3863 = vadd.f32 0.0, %v3862
  %v3864 = vpop.f32.mrf.mxu0
  %v3865 = vadd.f32 0.0, %v3864
  %3866 = vmatmul.bf16.gmra.mxu0 %v3715
  %v3867 = vpop.f32.mrf.mxu0
  %v3868 = vadd.f32 0.0, %v3867
  %v3869 = vpop.f32.mrf.mxu0
  %v3870 = vadd.f32 0.0, %v3869
  %3871 = vmatmul.bf16.gmra.mxu0 %v3718
  %v3872 = vpop.f32.mrf.mxu0
  %v3873 = vadd.f32 0.0, %v3872
  %v3874 = vpop.f32.mrf.mxu0
  %v3875 = vadd.f32 0.0, %v3874
  %3876 = vmatmul.bf16.gmra.mxu0 %v3721
  %v3877 = vpop.f32.mrf.mxu0
  %v3878 = vadd.f32 0.0, %v3877
  %v3879 = vpop.f32.mrf.mxu0
  %v3880 = vadd.f32 0.0, %v3879
  %3881 = vmatmul.bf16.gmra.mxu0 %v3724
  %v3882 = vpop.f32.mrf.mxu0
  %v3883 = vadd.f32 0.0, %v3882
  %v3884 = vpop.f32.mrf.mxu0
  %v3885 = vadd.f32 0.0, %v3884
  %3886 = vmatmul.bf16.gmra.mxu0 %v3727
  %v3887 = vpop.f32.mrf.mxu0
  %v3888 = vadd.f32 0.0, %v3887
  %v3889 = vpop.f32.mrf.mxu0
  %v3890 = vadd.f32 0.0, %v3889
  %3891 = vmatmul.bf16.gmra.mxu0 %v3730
  %v3892 = vpop.f32.mrf.mxu0
  %v3893 = vadd.f32 0.0, %v3892
  %v3894 = vpop.f32.mrf.mxu0
  %v3895 = vadd.f32 0.0, %v3894
  %3896 = vmatmul.bf16.gmra.mxu0 %v3733
  %v3897 = vpop.f32.mrf.mxu0
  %v3898 = vadd.f32 0.0, %v3897
  %v3899 = vpop.f32.mrf.mxu0
  %v3900 = vadd.f32 0.0, %v3899
  %3901 = vmatmul.bf16.gmra.mxu0 %v3736
  %v3902 = vpop.f32.mrf.mxu0
  %v3903 = vadd.f32 0.0, %v3902
  %v3904 = vpop.f32.mrf.mxu0
  %v3905 = vadd.f32 0.0, %v3904
  %3906 = vmatmul.bf16.gmra.mxu0 %v3739
  %v3907 = vpop.f32.mrf.mxu0
  %v3908 = vadd.f32 0.0, %v3907
  %v3909 = vpop.f32.mrf.mxu0
  %v3910 = vadd.f32 0.0, %v3909
  %3911 = vmatmul.bf16.gmra.mxu0 %v3742
  %v3912 = vpop.f32.mrf.mxu0
  %v3913 = vadd.f32 0.0, %v3912
  %v3914 = vpop.f32.mrf.mxu0
  %v3915 = vadd.f32 0.0, %v3914
  %3916 = vdwg.mxu0
  %v3917 = vld [vmem:[%s10] sm:$0x1]
  %v3918 = vld [vmem:[%s11] sm:$0x1]
  %v3919 = vsel %vm548, %v3758, 0.0
  %v3920 = vsel %vm548, %v3760, 0.0
  %v3921 = vadd.f32 %v3919, %v3920
  %v3922 = vsel %vm548, %v3763, 0.0
  %v3923 = vadd.f32 %v3921, %v3922
  %v3924 = vsel %vm548, %v3765, 0.0
  %v3925 = vadd.f32 %v3923, %v3924
  %v3926 = vsel %vm548, %v3768, 0.0
  %v3927 = vadd.f32 %v3925, %v3926
  %v3928 = vsel %vm548, %v3770, 0.0
  %v3929 = vadd.f32 %v3927, %v3928
  %v3930 = vsel %vm548, %v3773, 0.0
  %v3931 = vadd.f32 %v3929, %v3930
  %v3932 = vsel %vm548, %v3775, 0.0
  %v3933 = vadd.f32 %v3931, %v3932
  %v3934 = vsel %vm548, %v3778, 0.0
  %v3935 = vadd.f32 %v3933, %v3934
  %v3936 = vsel %vm548, %v3780, 0.0
  %v3937 = vadd.f32 %v3935, %v3936
  %v3938 = vsel %vm548, %v3783, 0.0
  %v3939 = vadd.f32 %v3937, %v3938
  %v3940 = vsel %vm548, %v3785, 0.0
  %v3941 = vadd.f32 %v3939, %v3940
  %v3942 = vsel %vm548, %v3788, 0.0
  %v3943 = vadd.f32 %v3941, %v3942
  %v3944 = vsel %vm548, %v3790, 0.0
  %v3945 = vadd.f32 %v3943, %v3944
  %v3946 = vsel %vm548, %v3793, 0.0
  %v3947 = vadd.f32 %v3945, %v3946
  %v3948 = vsel %vm548, %v3795, 0.0
  %v3949 = vadd.f32 %v3947, %v3948
  %v3950 = vsel %vm548, %v3798, 0.0
  %v3951 = vadd.f32 %v3949, %v3950
  %v3952 = vsel %vm548, %v3800, 0.0
  %v3953 = vadd.f32 %v3951, %v3952
  %v3954 = vsel %vm548, %v3803, 0.0
  %v3955 = vadd.f32 %v3953, %v3954
  %v3956 = vsel %vm548, %v3805, 0.0
  %v3957 = vadd.f32 %v3955, %v3956
  %v3958 = vsel %vm548, %v3808, 0.0
  %v3959 = vadd.f32 %v3957, %v3958
  %v3960 = vsel %vm548, %v3810, 0.0
  %v3961 = vadd.f32 %v3959, %v3960
  %v3962 = vsel %vm548, %v3813, 0.0
  %v3963 = vadd.f32 %v3961, %v3962
  %v3964 = vsel %vm548, %v3815, 0.0
  %v3965 = vadd.f32 %v3963, %v3964
  %v3966 = vsel %vm548, %v3818, 0.0
  %v3967 = vadd.f32 %v3965, %v3966
  %v3968 = vsel %vm548, %v3820, 0.0
  %v3969 = vadd.f32 %v3967, %v3968
  %v3970 = vsel %vm548, %v3823, 0.0
  %v3971 = vadd.f32 %v3969, %v3970
  %v3972 = vsel %vm548, %v3825, 0.0
  %v3973 = vadd.f32 %v3971, %v3972
  %v3974 = vsel %vm548, %v3828, 0.0
  %v3975 = vadd.f32 %v3973, %v3974
  %v3976 = vsel %vm548, %v3830, 0.0
  %v3977 = vadd.f32 %v3975, %v3976
  %v3978 = vsel %vm548, %v3833, 0.0
  %v3979 = vadd.f32 %v3977, %v3978
  %v3980 = vsel %vm548, %v3835, 0.0
  %v3981 = vadd.f32 %v3979, %v3980
  %v3982 = vsel %vm548, %v3838, 0.0
  %v3983 = vadd.f32 %v3981, %v3982
  %v3984 = vsel %vm548, %v3840, 0.0
  %v3985 = vadd.f32 %v3983, %v3984
  %v3986 = vsel %vm548, %v3843, 0.0
  %v3987 = vadd.f32 %v3985, %v3986
  %v3988 = vsel %vm548, %v3845, 0.0
  %v3989 = vadd.f32 %v3987, %v3988
  %v3990 = vsel %vm548, %v3848, 0.0
  %v3991 = vadd.f32 %v3989, %v3990
  %v3992 = vsel %vm548, %v3850, 0.0
  %v3993 = vadd.f32 %v3991, %v3992
  %v3994 = vsel %vm548, %v3853, 0.0
  %v3995 = vadd.f32 %v3993, %v3994
  %v3996 = vsel %vm548, %v3855, 0.0
  %v3997 = vadd.f32 %v3995, %v3996
  %v3998 = vsel %vm548, %v3858, 0.0
  %v3999 = vadd.f32 %v3997, %v3998
  %v4000 = vsel %vm548, %v3860, 0.0
  %v4001 = vadd.f32 %v3999, %v4000
  %v4002 = vsel %vm548, %v3863, 0.0
  %v4003 = vadd.f32 %v4001, %v4002
  %v4004 = vsel %vm548, %v3865, 0.0
  %v4005 = vadd.f32 %v4003, %v4004
  %v4006 = vsel %vm548, %v3868, 0.0
  %v4007 = vadd.f32 %v4005, %v4006
  %v4008 = vsel %vm548, %v3870, 0.0
  %v4009 = vadd.f32 %v4007, %v4008
  %v4010 = vsel %vm548, %v3873, 0.0
  %v4011 = vadd.f32 %v4009, %v4010
  %v4012 = vsel %vm548, %v3875, 0.0
  %v4013 = vadd.f32 %v4011, %v4012
  %v4014 = vsel %vm548, %v3878, 0.0
  %v4015 = vadd.f32 %v4013, %v4014
  %v4016 = vsel %vm548, %v3880, 0.0
  %v4017 = vadd.f32 %v4015, %v4016
  %v4018 = vsel %vm548, %v3883, 0.0
  %v4019 = vadd.f32 %v4017, %v4018
  %v4020 = vsel %vm548, %v3885, 0.0
  %v4021 = vadd.f32 %v4019, %v4020
  %v4022 = vsel %vm548, %v3888, 0.0
  %v4023 = vadd.f32 %v4021, %v4022
  %v4024 = vsel %vm548, %v3890, 0.0
  %v4025 = vadd.f32 %v4023, %v4024
  %v4026 = vsel %vm548, %v3893, 0.0
  %v4027 = vadd.f32 %v4025, %v4026
  %v4028 = vsel %vm548, %v3895, 0.0
  %v4029 = vadd.f32 %v4027, %v4028
  %v4030 = vsel %vm548, %v3898, 0.0
  %v4031 = vadd.f32 %v4029, %v4030
  %v4032 = vsel %vm548, %v3900, 0.0
  %v4033 = vadd.f32 %v4031, %v4032
  %v4034 = vsel %vm548, %v3903, 0.0
  %v4035 = vadd.f32 %v4033, %v4034
  %v4036 = vsel %vm548, %v3905, 0.0
  %v4037 = vadd.f32 %v4035, %v4036
  %v4038 = vsel %vm548, %v3908, 0.0
  %v4039 = vadd.f32 %v4037, %v4038
  %v4040 = vsel %vm548, %v3910, 0.0
  %v4041 = vadd.f32 %v4039, %v4040
  %v4042 = vsel %vm548, %v3913, 0.0
  %v4043 = vadd.f32 %v4041, %v4042
  %v4044 = vsel %vm548, %v3915, 0.0
  %v4045 = vadd.f32 %v4043, %v4044
  %v4046 = vrot.slane %v4045, 4
  %v4047 = vadd.f32 %v4045, %v4046
  %v4048 = vrot.slane %v4047, 2
  %v4049 = vadd.f32 %v4047, %v4048
  %v4050 = vrot.slane %v4049, 1
  %v4051 = vadd.f32 %v4049, %v4050
  %v4052 = vmul.f32 %v4051, 0.001953125
  %v4053 = vsub.f32 %v3758, %v4052
  %v4054 = vsub.f32 %v3760, %v4052
  %v4055 = vsub.f32 %v3763, %v4052
  %v4056 = vsub.f32 %v3765, %v4052
  %v4057 = vsub.f32 %v3768, %v4052
  %v4058 = vsub.f32 %v3770, %v4052
  %v4059 = vsub.f32 %v3773, %v4052
  %v4060 = vsub.f32 %v3775, %v4052
  %v4061 = vsub.f32 %v3778, %v4052
  %v4062 = vsub.f32 %v3780, %v4052
  %v4063 = vsub.f32 %v3783, %v4052
  %v4064 = vsub.f32 %v3785, %v4052
  %v4065 = vsub.f32 %v3788, %v4052
  %v4066 = vsub.f32 %v3790, %v4052
  %v4067 = vsub.f32 %v3793, %v4052
  %v4068 = vsub.f32 %v3795, %v4052
  %v4069 = vsub.f32 %v3798, %v4052
  %v4070 = vsub.f32 %v3800, %v4052
  %v4071 = vsub.f32 %v3803, %v4052
  %v4072 = vsub.f32 %v3805, %v4052
  %v4073 = vsub.f32 %v3808, %v4052
  %v4074 = vsub.f32 %v3810, %v4052
  %v4075 = vsub.f32 %v3813, %v4052
  %v4076 = vsub.f32 %v3815, %v4052
  %v4077 = vsub.f32 %v3818, %v4052
  %v4078 = vsub.f32 %v3820, %v4052
  %v4079 = vsub.f32 %v3823, %v4052
  %v4080 = vsub.f32 %v3825, %v4052
  %v4081 = vsub.f32 %v3828, %v4052
  %v4082 = vsub.f32 %v3830, %v4052
  %v4083 = vsub.f32 %v3833, %v4052
  %v4084 = vsub.f32 %v3835, %v4052
  %v4085 = vsub.f32 %v3838, %v4052
  %v4086 = vsub.f32 %v3840, %v4052
  %v4087 = vsub.f32 %v3843, %v4052
  %v4088 = vsub.f32 %v3845, %v4052
  %v4089 = vsub.f32 %v3848, %v4052
  %v4090 = vsub.f32 %v3850, %v4052
  %v4091 = vsub.f32 %v3853, %v4052
  %v4092 = vsub.f32 %v3855, %v4052
  %v4093 = vsub.f32 %v3858, %v4052
  %v4094 = vsub.f32 %v3860, %v4052
  %v4095 = vsub.f32 %v3863, %v4052
  %v4096 = vsub.f32 %v3865, %v4052
  %v4097 = vsub.f32 %v3868, %v4052
  %v4098 = vsub.f32 %v3870, %v4052
  %v4099 = vsub.f32 %v3873, %v4052
  %v4100 = vsub.f32 %v3875, %v4052
  %v4101 = vsub.f32 %v3878, %v4052
  %v4102 = vsub.f32 %v3880, %v4052
  %v4103 = vsub.f32 %v3883, %v4052
  %v4104 = vsub.f32 %v3885, %v4052
  %v4105 = vsub.f32 %v3888, %v4052
  %v4106 = vsub.f32 %v3890, %v4052
  %v4107 = vsub.f32 %v3893, %v4052
  %v4108 = vsub.f32 %v3895, %v4052
  %v4109 = vsub.f32 %v3898, %v4052
  %v4110 = vsub.f32 %v3900, %v4052
  %v4111 = vsub.f32 %v3903, %v4052
  %v4112 = vsub.f32 %v3905, %v4052
  %v4113 = vsub.f32 %v3908, %v4052
  %v4114 = vsub.f32 %v3910, %v4052
  %v4115 = vsub.f32 %v3913, %v4052
  %v4116 = vsub.f32 %v3915, %v4052
  %v4117 = vmul.f32 %v4053, %v4053
  %v4118 = vmul.f32 %v4054, %v4054
  %v4119 = vmul.f32 %v4055, %v4055
  %v4120 = vmul.f32 %v4056, %v4056
  %v4121 = vmul.f32 %v4057, %v4057
  %v4122 = vmul.f32 %v4058, %v4058
  %v4123 = vmul.f32 %v4059, %v4059
  %v4124 = vmul.f32 %v4060, %v4060
  %v4125 = vmul.f32 %v4061, %v4061
  %v4126 = vmul.f32 %v4062, %v4062
  %v4127 = vmul.f32 %v4063, %v4063
  %v4128 = vmul.f32 %v4064, %v4064
  %v4129 = vmul.f32 %v4065, %v4065
  %v4130 = vmul.f32 %v4066, %v4066
  %v4131 = vmul.f32 %v4067, %v4067
  %v4132 = vmul.f32 %v4068, %v4068
  %v4133 = vmul.f32 %v4069, %v4069
  %v4134 = vmul.f32 %v4070, %v4070
  %v4135 = vmul.f32 %v4071, %v4071
  %v4136 = vmul.f32 %v4072, %v4072
  %v4137 = vmul.f32 %v4073, %v4073
  %v4138 = vmul.f32 %v4074, %v4074
  %v4139 = vmul.f32 %v4075, %v4075
  %v4140 = vmul.f32 %v4076, %v4076
  %v4141 = vmul.f32 %v4077, %v4077
  %v4142 = vmul.f32 %v4078, %v4078
  %v4143 = vmul.f32 %v4079, %v4079
  %v4144 = vmul.f32 %v4080, %v4080
  %v4145 = vmul.f32 %v4081, %v4081
  %v4146 = vmul.f32 %v4082, %v4082
  %v4147 = vmul.f32 %v4083, %v4083
  %v4148 = vmul.f32 %v4084, %v4084
  %v4149 = vmul.f32 %v4085, %v4085
  %v4150 = vmul.f32 %v4086, %v4086
  %v4151 = vmul.f32 %v4087, %v4087
  %v4152 = vmul.f32 %v4088, %v4088
  %v4153 = vmul.f32 %v4089, %v4089
  %v4154 = vmul.f32 %v4090, %v4090
  %v4155 = vmul.f32 %v4091, %v4091
  %v4156 = vmul.f32 %v4092, %v4092
  %v4157 = vmul.f32 %v4093, %v4093
  %v4158 = vmul.f32 %v4094, %v4094
  %v4159 = vmul.f32 %v4095, %v4095
  %v4160 = vmul.f32 %v4096, %v4096
  %v4161 = vmul.f32 %v4097, %v4097
  %v4162 = vmul.f32 %v4098, %v4098
  %v4163 = vmul.f32 %v4099, %v4099
  %v4164 = vmul.f32 %v4100, %v4100
  %v4165 = vmul.f32 %v4101, %v4101
  %v4166 = vmul.f32 %v4102, %v4102
  %v4167 = vmul.f32 %v4103, %v4103
  %v4168 = vmul.f32 %v4104, %v4104
  %v4169 = vmul.f32 %v4105, %v4105
  %v4170 = vmul.f32 %v4106, %v4106
  %v4171 = vmul.f32 %v4107, %v4107
  %v4172 = vmul.f32 %v4108, %v4108
  %v4173 = vmul.f32 %v4109, %v4109
  %v4174 = vmul.f32 %v4110, %v4110
  %v4175 = vmul.f32 %v4111, %v4111
  %v4176 = vmul.f32 %v4112, %v4112
  %v4177 = vmul.f32 %v4113, %v4113
  %v4178 = vmul.f32 %v4114, %v4114
  %v4179 = vmul.f32 %v4115, %v4115
  %v4180 = vmul.f32 %v4116, %v4116
  %v4181 = vsel %vm548, %v4117, 0.0
  %v4182 = vsel %vm548, %v4118, 0.0
  %v4183 = vadd.f32 %v4181, %v4182
  %v4184 = vsel %vm548, %v4119, 0.0
  %v4185 = vadd.f32 %v4183, %v4184
  %v4186 = vsel %vm548, %v4120, 0.0
  %v4187 = vadd.f32 %v4185, %v4186
  %v4188 = vsel %vm548, %v4121, 0.0
  %v4189 = vadd.f32 %v4187, %v4188
  %v4190 = vsel %vm548, %v4122, 0.0
  %v4191 = vadd.f32 %v4189, %v4190
  %v4192 = vsel %vm548, %v4123, 0.0
  %v4193 = vadd.f32 %v4191, %v4192
  %v4194 = vsel %vm548, %v4124, 0.0
  %v4195 = vadd.f32 %v4193, %v4194
  %v4196 = vsel %vm548, %v4125, 0.0
  %v4197 = vadd.f32 %v4195, %v4196
  %v4198 = vsel %vm548, %v4126, 0.0
  %v4199 = vadd.f32 %v4197, %v4198
  %v4200 = vsel %vm548, %v4127, 0.0
  %v4201 = vadd.f32 %v4199, %v4200
  %v4202 = vsel %vm548, %v4128, 0.0
  %v4203 = vadd.f32 %v4201, %v4202
  %v4204 = vsel %vm548, %v4129, 0.0
  %v4205 = vadd.f32 %v4203, %v4204
  %v4206 = vsel %vm548, %v4130, 0.0
  %v4207 = vadd.f32 %v4205, %v4206
  %v4208 = vsel %vm548, %v4131, 0.0
  %v4209 = vadd.f32 %v4207, %v4208
  %v4210 = vsel %vm548, %v4132, 0.0
  %v4211 = vadd.f32 %v4209, %v4210
  %v4212 = vsel %vm548, %v4133, 0.0
  %v4213 = vadd.f32 %v4211, %v4212
  %v4214 = vsel %vm548, %v4134, 0.0
  %v4215 = vadd.f32 %v4213, %v4214
  %v4216 = vsel %vm548, %v4135, 0.0
  %v4217 = vadd.f32 %v4215, %v4216
  %v4218 = vsel %vm548, %v4136, 0.0
  %v4219 = vadd.f32 %v4217, %v4218
  %v4220 = vsel %vm548, %v4137, 0.0
  %v4221 = vadd.f32 %v4219, %v4220
  %v4222 = vsel %vm548, %v4138, 0.0
  %v4223 = vadd.f32 %v4221, %v4222
  %v4224 = vsel %vm548, %v4139, 0.0
  %v4225 = vadd.f32 %v4223, %v4224
  %v4226 = vsel %vm548, %v4140, 0.0
  %v4227 = vadd.f32 %v4225, %v4226
  %v4228 = vsel %vm548, %v4141, 0.0
  %v4229 = vadd.f32 %v4227, %v4228
  %v4230 = vsel %vm548, %v4142, 0.0
  %v4231 = vadd.f32 %v4229, %v4230
  %v4232 = vsel %vm548, %v4143, 0.0
  %v4233 = vadd.f32 %v4231, %v4232
  %v4234 = vsel %vm548, %v4144, 0.0
  %v4235 = vadd.f32 %v4233, %v4234
  %v4236 = vsel %vm548, %v4145, 0.0
  %v4237 = vadd.f32 %v4235, %v4236
  %v4238 = vsel %vm548, %v4146, 0.0
  %v4239 = vadd.f32 %v4237, %v4238
  %v4240 = vsel %vm548, %v4147, 0.0
  %v4241 = vadd.f32 %v4239, %v4240
  %v4242 = vsel %vm548, %v4148, 0.0
  %v4243 = vadd.f32 %v4241, %v4242
  %v4244 = vsel %vm548, %v4149, 0.0
  %v4245 = vadd.f32 %v4243, %v4244
  %v4246 = vsel %vm548, %v4150, 0.0
  %v4247 = vadd.f32 %v4245, %v4246
  %v4248 = vsel %vm548, %v4151, 0.0
  %v4249 = vadd.f32 %v4247, %v4248
  %v4250 = vsel %vm548, %v4152, 0.0
  %v4251 = vadd.f32 %v4249, %v4250
  %v4252 = vsel %vm548, %v4153, 0.0
  %v4253 = vadd.f32 %v4251, %v4252
  %v4254 = vsel %vm548, %v4154, 0.0
  %v4255 = vadd.f32 %v4253, %v4254
  %v4256 = vsel %vm548, %v4155, 0.0
  %v4257 = vadd.f32 %v4255, %v4256
  %v4258 = vsel %vm548, %v4156, 0.0
  %v4259 = vadd.f32 %v4257, %v4258
  %v4260 = vsel %vm548, %v4157, 0.0
  %v4261 = vadd.f32 %v4259, %v4260
  %v4262 = vsel %vm548, %v4158, 0.0
  %v4263 = vadd.f32 %v4261, %v4262
  %v4264 = vsel %vm548, %v4159, 0.0
  %v4265 = vadd.f32 %v4263, %v4264
  %v4266 = vsel %vm548, %v4160, 0.0
  %v4267 = vadd.f32 %v4265, %v4266
  %v4268 = vsel %vm548, %v4161, 0.0
  %v4269 = vadd.f32 %v4267, %v4268
  %v4270 = vsel %vm548, %v4162, 0.0
  %v4271 = vadd.f32 %v4269, %v4270
  %v4272 = vsel %vm548, %v4163, 0.0
  %v4273 = vadd.f32 %v4271, %v4272
  %v4274 = vsel %vm548, %v4164, 0.0
  %v4275 = vadd.f32 %v4273, %v4274
  %v4276 = vsel %vm548, %v4165, 0.0
  %v4277 = vadd.f32 %v4275, %v4276
  %v4278 = vsel %vm548, %v4166, 0.0
  %v4279 = vadd.f32 %v4277, %v4278
  %v4280 = vsel %vm548, %v4167, 0.0
  %v4281 = vadd.f32 %v4279, %v4280
  %v4282 = vsel %vm548, %v4168, 0.0
  %v4283 = vadd.f32 %v4281, %v4282
  %v4284 = vsel %vm548, %v4169, 0.0
  %v4285 = vadd.f32 %v4283, %v4284
  %v4286 = vsel %vm548, %v4170, 0.0
  %v4287 = vadd.f32 %v4285, %v4286
  %v4288 = vsel %vm548, %v4171, 0.0
  %v4289 = vadd.f32 %v4287, %v4288
  %v4290 = vsel %vm548, %v4172, 0.0
  %v4291 = vadd.f32 %v4289, %v4290
  %v4292 = vsel %vm548, %v4173, 0.0
  %v4293 = vadd.f32 %v4291, %v4292
  %v4294 = vsel %vm548, %v4174, 0.0
  %v4295 = vadd.f32 %v4293, %v4294
  %v4296 = vsel %vm548, %v4175, 0.0
  %v4297 = vadd.f32 %v4295, %v4296
  %v4298 = vsel %vm548, %v4176, 0.0
  %v4299 = vadd.f32 %v4297, %v4298
  %v4300 = vsel %vm548, %v4177, 0.0
  %v4301 = vadd.f32 %v4299, %v4300
  %v4302 = vsel %vm548, %v4178, 0.0
  %v4303 = vadd.f32 %v4301, %v4302
  %v4304 = vsel %vm548, %v4179, 0.0
  %v4305 = vadd.f32 %v4303, %v4304
  %v4306 = vsel %vm548, %v4180, 0.0
  %v4307 = vadd.f32 %v4305, %v4306
  %v4308 = vrot.slane %v4307, 4
  %v4309 = vadd.f32 %v4307, %v4308
  %v4310 = vrot.slane %v4309, 2
  %v4311 = vadd.f32 %v4309, %v4310
  %v4312 = vrot.slane %v4311, 1
  %v4313 = vadd.f32 %v4311, %v4312
  %v4314 = vmul.f32 %v4313, 0.001953125
  %v4315 = vadd.f32 %v4314, 1e-05
  %v4316 = vrsqrt.pop %v4315
  %v4317 = vmul.f32 %v4316, %v4315
  %v4318 = vmul.f32 %v4317, %v4316
  %v4319 = vmul.f32 0.5, %v4318
  %v4320 = vsub.f32 1.5, %v4319
  %v4321 = vmul.f32 %v4316, %v4320
  %vm4322 = vweird.f32 %v4315
  %vm4323 = vweird.f32 %v4316
  %vm4324 = vmor %vm4322, %vm4323
  %v4325 = vsel %vm4324, %v4316, %v4321
  %v4326 = vmul.f32 %v3917, %v4325
  %v4328 = vperm.slane %v4326, 0
  %v4330 = vmul.f32 %v4053, %v4328
  %v4331 = vmul.f32 %v4054, %v4328
  %v4332 = vmul.f32 %v4055, %v4328
  %v4333 = vmul.f32 %v4056, %v4328
  %v4334 = vmul.f32 %v4057, %v4328
  %v4335 = vmul.f32 %v4058, %v4328
  %v4336 = vmul.f32 %v4059, %v4328
  %v4337 = vmul.f32 %v4060, %v4328
  %v4338 = vmul.f32 %v4061, %v4328
  %v4339 = vmul.f32 %v4062, %v4328
  %v4340 = vmul.f32 %v4063, %v4328
  %v4341 = vmul.f32 %v4064, %v4328
  %v4342 = vmul.f32 %v4065, %v4328
  %v4343 = vmul.f32 %v4066, %v4328
  %v4344 = vmul.f32 %v4067, %v4328
  %v4345 = vmul.f32 %v4068, %v4328
  %v4346 = vmul.f32 %v4069, %v4328
  %v4347 = vmul.f32 %v4070, %v4328
  %v4348 = vmul.f32 %v4071, %v4328
  %v4349 = vmul.f32 %v4072, %v4328
  %v4350 = vmul.f32 %v4073, %v4328
  %v4351 = vmul.f32 %v4074, %v4328
  %v4352 = vmul.f32 %v4075, %v4328
  %v4353 = vmul.f32 %v4076, %v4328
  %v4354 = vmul.f32 %v4077, %v4328
  %v4355 = vmul.f32 %v4078, %v4328
  %v4356 = vmul.f32 %v4079, %v4328
  %v4357 = vmul.f32 %v4080, %v4328
  %v4358 = vmul.f32 %v4081, %v4328
  %v4359 = vmul.f32 %v4082, %v4328
  %v4360 = vmul.f32 %v4083, %v4328
  %v4361 = vmul.f32 %v4084, %v4328
  %v4362 = vmul.f32 %v4085, %v4328
  %v4363 = vmul.f32 %v4086, %v4328
  %v4364 = vmul.f32 %v4087, %v4328
  %v4365 = vmul.f32 %v4088, %v4328
  %v4366 = vmul.f32 %v4089, %v4328
  %v4367 = vmul.f32 %v4090, %v4328
  %v4368 = vmul.f32 %v4091, %v4328
  %v4369 = vmul.f32 %v4092, %v4328
  %v4370 = vmul.f32 %v4093, %v4328
  %v4371 = vmul.f32 %v4094, %v4328
  %v4372 = vmul.f32 %v4095, %v4328
  %v4373 = vmul.f32 %v4096, %v4328
  %v4374 = vmul.f32 %v4097, %v4328
  %v4375 = vmul.f32 %v4098, %v4328
  %v4376 = vmul.f32 %v4099, %v4328
  %v4377 = vmul.f32 %v4100, %v4328
  %v4378 = vmul.f32 %v4101, %v4328
  %v4379 = vmul.f32 %v4102, %v4328
  %v4380 = vmul.f32 %v4103, %v4328
  %v4381 = vmul.f32 %v4104, %v4328
  %v4382 = vmul.f32 %v4105, %v4328
  %v4383 = vmul.f32 %v4106, %v4328
  %v4384 = vmul.f32 %v4107, %v4328
  %v4385 = vmul.f32 %v4108, %v4328
  %v4386 = vmul.f32 %v4109, %v4328
  %v4387 = vmul.f32 %v4110, %v4328
  %v4388 = vmul.f32 %v4111, %v4328
  %v4389 = vmul.f32 %v4112, %v4328
  %v4390 = vmul.f32 %v4113, %v4328
  %v4391 = vmul.f32 %v4114, %v4328
  %v4392 = vmul.f32 %v4115, %v4328
  %v4393 = vmul.f32 %v4116, %v4328
  %v4395 = vperm.slane %v3918, 0
  %v4397 = vadd.f32 %v4330, %v4395
  %v4398 = vadd.f32 %v4331, %v4395
  %v4399 = vadd.f32 %v4332, %v4395
  %v4400 = vadd.f32 %v4333, %v4395
  %v4401 = vadd.f32 %v4334, %v4395
  %v4402 = vadd.f32 %v4335, %v4395
  %v4403 = vadd.f32 %v4336, %v4395
  %v4404 = vadd.f32 %v4337, %v4395
  %v4405 = vadd.f32 %v4338, %v4395
  %v4406 = vadd.f32 %v4339, %v4395
  %v4407 = vadd.f32 %v4340, %v4395
  %v4408 = vadd.f32 %v4341, %v4395
  %v4409 = vadd.f32 %v4342, %v4395
  %v4410 = vadd.f32 %v4343, %v4395
  %v4411 = vadd.f32 %v4344, %v4395
  %v4412 = vadd.f32 %v4345, %v4395
  %v4413 = vadd.f32 %v4346, %v4395
  %v4414 = vadd.f32 %v4347, %v4395
  %v4415 = vadd.f32 %v4348, %v4395
  %v4416 = vadd.f32 %v4349, %v4395
  %v4417 = vadd.f32 %v4350, %v4395
  %v4418 = vadd.f32 %v4351, %v4395
  %v4419 = vadd.f32 %v4352, %v4395
  %v4420 = vadd.f32 %v4353, %v4395
  %v4421 = vadd.f32 %v4354, %v4395
  %v4422 = vadd.f32 %v4355, %v4395
  %v4423 = vadd.f32 %v4356, %v4395
  %v4424 = vadd.f32 %v4357, %v4395
  %v4425 = vadd.f32 %v4358, %v4395
  %v4426 = vadd.f32 %v4359, %v4395
  %v4427 = vadd.f32 %v4360, %v4395
  %v4428 = vadd.f32 %v4361, %v4395
  %v4429 = vadd.f32 %v4362, %v4395
  %v4430 = vadd.f32 %v4363, %v4395
  %v4431 = vadd.f32 %v4364, %v4395
  %v4432 = vadd.f32 %v4365, %v4395
  %v4433 = vadd.f32 %v4366, %v4395
  %v4434 = vadd.f32 %v4367, %v4395
  %v4435 = vadd.f32 %v4368, %v4395
  %v4436 = vadd.f32 %v4369, %v4395
  %v4437 = vadd.f32 %v4370, %v4395
  %v4438 = vadd.f32 %v4371, %v4395
  %v4439 = vadd.f32 %v4372, %v4395
  %v4440 = vadd.f32 %v4373, %v4395
  %v4441 = vadd.f32 %v4374, %v4395
  %v4442 = vadd.f32 %v4375, %v4395
  %v4443 = vadd.f32 %v4376, %v4395
  %v4444 = vadd.f32 %v4377, %v4395
  %v4445 = vadd.f32 %v4378, %v4395
  %v4446 = vadd.f32 %v4379, %v4395
  %v4447 = vadd.f32 %v4380, %v4395
  %v4448 = vadd.f32 %v4381, %v4395
  %v4449 = vadd.f32 %v4382, %v4395
  %v4450 = vadd.f32 %v4383, %v4395
  %v4451 = vadd.f32 %v4384, %v4395
  %v4452 = vadd.f32 %v4385, %v4395
  %v4453 = vadd.f32 %v4386, %v4395
  %v4454 = vadd.f32 %v4387, %v4395
  %v4455 = vadd.f32 %v4388, %v4395
  %v4456 = vadd.f32 %v4389, %v4395
  %v4457 = vadd.f32 %v4390, %v4395
  %v4458 = vadd.f32 %v4391, %v4395
  %v4459 = vadd.f32 %v4392, %v4395
  %v4460 = vadd.f32 %v4393, %v4395
  %v4461 = vld [vmem:[%s12] sm:$0x3]
  %v4463 = vsel %vm373, %v4461, 0
  %4465 = vmatpush.bf16.msra.mxu0 0
  %4466 = vmatpush.bf16.msra.mxu0 0
  %4467 = vmatpush.bf16.msra.mxu0 0
  %4468 = vmatpush.bf16.msra.mxu0 0
  %4469 = vmatpush.bf16.msra.mxu0 0
  %4470 = vmatpush.bf16.msra.mxu0 0
  %4471 = vmatpush.bf16.msra.mxu0 0
  %4472 = vmatpush.bf16.msra.mxu0 %v4463
  %4473 = vmatmul.bf16.gmra.mxu0 %v278
  %v4474 = vpop.f32.mrf.mxu0
  %v4475 = vadd.f32 0.0, %v4474
  %v4476 = vpop.f32.mrf.mxu0
  %v4477 = vadd.f32 0.0, %v4476
  %4478 = vmatmul.bf16.gmra.mxu0 %v281
  %v4479 = vpop.f32.mrf.mxu0
  %v4480 = vadd.f32 0.0, %v4479
  %v4481 = vpop.f32.mrf.mxu0
  %v4482 = vadd.f32 0.0, %v4481
  %4483 = vmatmul.bf16.gmra.mxu0 %v284
  %v4484 = vpop.f32.mrf.mxu0
  %v4485 = vadd.f32 0.0, %v4484
  %v4486 = vpop.f32.mrf.mxu0
  %v4487 = vadd.f32 0.0, %v4486
  %4488 = vmatmul.bf16.gmra.mxu0 %v287
  %v4489 = vpop.f32.mrf.mxu0
  %v4490 = vadd.f32 0.0, %v4489
  %v4491 = vpop.f32.mrf.mxu0
  %v4492 = vadd.f32 0.0, %v4491
  %4493 = vmatmul.bf16.gmra.mxu0 %v290
  %v4494 = vpop.f32.mrf.mxu0
  %v4495 = vadd.f32 0.0, %v4494
  %v4496 = vpop.f32.mrf.mxu0
  %v4497 = vadd.f32 0.0, %v4496
  %4498 = vmatmul.bf16.gmra.mxu0 %v293
  %v4499 = vpop.f32.mrf.mxu0
  %v4500 = vadd.f32 0.0, %v4499
  %v4501 = vpop.f32.mrf.mxu0
  %v4502 = vadd.f32 0.0, %v4501
  %4503 = vmatmul.bf16.gmra.mxu0 %v296
  %v4504 = vpop.f32.mrf.mxu0
  %v4505 = vadd.f32 0.0, %v4504
  %v4506 = vpop.f32.mrf.mxu0
  %v4507 = vadd.f32 0.0, %v4506
  %4508 = vmatmul.bf16.gmra.mxu0 %v299
  %v4509 = vpop.f32.mrf.mxu0
  %v4510 = vadd.f32 0.0, %v4509
  %v4511 = vpop.f32.mrf.mxu0
  %v4512 = vadd.f32 0.0, %v4511
  %4513 = vmatmul.bf16.gmra.mxu0 %v302
  %v4514 = vpop.f32.mrf.mxu0
  %v4515 = vadd.f32 0.0, %v4514
  %v4516 = vpop.f32.mrf.mxu0
  %v4517 = vadd.f32 0.0, %v4516
  %4518 = vmatmul.bf16.gmra.mxu0 %v305
  %v4519 = vpop.f32.mrf.mxu0
  %v4520 = vadd.f32 0.0, %v4519
  %v4521 = vpop.f32.mrf.mxu0
  %v4522 = vadd.f32 0.0, %v4521
  %4523 = vmatmul.bf16.gmra.mxu0 %v308
  %v4524 = vpop.f32.mrf.mxu0
  %v4525 = vadd.f32 0.0, %v4524
  %v4526 = vpop.f32.mrf.mxu0
  %v4527 = vadd.f32 0.0, %v4526
  %4528 = vmatmul.bf16.gmra.mxu0 %v311
  %v4529 = vpop.f32.mrf.mxu0
  %v4530 = vadd.f32 0.0, %v4529
  %v4531 = vpop.f32.mrf.mxu0
  %v4532 = vadd.f32 0.0, %v4531
  %4533 = vmatmul.bf16.gmra.mxu0 %v314
  %v4534 = vpop.f32.mrf.mxu0
  %v4535 = vadd.f32 0.0, %v4534
  %v4536 = vpop.f32.mrf.mxu0
  %v4537 = vadd.f32 0.0, %v4536
  %4538 = vmatmul.bf16.gmra.mxu0 %v317
  %v4539 = vpop.f32.mrf.mxu0
  %v4540 = vadd.f32 0.0, %v4539
  %v4541 = vpop.f32.mrf.mxu0
  %v4542 = vadd.f32 0.0, %v4541
  %4543 = vmatmul.bf16.gmra.mxu0 %v320
  %v4544 = vpop.f32.mrf.mxu0
  %v4545 = vadd.f32 0.0, %v4544
  %v4546 = vpop.f32.mrf.mxu0
  %v4547 = vadd.f32 0.0, %v4546
  %4548 = vmatmul.bf16.gmra.mxu0 %v323
  %v4549 = vpop.f32.mrf.mxu0
  %v4550 = vadd.f32 0.0, %v4549
  %v4551 = vpop.f32.mrf.mxu0
  %v4552 = vadd.f32 0.0, %v4551
  %4553 = vmatmul.bf16.gmra.mxu0 %v326
  %v4554 = vpop.f32.mrf.mxu0
  %v4555 = vadd.f32 0.0, %v4554
  %v4556 = vpop.f32.mrf.mxu0
  %v4557 = vadd.f32 0.0, %v4556
  %4558 = vmatmul.bf16.gmra.mxu0 %v329
  %v4559 = vpop.f32.mrf.mxu0
  %v4560 = vadd.f32 0.0, %v4559
  %v4561 = vpop.f32.mrf.mxu0
  %v4562 = vadd.f32 0.0, %v4561
  %4563 = vmatmul.bf16.gmra.mxu0 %v332
  %v4564 = vpop.f32.mrf.mxu0
  %v4565 = vadd.f32 0.0, %v4564
  %v4566 = vpop.f32.mrf.mxu0
  %v4567 = vadd.f32 0.0, %v4566
  %4568 = vmatmul.bf16.gmra.mxu0 %v335
  %v4569 = vpop.f32.mrf.mxu0
  %v4570 = vadd.f32 0.0, %v4569
  %v4571 = vpop.f32.mrf.mxu0
  %v4572 = vadd.f32 0.0, %v4571
  %4573 = vmatmul.bf16.gmra.mxu0 %v338
  %v4574 = vpop.f32.mrf.mxu0
  %v4575 = vadd.f32 0.0, %v4574
  %v4576 = vpop.f32.mrf.mxu0
  %v4577 = vadd.f32 0.0, %v4576
  %4578 = vmatmul.bf16.gmra.mxu0 %v341
  %v4579 = vpop.f32.mrf.mxu0
  %v4580 = vadd.f32 0.0, %v4579
  %v4581 = vpop.f32.mrf.mxu0
  %v4582 = vadd.f32 0.0, %v4581
  %4583 = vmatmul.bf16.gmra.mxu0 %v344
  %v4584 = vpop.f32.mrf.mxu0
  %v4585 = vadd.f32 0.0, %v4584
  %v4586 = vpop.f32.mrf.mxu0
  %v4587 = vadd.f32 0.0, %v4586
  %4588 = vmatmul.bf16.gmra.mxu0 %v347
  %v4589 = vpop.f32.mrf.mxu0
  %v4590 = vadd.f32 0.0, %v4589
  %v4591 = vpop.f32.mrf.mxu0
  %v4592 = vadd.f32 0.0, %v4591
  %4593 = vmatmul.bf16.gmra.mxu0 %v350
  %v4594 = vpop.f32.mrf.mxu0
  %v4595 = vadd.f32 0.0, %v4594
  %v4596 = vpop.f32.mrf.mxu0
  %v4597 = vadd.f32 0.0, %v4596
  %4598 = vmatmul.bf16.gmra.mxu0 %v353
  %v4599 = vpop.f32.mrf.mxu0
  %v4600 = vadd.f32 0.0, %v4599
  %v4601 = vpop.f32.mrf.mxu0
  %v4602 = vadd.f32 0.0, %v4601
  %4603 = vmatmul.bf16.gmra.mxu0 %v356
  %v4604 = vpop.f32.mrf.mxu0
  %v4605 = vadd.f32 0.0, %v4604
  %v4606 = vpop.f32.mrf.mxu0
  %v4607 = vadd.f32 0.0, %v4606
  %4608 = vmatmul.bf16.gmra.mxu0 %v359
  %v4609 = vpop.f32.mrf.mxu0
  %v4610 = vadd.f32 0.0, %v4609
  %v4611 = vpop.f32.mrf.mxu0
  %v4612 = vadd.f32 0.0, %v4611
  %4613 = vmatmul.bf16.gmra.mxu0 %v362
  %v4614 = vpop.f32.mrf.mxu0
  %v4615 = vadd.f32 0.0, %v4614
  %v4616 = vpop.f32.mrf.mxu0
  %v4617 = vadd.f32 0.0, %v4616
  %4618 = vmatmul.bf16.gmra.mxu0 %v365
  %v4619 = vpop.f32.mrf.mxu0
  %v4620 = vadd.f32 0.0, %v4619
  %v4621 = vpop.f32.mrf.mxu0
  %v4622 = vadd.f32 0.0, %v4621
  %4623 = vmatmul.bf16.gmra.mxu0 %v368
  %v4624 = vpop.f32.mrf.mxu0
  %v4625 = vadd.f32 0.0, %v4624
  %v4626 = vpop.f32.mrf.mxu0
  %v4627 = vadd.f32 0.0, %v4626
  %4628 = vmatmul.bf16.gmra.mxu0 %v371
  %v4629 = vpop.f32.mrf.mxu0
  %v4630 = vadd.f32 0.0, %v4629
  %v4631 = vpop.f32.mrf.mxu0
  %v4632 = vadd.f32 0.0, %v4631
  %4633 = vdwg.mxu0
  %v4634 = vld [vmem:[%s13] sm:$0x1]
  %v4635 = vld [vmem:[%s14] sm:$0x1]
  %v4636 = vsel %vm548, %v4475, 0.0
  %v4637 = vsel %vm548, %v4477, 0.0
  %v4638 = vadd.f32 %v4636, %v4637
  %v4639 = vsel %vm548, %v4480, 0.0
  %v4640 = vadd.f32 %v4638, %v4639
  %v4641 = vsel %vm548, %v4482, 0.0
  %v4642 = vadd.f32 %v4640, %v4641
  %v4643 = vsel %vm548, %v4485, 0.0
  %v4644 = vadd.f32 %v4642, %v4643
  %v4645 = vsel %vm548, %v4487, 0.0
  %v4646 = vadd.f32 %v4644, %v4645
  %v4647 = vsel %vm548, %v4490, 0.0
  %v4648 = vadd.f32 %v4646, %v4647
  %v4649 = vsel %vm548, %v4492, 0.0
  %v4650 = vadd.f32 %v4648, %v4649
  %v4651 = vsel %vm548, %v4495, 0.0
  %v4652 = vadd.f32 %v4650, %v4651
  %v4653 = vsel %vm548, %v4497, 0.0
  %v4654 = vadd.f32 %v4652, %v4653
  %v4655 = vsel %vm548, %v4500, 0.0
  %v4656 = vadd.f32 %v4654, %v4655
  %v4657 = vsel %vm548, %v4502, 0.0
  %v4658 = vadd.f32 %v4656, %v4657
  %v4659 = vsel %vm548, %v4505, 0.0
  %v4660 = vadd.f32 %v4658, %v4659
  %v4661 = vsel %vm548, %v4507, 0.0
  %v4662 = vadd.f32 %v4660, %v4661
  %v4663 = vsel %vm548, %v4510, 0.0
  %v4664 = vadd.f32 %v4662, %v4663
  %v4665 = vsel %vm548, %v4512, 0.0
  %v4666 = vadd.f32 %v4664, %v4665
  %v4667 = vsel %vm548, %v4515, 0.0
  %v4668 = vadd.f32 %v4666, %v4667
  %v4669 = vsel %vm548, %v4517, 0.0
  %v4670 = vadd.f32 %v4668, %v4669
  %v4671 = vsel %vm548, %v4520, 0.0
  %v4672 = vadd.f32 %v4670, %v4671
  %v4673 = vsel %vm548, %v4522, 0.0
  %v4674 = vadd.f32 %v4672, %v4673
  %v4675 = vsel %vm548, %v4525, 0.0
  %v4676 = vadd.f32 %v4674, %v4675
  %v4677 = vsel %vm548, %v4527, 0.0
  %v4678 = vadd.f32 %v4676, %v4677
  %v4679 = vsel %vm548, %v4530, 0.0
  %v4680 = vadd.f32 %v4678, %v4679
  %v4681 = vsel %vm548, %v4532, 0.0
  %v4682 = vadd.f32 %v4680, %v4681
  %v4683 = vsel %vm548, %v4535, 0.0
  %v4684 = vadd.f32 %v4682, %v4683
  %v4685 = vsel %vm548, %v4537, 0.0
  %v4686 = vadd.f32 %v4684, %v4685
  %v4687 = vsel %vm548, %v4540, 0.0
  %v4688 = vadd.f32 %v4686, %v4687
  %v4689 = vsel %vm548, %v4542, 0.0
  %v4690 = vadd.f32 %v4688, %v4689
  %v4691 = vsel %vm548, %v4545, 0.0
  %v4692 = vadd.f32 %v4690, %v4691
  %v4693 = vsel %vm548, %v4547, 0.0
  %v4694 = vadd.f32 %v4692, %v4693
  %v4695 = vsel %vm548, %v4550, 0.0
  %v4696 = vadd.f32 %v4694, %v4695
  %v4697 = vsel %vm548, %v4552, 0.0
  %v4698 = vadd.f32 %v4696, %v4697
  %v4699 = vsel %vm548, %v4555, 0.0
  %v4700 = vadd.f32 %v4698, %v4699
  %v4701 = vsel %vm548, %v4557, 0.0
  %v4702 = vadd.f32 %v4700, %v4701
  %v4703 = vsel %vm548, %v4560, 0.0
  %v4704 = vadd.f32 %v4702, %v4703
  %v4705 = vsel %vm548, %v4562, 0.0
  %v4706 = vadd.f32 %v4704, %v4705
  %v4707 = vsel %vm548, %v4565, 0.0
  %v4708 = vadd.f32 %v4706, %v4707
  %v4709 = vsel %vm548, %v4567, 0.0
  %v4710 = vadd.f32 %v4708, %v4709
  %v4711 = vsel %vm548, %v4570, 0.0
  %v4712 = vadd.f32 %v4710, %v4711
  %v4713 = vsel %vm548, %v4572, 0.0
  %v4714 = vadd.f32 %v4712, %v4713
  %v4715 = vsel %vm548, %v4575, 0.0
  %v4716 = vadd.f32 %v4714, %v4715
  %v4717 = vsel %vm548, %v4577, 0.0
  %v4718 = vadd.f32 %v4716, %v4717
  %v4719 = vsel %vm548, %v4580, 0.0
  %v4720 = vadd.f32 %v4718, %v4719
  %v4721 = vsel %vm548, %v4582, 0.0
  %v4722 = vadd.f32 %v4720, %v4721
  %v4723 = vsel %vm548, %v4585, 0.0
  %v4724 = vadd.f32 %v4722, %v4723
  %v4725 = vsel %vm548, %v4587, 0.0
  %v4726 = vadd.f32 %v4724, %v4725
  %v4727 = vsel %vm548, %v4590, 0.0
  %v4728 = vadd.f32 %v4726, %v4727
  %v4729 = vsel %vm548, %v4592, 0.0
  %v4730 = vadd.f32 %v4728, %v4729
  %v4731 = vsel %vm548, %v4595, 0.0
  %v4732 = vadd.f32 %v4730, %v4731
  %v4733 = vsel %vm548, %v4597, 0.0
  %v4734 = vadd.f32 %v4732, %v4733
  %v4735 = vsel %vm548, %v4600, 0.0
  %v4736 = vadd.f32 %v4734, %v4735
  %v4737 = vsel %vm548, %v4602, 0.0
  %v4738 = vadd.f32 %v4736, %v4737
  %v4739 = vsel %vm548, %v4605, 0.0
  %v4740 = vadd.f32 %v4738, %v4739
  %v4741 = vsel %vm548, %v4607, 0.0
  %v4742 = vadd.f32 %v4740, %v4741
  %v4743 = vsel %vm548, %v4610, 0.0
  %v4744 = vadd.f32 %v4742, %v4743
  %v4745 = vsel %vm548, %v4612, 0.0
  %v4746 = vadd.f32 %v4744, %v4745
  %v4747 = vsel %vm548, %v4615, 0.0
  %v4748 = vadd.f32 %v4746, %v4747
  %v4749 = vsel %vm548, %v4617, 0.0
  %v4750 = vadd.f32 %v4748, %v4749
  %v4751 = vsel %vm548, %v4620, 0.0
  %v4752 = vadd.f32 %v4750, %v4751
  %v4753 = vsel %vm548, %v4622, 0.0
  %v4754 = vadd.f32 %v4752, %v4753
  %v4755 = vsel %vm548, %v4625, 0.0
  %v4756 = vadd.f32 %v4754, %v4755
  %v4757 = vsel %vm548, %v4627, 0.0
  %v4758 = vadd.f32 %v4756, %v4757
  %v4759 = vsel %vm548, %v4630, 0.0
  %v4760 = vadd.f32 %v4758, %v4759
  %v4761 = vsel %vm548, %v4632, 0.0
  %v4762 = vadd.f32 %v4760, %v4761
  %v4763 = vrot.slane %v4762, 4
  %v4764 = vadd.f32 %v4762, %v4763
  %v4765 = vrot.slane %v4764, 2
  %v4766 = vadd.f32 %v4764, %v4765
  %v4767 = vrot.slane %v4766, 1
  %v4768 = vadd.f32 %v4766, %v4767
  %v4769 = vmul.f32 %v4768, 0.001953125
  %v4770 = vsub.f32 %v4475, %v4769
  %v4771 = vsub.f32 %v4477, %v4769
  %v4772 = vsub.f32 %v4480, %v4769
  %v4773 = vsub.f32 %v4482, %v4769
  %v4774 = vsub.f32 %v4485, %v4769
  %v4775 = vsub.f32 %v4487, %v4769
  %v4776 = vsub.f32 %v4490, %v4769
  %v4777 = vsub.f32 %v4492, %v4769
  %v4778 = vsub.f32 %v4495, %v4769
  %v4779 = vsub.f32 %v4497, %v4769
  %v4780 = vsub.f32 %v4500, %v4769
  %v4781 = vsub.f32 %v4502, %v4769
  %v4782 = vsub.f32 %v4505, %v4769
  %v4783 = vsub.f32 %v4507, %v4769
  %v4784 = vsub.f32 %v4510, %v4769
  %v4785 = vsub.f32 %v4512, %v4769
  %v4786 = vsub.f32 %v4515, %v4769
  %v4787 = vsub.f32 %v4517, %v4769
  %v4788 = vsub.f32 %v4520, %v4769
  %v4789 = vsub.f32 %v4522, %v4769
  %v4790 = vsub.f32 %v4525, %v4769
  %v4791 = vsub.f32 %v4527, %v4769
  %v4792 = vsub.f32 %v4530, %v4769
  %v4793 = vsub.f32 %v4532, %v4769
  %v4794 = vsub.f32 %v4535, %v4769
  %v4795 = vsub.f32 %v4537, %v4769
  %v4796 = vsub.f32 %v4540, %v4769
  %v4797 = vsub.f32 %v4542, %v4769
  %v4798 = vsub.f32 %v4545, %v4769
  %v4799 = vsub.f32 %v4547, %v4769
  %v4800 = vsub.f32 %v4550, %v4769
  %v4801 = vsub.f32 %v4552, %v4769
  %v4802 = vsub.f32 %v4555, %v4769
  %v4803 = vsub.f32 %v4557, %v4769
  %v4804 = vsub.f32 %v4560, %v4769
  %v4805 = vsub.f32 %v4562, %v4769
  %v4806 = vsub.f32 %v4565, %v4769
  %v4807 = vsub.f32 %v4567, %v4769
  %v4808 = vsub.f32 %v4570, %v4769
  %v4809 = vsub.f32 %v4572, %v4769
  %v4810 = vsub.f32 %v4575, %v4769
  %v4811 = vsub.f32 %v4577, %v4769
  %v4812 = vsub.f32 %v4580, %v4769
  %v4813 = vsub.f32 %v4582, %v4769
  %v4814 = vsub.f32 %v4585, %v4769
  %v4815 = vsub.f32 %v4587, %v4769
  %v4816 = vsub.f32 %v4590, %v4769
  %v4817 = vsub.f32 %v4592, %v4769
  %v4818 = vsub.f32 %v4595, %v4769
  %v4819 = vsub.f32 %v4597, %v4769
  %v4820 = vsub.f32 %v4600, %v4769
  %v4821 = vsub.f32 %v4602, %v4769
  %v4822 = vsub.f32 %v4605, %v4769
  %v4823 = vsub.f32 %v4607, %v4769
  %v4824 = vsub.f32 %v4610, %v4769
  %v4825 = vsub.f32 %v4612, %v4769
  %v4826 = vsub.f32 %v4615, %v4769
  %v4827 = vsub.f32 %v4617, %v4769
  %v4828 = vsub.f32 %v4620, %v4769
  %v4829 = vsub.f32 %v4622, %v4769
  %v4830 = vsub.f32 %v4625, %v4769
  %v4831 = vsub.f32 %v4627, %v4769
  %v4832 = vsub.f32 %v4630, %v4769
  %v4833 = vsub.f32 %v4632, %v4769
  %v4834 = vmul.f32 %v4770, %v4770
  %v4835 = vmul.f32 %v4771, %v4771
  %v4836 = vmul.f32 %v4772, %v4772
  %v4837 = vmul.f32 %v4773, %v4773
  %v4838 = vmul.f32 %v4774, %v4774
  %v4839 = vmul.f32 %v4775, %v4775
  %v4840 = vmul.f32 %v4776, %v4776
  %v4841 = vmul.f32 %v4777, %v4777
  %v4842 = vmul.f32 %v4778, %v4778
  %v4843 = vmul.f32 %v4779, %v4779
  %v4844 = vmul.f32 %v4780, %v4780
  %v4845 = vmul.f32 %v4781, %v4781
  %v4846 = vmul.f32 %v4782, %v4782
  %v4847 = vmul.f32 %v4783, %v4783
  %v4848 = vmul.f32 %v4784, %v4784
  %v4849 = vmul.f32 %v4785, %v4785
  %v4850 = vmul.f32 %v4786, %v4786
  %v4851 = vmul.f32 %v4787, %v4787
  %v4852 = vmul.f32 %v4788, %v4788
  %v4853 = vmul.f32 %v4789, %v4789
  %v4854 = vmul.f32 %v4790, %v4790
  %v4855 = vmul.f32 %v4791, %v4791
  %v4856 = vmul.f32 %v4792, %v4792
  %v4857 = vmul.f32 %v4793, %v4793
  %v4858 = vmul.f32 %v4794, %v4794
  %v4859 = vmul.f32 %v4795, %v4795
  %v4860 = vmul.f32 %v4796, %v4796
  %v4861 = vmul.f32 %v4797, %v4797
  %v4862 = vmul.f32 %v4798, %v4798
  %v4863 = vmul.f32 %v4799, %v4799
  %v4864 = vmul.f32 %v4800, %v4800
  %v4865 = vmul.f32 %v4801, %v4801
  %v4866 = vmul.f32 %v4802, %v4802
  %v4867 = vmul.f32 %v4803, %v4803
  %v4868 = vmul.f32 %v4804, %v4804
  %v4869 = vmul.f32 %v4805, %v4805
  %v4870 = vmul.f32 %v4806, %v4806
  %v4871 = vmul.f32 %v4807, %v4807
  %v4872 = vmul.f32 %v4808, %v4808
  %v4873 = vmul.f32 %v4809, %v4809
  %v4874 = vmul.f32 %v4810, %v4810
  %v4875 = vmul.f32 %v4811, %v4811
  %v4876 = vmul.f32 %v4812, %v4812
  %v4877 = vmul.f32 %v4813, %v4813
  %v4878 = vmul.f32 %v4814, %v4814
  %v4879 = vmul.f32 %v4815, %v4815
  %v4880 = vmul.f32 %v4816, %v4816
  %v4881 = vmul.f32 %v4817, %v4817
  %v4882 = vmul.f32 %v4818, %v4818
  %v4883 = vmul.f32 %v4819, %v4819
  %v4884 = vmul.f32 %v4820, %v4820
  %v4885 = vmul.f32 %v4821, %v4821
  %v4886 = vmul.f32 %v4822, %v4822
  %v4887 = vmul.f32 %v4823, %v4823
  %v4888 = vmul.f32 %v4824, %v4824
  %v4889 = vmul.f32 %v4825, %v4825
  %v4890 = vmul.f32 %v4826, %v4826
  %v4891 = vmul.f32 %v4827, %v4827
  %v4892 = vmul.f32 %v4828, %v4828
  %v4893 = vmul.f32 %v4829, %v4829
  %v4894 = vmul.f32 %v4830, %v4830
  %v4895 = vmul.f32 %v4831, %v4831
  %v4896 = vmul.f32 %v4832, %v4832
  %v4897 = vmul.f32 %v4833, %v4833
  %v4898 = vsel %vm548, %v4834, 0.0
  %v4899 = vsel %vm548, %v4835, 0.0
  %v4900 = vadd.f32 %v4898, %v4899
  %v4901 = vsel %vm548, %v4836, 0.0
  %v4902 = vadd.f32 %v4900, %v4901
  %v4903 = vsel %vm548, %v4837, 0.0
  %v4904 = vadd.f32 %v4902, %v4903
  %v4905 = vsel %vm548, %v4838, 0.0
  %v4906 = vadd.f32 %v4904, %v4905
  %v4907 = vsel %vm548, %v4839, 0.0
  %v4908 = vadd.f32 %v4906, %v4907
  %v4909 = vsel %vm548, %v4840, 0.0
  %v4910 = vadd.f32 %v4908, %v4909
  %v4911 = vsel %vm548, %v4841, 0.0
  %v4912 = vadd.f32 %v4910, %v4911
  %v4913 = vsel %vm548, %v4842, 0.0
  %v4914 = vadd.f32 %v4912, %v4913
  %v4915 = vsel %vm548, %v4843, 0.0
  %v4916 = vadd.f32 %v4914, %v4915
  %v4917 = vsel %vm548, %v4844, 0.0
  %v4918 = vadd.f32 %v4916, %v4917
  %v4919 = vsel %vm548, %v4845, 0.0
  %v4920 = vadd.f32 %v4918, %v4919
  %v4921 = vsel %vm548, %v4846, 0.0
  %v4922 = vadd.f32 %v4920, %v4921
  %v4923 = vsel %vm548, %v4847, 0.0
  %v4924 = vadd.f32 %v4922, %v4923
  %v4925 = vsel %vm548, %v4848, 0.0
  %v4926 = vadd.f32 %v4924, %v4925
  %v4927 = vsel %vm548, %v4849, 0.0
  %v4928 = vadd.f32 %v4926, %v4927
  %v4929 = vsel %vm548, %v4850, 0.0
  %v4930 = vadd.f32 %v4928, %v4929
  %v4931 = vsel %vm548, %v4851, 0.0
  %v4932 = vadd.f32 %v4930, %v4931
  %v4933 = vsel %vm548, %v4852, 0.0
  %v4934 = vadd.f32 %v4932, %v4933
  %v4935 = vsel %vm548, %v4853, 0.0
  %v4936 = vadd.f32 %v4934, %v4935
  %v4937 = vsel %vm548, %v4854, 0.0
  %v4938 = vadd.f32 %v4936, %v4937
  %v4939 = vsel %vm548, %v4855, 0.0
  %v4940 = vadd.f32 %v4938, %v4939
  %v4941 = vsel %vm548, %v4856, 0.0
  %v4942 = vadd.f32 %v4940, %v4941
  %v4943 = vsel %vm548, %v4857, 0.0
  %v4944 = vadd.f32 %v4942, %v4943
  %v4945 = vsel %vm548, %v4858, 0.0
  %v4946 = vadd.f32 %v4944, %v4945
  %v4947 = vsel %vm548, %v4859, 0.0
  %v4948 = vadd.f32 %v4946, %v4947
  %v4949 = vsel %vm548, %v4860, 0.0
  %v4950 = vadd.f32 %v4948, %v4949
  %v4951 = vsel %vm548, %v4861, 0.0
  %v4952 = vadd.f32 %v4950, %v4951
  %v4953 = vsel %vm548, %v4862, 0.0
  %v4954 = vadd.f32 %v4952, %v4953
  %v4955 = vsel %vm548, %v4863, 0.0
  %v4956 = vadd.f32 %v4954, %v4955
  %v4957 = vsel %vm548, %v4864, 0.0
  %v4958 = vadd.f32 %v4956, %v4957
  %v4959 = vsel %vm548, %v4865, 0.0
  %v4960 = vadd.f32 %v4958, %v4959
  %v4961 = vsel %vm548, %v4866, 0.0
  %v4962 = vadd.f32 %v4960, %v4961
  %v4963 = vsel %vm548, %v4867, 0.0
  %v4964 = vadd.f32 %v4962, %v4963
  %v4965 = vsel %vm548, %v4868, 0.0
  %v4966 = vadd.f32 %v4964, %v4965
  %v4967 = vsel %vm548, %v4869, 0.0
  %v4968 = vadd.f32 %v4966, %v4967
  %v4969 = vsel %vm548, %v4870, 0.0
  %v4970 = vadd.f32 %v4968, %v4969
  %v4971 = vsel %vm548, %v4871, 0.0
  %v4972 = vadd.f32 %v4970, %v4971
  %v4973 = vsel %vm548, %v4872, 0.0
  %v4974 = vadd.f32 %v4972, %v4973
  %v4975 = vsel %vm548, %v4873, 0.0
  %v4976 = vadd.f32 %v4974, %v4975
  %v4977 = vsel %vm548, %v4874, 0.0
  %v4978 = vadd.f32 %v4976, %v4977
  %v4979 = vsel %vm548, %v4875, 0.0
  %v4980 = vadd.f32 %v4978, %v4979
  %v4981 = vsel %vm548, %v4876, 0.0
  %v4982 = vadd.f32 %v4980, %v4981
  %v4983 = vsel %vm548, %v4877, 0.0
  %v4984 = vadd.f32 %v4982, %v4983
  %v4985 = vsel %vm548, %v4878, 0.0
  %v4986 = vadd.f32 %v4984, %v4985
  %v4987 = vsel %vm548, %v4879, 0.0
  %v4988 = vadd.f32 %v4986, %v4987
  %v4989 = vsel %vm548, %v4880, 0.0
  %v4990 = vadd.f32 %v4988, %v4989
  %v4991 = vsel %vm548, %v4881, 0.0
  %v4992 = vadd.f32 %v4990, %v4991
  %v4993 = vsel %vm548, %v4882, 0.0
  %v4994 = vadd.f32 %v4992, %v4993
  %v4995 = vsel %vm548, %v4883, 0.0
  %v4996 = vadd.f32 %v4994, %v4995
  %v4997 = vsel %vm548, %v4884, 0.0
  %v4998 = vadd.f32 %v4996, %v4997
  %v4999 = vsel %vm548, %v4885, 0.0
  %v5000 = vadd.f32 %v4998, %v4999
  %v5001 = vsel %vm548, %v4886, 0.0
  %v5002 = vadd.f32 %v5000, %v5001
  %v5003 = vsel %vm548, %v4887, 0.0
  %v5004 = vadd.f32 %v5002, %v5003
  %v5005 = vsel %vm548, %v4888, 0.0
  %v5006 = vadd.f32 %v5004, %v5005
  %v5007 = vsel %vm548, %v4889, 0.0
  %v5008 = vadd.f32 %v5006, %v5007
  %v5009 = vsel %vm548, %v4890, 0.0
  %v5010 = vadd.f32 %v5008, %v5009
  %v5011 = vsel %vm548, %v4891, 0.0
  %v5012 = vadd.f32 %v5010, %v5011
  %v5013 = vsel %vm548, %v4892, 0.0
  %v5014 = vadd.f32 %v5012, %v5013
  %v5015 = vsel %vm548, %v4893, 0.0
  %v5016 = vadd.f32 %v5014, %v5015
  %v5017 = vsel %vm548, %v4894, 0.0
  %v5018 = vadd.f32 %v5016, %v5017
  %v5019 = vsel %vm548, %v4895, 0.0
  %v5020 = vadd.f32 %v5018, %v5019
  %v5021 = vsel %vm548, %v4896, 0.0
  %v5022 = vadd.f32 %v5020, %v5021
  %v5023 = vsel %vm548, %v4897, 0.0
  %v5024 = vadd.f32 %v5022, %v5023
  %v5025 = vrot.slane %v5024, 4
  %v5026 = vadd.f32 %v5024, %v5025
  %v5027 = vrot.slane %v5026, 2
  %v5028 = vadd.f32 %v5026, %v5027
  %v5029 = vrot.slane %v5028, 1
  %v5030 = vadd.f32 %v5028, %v5029
  %v5031 = vmul.f32 %v5030, 0.001953125
  %v5032 = vadd.f32 %v5031, 1e-05
  %v5033 = vrsqrt.pop %v5032
  %v5034 = vmul.f32 %v5033, %v5032
  %v5035 = vmul.f32 %v5034, %v5033
  %v5036 = vmul.f32 0.5, %v5035
  %v5037 = vsub.f32 1.5, %v5036
  %v5038 = vmul.f32 %v5033, %v5037
  %vm5039 = vweird.f32 %v5032
  %vm5040 = vweird.f32 %v5033
  %vm5041 = vmor %vm5039, %vm5040
  %v5042 = vsel %vm5041, %v5033, %v5038
  %v5043 = vmul.f32 %v4634, %v5042
  %v5045 = vperm.slane %v5043, 0
  %v5047 = vmul.f32 %v4770, %v5045
  %v5048 = vmul.f32 %v4771, %v5045
  %v5049 = vmul.f32 %v4772, %v5045
  %v5050 = vmul.f32 %v4773, %v5045
  %v5051 = vmul.f32 %v4774, %v5045
  %v5052 = vmul.f32 %v4775, %v5045
  %v5053 = vmul.f32 %v4776, %v5045
  %v5054 = vmul.f32 %v4777, %v5045
  %v5055 = vmul.f32 %v4778, %v5045
  %v5056 = vmul.f32 %v4779, %v5045
  %v5057 = vmul.f32 %v4780, %v5045
  %v5058 = vmul.f32 %v4781, %v5045
  %v5059 = vmul.f32 %v4782, %v5045
  %v5060 = vmul.f32 %v4783, %v5045
  %v5061 = vmul.f32 %v4784, %v5045
  %v5062 = vmul.f32 %v4785, %v5045
  %v5063 = vmul.f32 %v4786, %v5045
  %v5064 = vmul.f32 %v4787, %v5045
  %v5065 = vmul.f32 %v4788, %v5045
  %v5066 = vmul.f32 %v4789, %v5045
  %v5067 = vmul.f32 %v4790, %v5045
  %v5068 = vmul.f32 %v4791, %v5045
  %v5069 = vmul.f32 %v4792, %v5045
  %v5070 = vmul.f32 %v4793, %v5045
  %v5071 = vmul.f32 %v4794, %v5045
  %v5072 = vmul.f32 %v4795, %v5045
  %v5073 = vmul.f32 %v4796, %v5045
  %v5074 = vmul.f32 %v4797, %v5045
  %v5075 = vmul.f32 %v4798, %v5045
  %v5076 = vmul.f32 %v4799, %v5045
  %v5077 = vmul.f32 %v4800, %v5045
  %v5078 = vmul.f32 %v4801, %v5045
  %v5079 = vmul.f32 %v4802, %v5045
  %v5080 = vmul.f32 %v4803, %v5045
  %v5081 = vmul.f32 %v4804, %v5045
  %v5082 = vmul.f32 %v4805, %v5045
  %v5083 = vmul.f32 %v4806, %v5045
  %v5084 = vmul.f32 %v4807, %v5045
  %v5085 = vmul.f32 %v4808, %v5045
  %v5086 = vmul.f32 %v4809, %v5045
  %v5087 = vmul.f32 %v4810, %v5045
  %v5088 = vmul.f32 %v4811, %v5045
  %v5089 = vmul.f32 %v4812, %v5045
  %v5090 = vmul.f32 %v4813, %v5045
  %v5091 = vmul.f32 %v4814, %v5045
  %v5092 = vmul.f32 %v4815, %v5045
  %v5093 = vmul.f32 %v4816, %v5045
  %v5094 = vmul.f32 %v4817, %v5045
  %v5095 = vmul.f32 %v4818, %v5045
  %v5096 = vmul.f32 %v4819, %v5045
  %v5097 = vmul.f32 %v4820, %v5045
  %v5098 = vmul.f32 %v4821, %v5045
  %v5099 = vmul.f32 %v4822, %v5045
  %v5100 = vmul.f32 %v4823, %v5045
  %v5101 = vmul.f32 %v4824, %v5045
  %v5102 = vmul.f32 %v4825, %v5045
  %v5103 = vmul.f32 %v4826, %v5045
  %v5104 = vmul.f32 %v4827, %v5045
  %v5105 = vmul.f32 %v4828, %v5045
  %v5106 = vmul.f32 %v4829, %v5045
  %v5107 = vmul.f32 %v4830, %v5045
  %v5108 = vmul.f32 %v4831, %v5045
  %v5109 = vmul.f32 %v4832, %v5045
  %v5110 = vmul.f32 %v4833, %v5045
  %v5112 = vperm.slane %v4635, 0
  %v5114 = vadd.f32 %v5047, %v5112
  %v5115 = vadd.f32 %v5048, %v5112
  %v5116 = vadd.f32 %v5049, %v5112
  %v5117 = vadd.f32 %v5050, %v5112
  %v5118 = vadd.f32 %v5051, %v5112
  %v5119 = vadd.f32 %v5052, %v5112
  %v5120 = vadd.f32 %v5053, %v5112
  %v5121 = vadd.f32 %v5054, %v5112
  %v5122 = vadd.f32 %v5055, %v5112
  %v5123 = vadd.f32 %v5056, %v5112
  %v5124 = vadd.f32 %v5057, %v5112
  %v5125 = vadd.f32 %v5058, %v5112
  %v5126 = vadd.f32 %v5059, %v5112
  %v5127 = vadd.f32 %v5060, %v5112
  %v5128 = vadd.f32 %v5061, %v5112
  %v5129 = vadd.f32 %v5062, %v5112
  %v5130 = vadd.f32 %v5063, %v5112
  %v5131 = vadd.f32 %v5064, %v5112
  %v5132 = vadd.f32 %v5065, %v5112
  %v5133 = vadd.f32 %v5066, %v5112
  %v5134 = vadd.f32 %v5067, %v5112
  %v5135 = vadd.f32 %v5068, %v5112
  %v5136 = vadd.f32 %v5069, %v5112
  %v5137 = vadd.f32 %v5070, %v5112
  %v5138 = vadd.f32 %v5071, %v5112
  %v5139 = vadd.f32 %v5072, %v5112
  %v5140 = vadd.f32 %v5073, %v5112
  %v5141 = vadd.f32 %v5074, %v5112
  %v5142 = vadd.f32 %v5075, %v5112
  %v5143 = vadd.f32 %v5076, %v5112
  %v5144 = vadd.f32 %v5077, %v5112
  %v5145 = vadd.f32 %v5078, %v5112
  %v5146 = vadd.f32 %v5079, %v5112
  %v5147 = vadd.f32 %v5080, %v5112
  %v5148 = vadd.f32 %v5081, %v5112
  %v5149 = vadd.f32 %v5082, %v5112
  %v5150 = vadd.f32 %v5083, %v5112
  %v5151 = vadd.f32 %v5084, %v5112
  %v5152 = vadd.f32 %v5085, %v5112
  %v5153 = vadd.f32 %v5086, %v5112
  %v5154 = vadd.f32 %v5087, %v5112
  %v5155 = vadd.f32 %v5088, %v5112
  %v5156 = vadd.f32 %v5089, %v5112
  %v5157 = vadd.f32 %v5090, %v5112
  %v5158 = vadd.f32 %v5091, %v5112
  %v5159 = vadd.f32 %v5092, %v5112
  %v5160 = vadd.f32 %v5093, %v5112
  %v5161 = vadd.f32 %v5094, %v5112
  %v5162 = vadd.f32 %v5095, %v5112
  %v5163 = vadd.f32 %v5096, %v5112
  %v5164 = vadd.f32 %v5097, %v5112
  %v5165 = vadd.f32 %v5098, %v5112
  %v5166 = vadd.f32 %v5099, %v5112
  %v5167 = vadd.f32 %v5100, %v5112
  %v5168 = vadd.f32 %v5101, %v5112
  %v5169 = vadd.f32 %v5102, %v5112
  %v5170 = vadd.f32 %v5103, %v5112
  %v5171 = vadd.f32 %v5104, %v5112
  %v5172 = vadd.f32 %v5105, %v5112
  %v5173 = vadd.f32 %v5106, %v5112
  %v5174 = vadd.f32 %v5107, %v5112
  %v5175 = vadd.f32 %v5108, %v5112
  %v5176 = vadd.f32 %v5109, %v5112
  %v5177 = vadd.f32 %v5110, %v5112
  %v5178 = vadd.f32 %v4397, %v5114
  %v5179 = vadd.f32 %v4398, %v5115
  %v5180 = vadd.f32 %v4399, %v5116
  %v5181 = vadd.f32 %v4400, %v5117
  %v5182 = vadd.f32 %v4401, %v5118
  %v5183 = vadd.f32 %v4402, %v5119
  %v5184 = vadd.f32 %v4403, %v5120
  %v5185 = vadd.f32 %v4404, %v5121
  %v5186 = vadd.f32 %v4405, %v5122
  %v5187 = vadd.f32 %v4406, %v5123
  %v5188 = vadd.f32 %v4407, %v5124
  %v5189 = vadd.f32 %v4408, %v5125
  %v5190 = vadd.f32 %v4409, %v5126
  %v5191 = vadd.f32 %v4410, %v5127
  %v5192 = vadd.f32 %v4411, %v5128
  %v5193 = vadd.f32 %v4412, %v5129
  %v5194 = vadd.f32 %v4413, %v5130
  %v5195 = vadd.f32 %v4414, %v5131
  %v5196 = vadd.f32 %v4415, %v5132
  %v5197 = vadd.f32 %v4416, %v5133
  %v5198 = vadd.f32 %v4417, %v5134
  %v5199 = vadd.f32 %v4418, %v5135
  %v5200 = vadd.f32 %v4419, %v5136
  %v5201 = vadd.f32 %v4420, %v5137
  %v5202 = vadd.f32 %v4421, %v5138
  %v5203 = vadd.f32 %v4422, %v5139
  %v5204 = vadd.f32 %v4423, %v5140
  %v5205 = vadd.f32 %v4424, %v5141
  %v5206 = vadd.f32 %v4425, %v5142
  %v5207 = vadd.f32 %v4426, %v5143
  %v5208 = vadd.f32 %v4427, %v5144
  %v5209 = vadd.f32 %v4428, %v5145
  %v5210 = vadd.f32 %v4429, %v5146
  %v5211 = vadd.f32 %v4430, %v5147
  %v5212 = vadd.f32 %v4431, %v5148
  %v5213 = vadd.f32 %v4432, %v5149
  %v5214 = vadd.f32 %v4433, %v5150
  %v5215 = vadd.f32 %v4434, %v5151
  %v5216 = vadd.f32 %v4435, %v5152
  %v5217 = vadd.f32 %v4436, %v5153
  %v5218 = vadd.f32 %v4437, %v5154
  %v5219 = vadd.f32 %v4438, %v5155
  %v5220 = vadd.f32 %v4439, %v5156
  %v5221 = vadd.f32 %v4440, %v5157
  %v5222 = vadd.f32 %v4441, %v5158
  %v5223 = vadd.f32 %v4442, %v5159
  %v5224 = vadd.f32 %v4443, %v5160
  %v5225 = vadd.f32 %v4444, %v5161
  %v5226 = vadd.f32 %v4445, %v5162
  %v5227 = vadd.f32 %v4446, %v5163
  %v5228 = vadd.f32 %v4447, %v5164
  %v5229 = vadd.f32 %v4448, %v5165
  %v5230 = vadd.f32 %v4449, %v5166
  %v5231 = vadd.f32 %v4450, %v5167
  %v5232 = vadd.f32 %v4451, %v5168
  %v5233 = vadd.f32 %v4452, %v5169
  %v5234 = vadd.f32 %v4453, %v5170
  %v5235 = vadd.f32 %v4454, %v5171
  %v5236 = vadd.f32 %v4455, %v5172
  %v5237 = vadd.f32 %v4456, %v5173
  %v5238 = vadd.f32 %v4457, %v5174
  %v5239 = vadd.f32 %v4458, %v5175
  %v5240 = vadd.f32 %v4459, %v5176
  %v5241 = vadd.f32 %v4460, %v5177
  %5242 = vst.msk [vmem:[%s15] sm:$0xff] %vm548, %v5178
  %5243 = vst.msk [vmem:[%s15 + $0x8] sm:$0xff] %vm548, %v5179
  %5244 = vst.msk [vmem:[%s15 + $0x10] sm:$0xff] %vm548, %v5180
  %5245 = vst.msk [vmem:[%s15 + $0x18] sm:$0xff] %vm548, %v5181
  %5246 = vst.msk [vmem:[%s15 + $0x20] sm:$0xff] %vm548, %v5182
  %5247 = vst.msk [vmem:[%s15 + $0x28] sm:$0xff] %vm548, %v5183
  %5248 = vst.msk [vmem:[%s15 + $0x30] sm:$0xff] %vm548, %v5184
  %5249 = vst.msk [vmem:[%s15 + $0x38] sm:$0xff] %vm548, %v5185
  %5250 = vst.msk [vmem:[%s15 + $0x40] sm:$0xff] %vm548, %v5186
  %5251 = vst.msk [vmem:[%s15 + $0x48] sm:$0xff] %vm548, %v5187
  %5252 = vst.msk [vmem:[%s15 + $0x50] sm:$0xff] %vm548, %v5188
  %5253 = vst.msk [vmem:[%s15 + $0x58] sm:$0xff] %vm548, %v5189
  %5254 = vst.msk [vmem:[%s15 + $0x60] sm:$0xff] %vm548, %v5190
  %5255 = vst.msk [vmem:[%s15 + $0x68] sm:$0xff] %vm548, %v5191
  %5256 = vst.msk [vmem:[%s15 + $0x70] sm:$0xff] %vm548, %v5192
  %5257 = vst.msk [vmem:[%s15 + $0x78] sm:$0xff] %vm548, %v5193
  %5258 = vst.msk [vmem:[%s15 + $0x80] sm:$0xff] %vm548, %v5194
  %5259 = vst.msk [vmem:[%s15 + $0x88] sm:$0xff] %vm548, %v5195
  %5260 = vst.msk [vmem:[%s15 + $0x90] sm:$0xff] %vm548, %v5196
  %5261 = vst.msk [vmem:[%s15 + $0x98] sm:$0xff] %vm548, %v5197
  %5262 = vst.msk [vmem:[%s15 + $0xa0] sm:$0xff] %vm548, %v5198
  %5263 = vst.msk [vmem:[%s15 + $0xa8] sm:$0xff] %vm548, %v5199
  %5264 = vst.msk [vmem:[%s15 + $0xb0] sm:$0xff] %vm548, %v5200
  %5265 = vst.msk [vmem:[%s15 + $0xb8] sm:$0xff] %vm548, %v5201
  %5266 = vst.msk [vmem:[%s15 + $0xc0] sm:$0xff] %vm548, %v5202
  %5267 = vst.msk [vmem:[%s15 + $0xc8] sm:$0xff] %vm548, %v5203
  %5268 = vst.msk [vmem:[%s15 + $0xd0] sm:$0xff] %vm548, %v5204
  %5269 = vst.msk [vmem:[%s15 + $0xd8] sm:$0xff] %vm548, %v5205
  %5270 = vst.msk [vmem:[%s15 + $0xe0] sm:$0xff] %vm548, %v5206
  %5271 = vst.msk [vmem:[%s15 + $0xe8] sm:$0xff] %vm548, %v5207
  %5272 = vst.msk [vmem:[%s15 + $0xf0] sm:$0xff] %vm548, %v5208
  %5273 = vst.msk [vmem:[%s15 + $0xf8] sm:$0xff] %vm548, %v5209
  %5274 = vst.msk [vmem:[%s15 + $0x100] sm:$0xff] %vm548, %v5210
  %5275 = vst.msk [vmem:[%s15 + $0x108] sm:$0xff] %vm548, %v5211
  %5276 = vst.msk [vmem:[%s15 + $0x110] sm:$0xff] %vm548, %v5212
  %5277 = vst.msk [vmem:[%s15 + $0x118] sm:$0xff] %vm548, %v5213
  %5278 = vst.msk [vmem:[%s15 + $0x120] sm:$0xff] %vm548, %v5214
  %5279 = vst.msk [vmem:[%s15 + $0x128] sm:$0xff] %vm548, %v5215
  %5280 = vst.msk [vmem:[%s15 + $0x130] sm:$0xff] %vm548, %v5216
  %5281 = vst.msk [vmem:[%s15 + $0x138] sm:$0xff] %vm548, %v5217
  %5282 = vst.msk [vmem:[%s15 + $0x140] sm:$0xff] %vm548, %v5218
  %5283 = vst.msk [vmem:[%s15 + $0x148] sm:$0xff] %vm548, %v5219
  %5284 = vst.msk [vmem:[%s15 + $0x150] sm:$0xff] %vm548, %v5220
  %5285 = vst.msk [vmem:[%s15 + $0x158] sm:$0xff] %vm548, %v5221
  %5286 = vst.msk [vmem:[%s15 + $0x160] sm:$0xff] %vm548, %v5222
  %5287 = vst.msk [vmem:[%s15 + $0x168] sm:$0xff] %vm548, %v5223
  %5288 = vst.msk [vmem:[%s15 + $0x170] sm:$0xff] %vm548, %v5224
  %5289 = vst.msk [vmem:[%s15 + $0x178] sm:$0xff] %vm548, %v5225
  %5290 = vst.msk [vmem:[%s15 + $0x180] sm:$0xff] %vm548, %v5226
  %5291 = vst.msk [vmem:[%s15 + $0x188] sm:$0xff] %vm548, %v5227
  %5292 = vst.msk [vmem:[%s15 + $0x190] sm:$0xff] %vm548, %v5228
  %5293 = vst.msk [vmem:[%s15 + $0x198] sm:$0xff] %vm548, %v5229
  %5294 = vst.msk [vmem:[%s15 + $0x1a0] sm:$0xff] %vm548, %v5230
  %5295 = vst.msk [vmem:[%s15 + $0x1a8] sm:$0xff] %vm548, %v5231
  %5296 = vst.msk [vmem:[%s15 + $0x1b0] sm:$0xff] %vm548, %v5232
  %5297 = vst.msk [vmem:[%s15 + $0x1b8] sm:$0xff] %vm548, %v5233
  %5298 = vst.msk [vmem:[%s15 + $0x1c0] sm:$0xff] %vm548, %v5234
  %5299 = vst.msk [vmem:[%s15 + $0x1c8] sm:$0xff] %vm548, %v5235
  %5300 = vst.msk [vmem:[%s15 + $0x1d0] sm:$0xff] %vm548, %v5236
  %5301 = vst.msk [vmem:[%s15 + $0x1d8] sm:$0xff] %vm548, %v5237
  %5302 = vst.msk [vmem:[%s15 + $0x1e0] sm:$0xff] %vm548, %v5238
  %5303 = vst.msk [vmem:[%s15 + $0x1e8] sm:$0xff] %vm548, %v5239
  %5304 = vst.msk [vmem:[%s15 + $0x1f0] sm:$0xff] %vm548, %v5240
  %5305 = vst.msk [vmem:[%s15 + $0x1f8] sm:$0xff] %vm548, %v5241
  // Predicated region
  $region62: #{tpu_custom_call.1} parent=0 // pred_check
    _
  $region63: #{tpu_custom_call.1} parent=0 // pred_check_branch
    %5307 = sbr.rel (0) target = $region65
  $region64: #{tpu_custom_call.1} parent=0 // pred_region
    _
  $region65: #{tpu_custom_call.1} parent=0 // pred_fallthru
    _
  // Predicated region
  $region66: #{tpu_custom_call.1} parent=0 // pred_check
    _
  $region67: #{tpu_custom_call.1} parent=0 // pred_check_branch
    %5309 = sbr.rel (0) target = $region69
  $region68: #{tpu_custom_call.1} parent=0 // pred_region
    _
  $region69: #{tpu_custom_call.1} parent=0 // pred_fallthru
    _

</llo_original>
